<compile_context>
chip_gen: v6e
topology: v6e:2x2x1
jax: 0.10.0
libtpu: 0.0.40
codegen_flags: <defaults>
</compile_context>

<pallas_src>
import numpy as np
import jax
import jax.numpy as jnp
from jax import lax
from jax.experimental import pallas as pl
from jax.experimental.pallas import tpu as pltpu

# ---------------- model hyperparameters (module __init__ args) --------------
IN_CHANNELS = 4
OUT_CHANNELS = 8
FEAT_H = 16
FEAT_W = 16
EDGES = 16
FILTERS = 64                     # default in the module
VERTICES = FEAT_H * FEAT_W       # 256 -> the lane dimension everywhere
KSIZE = 7                        # M_conv kernel size
HALO = KSIZE // 2
K2 = KSIZE * KSIZE               # 49 taps
PADL = 128                       # lane padding around the flat features
PADW = PADL + VERTICES + PADL    # padded flat width (center slice is aligned)
KC = K2 * IN_CHANNELS            # 196 live im2col rows
KCROWS = 200                     # padded to a multiple of 8 (4 zero rows)
ACTIVATION = "ReLU"              # module applies self.activation at the end


# ----------------------- static 7x7 tap validity masks ----------------------
def _build_conv_masks():
    """(K2, V) float32: 1 where tap (kh, kw) reads inside the image."""
    masks = np.zeros((K2, VERTICES), np.float32)
    for kh in range(KSIZE):
        for kw in range(KSIZE):
            sh, sw = kh - HALO, kw - HALO
            m = np.zeros((FEAT_H, FEAT_W), np.float32)
            h0, h1 = max(0, -sh), min(FEAT_H, FEAT_H - sh)
            w0, w1 = max(0, -sw), min(FEAT_W, FEAT_W - sw)
            m[h0:h1, w0:w1] = 1.0
            masks[kh * KSIZE + kw] = m.reshape(VERTICES)
    return masks


_CONV_MASKS = _build_conv_masks()


# ------------------------------- Pallas kernel ------------------------------
def _hypergraph_kernel(xbig_ref, mask_ref, pw_ref, aw_ref, pb_ref, ab_ref,
                       mw_ref, mb_ref, w2_ref, b2_ref, o_ref, col_ref):
    f32 = jnp.float32
    V = VERTICES
    C = IN_CHANNELS

    xbig = xbig_ref[0]                                     # (C, PADW)
    xT = xbig[:, PADL:PADL + V]                            # (C, V) aligned slice

    # ---- phi^T = phi_conv(x), channel-major: (F, V) ----
    phiT = jnp.dot(pw_ref[...], xT, preferred_element_type=f32) + pb_ref[...]

    # ---- sA = A_conv(mean_{H,W} x): lane-mean first (linearity of 1x1 conv),
    #      then a tiny (F, C)@(C, 1) matmul -- no (F, V) A map materialized. ----
    xmean = jnp.mean(xT, axis=1, keepdims=True)            # (C, 1)
    sA = jnp.dot(aw_ref[...], xmean, preferred_element_type=f32) + ab_ref[...]

    # ---- in-kernel im2col for the 7x7 'same' conv ----
    # Row order is tap-major / channel-minor (k*C + c), matching mw_ref.
    # Rows [KC:KCROWS) are contraction padding; keep them zero every step
    # (unconditional so each TensorCore's scratch is initialized under
    #  "parallel" megacore sharding).
    col_ref[KC:, :] = jnp.zeros((KCROWS - KC, V), f32)
    for kh in range(KSIZE):
        for kw in range(KSIZE):
            k = kh * KSIZE + kw
            start = PADL + (kh - HALO) * FEAT_W + (kw - HALO)
            xs = xbig[:, start:start + V]                  # (C, V) shifted win
            if kw != HALO:
                # mask column wrap-around; pure vertical overflow already
                # reads zeros from the lane padding, so no mask needed there.
                xs = xs * mask_ref[k:k + 1, :]
            col_ref[k * C:(k + 1) * C, :] = xs

    # One MXU matmul replaces the 49-tap K=4 accumulate chain.
    Mt = jnp.dot(mw_ref[...], col_ref[...],
                 preferred_element_type=f32) + mb_ref[...]          # (E, V)

    # ---- H^T = | phi diag(sA) phi^T M |^T ----
    t1 = lax.dot_general(phiT, Mt, (((1,), (1,)), ((), ())),
                         preferred_element_type=f32)                # (F, E)
    t2 = sA * t1                                                    # diag(sA)
    HmT = jnp.abs(lax.dot_general(t2, phiT, (((0,), (0,)), ((), ())),
                                  preferred_element_type=f32))      # (E, V)

    # ---- D^{-1/2} vertex scaling, B^{-1} edge scaling ----
    D = jnp.sum(HmT, axis=0, keepdims=True)                         # (1, V)
    DHt = lax.rsqrt(D + 1e-10) * HmT                                # (E, V)
    Bsum = jnp.sum(HmT, axis=1, keepdims=True)                      # (E, 1)
    Binv = pl.reciprocal(Bsum, approx=True)                         # (E, 1)

    # ---- out^T = x^T - (D_H diag(B^-1) D_H^T x)^T ----
    t3 = lax.dot_general(DHt, xT, (((1,), (1,)), ((), ())),
                         preferred_element_type=f32)                # (E, C)
    t4 = Binv * t3                                                  # (E, C)
    t5T = lax.dot_general(t4, DHt, (((0,), (0,)), ((), ())),
                          preferred_element_type=f32)               # (C, V)
    outT = xT - t5T                                                 # (C, V)

    # ---- final projection + bias + ReLU; lane-dense (OUT, 256) store ----
    yT = jnp.dot(w2_ref[...], outT, preferred_element_type=f32) + b2_ref[...]
    o_ref[0] = jnp.maximum(yT, 0.0)


# --------------------------------- wrapper ----------------------------------
def _pack_params(params):
    """Transpose / pack raw (torch-layout) params into the kernel layout."""
    phi_w, phi_b, a_w, a_b, m_w, m_b, w2, b2 = params
    pwT = phi_w.T                                          # (F, C)
    awT = a_w.T                                            # (F, C)
    pbT = phi_b.T                                          # (F, 1)
    abT = a_b.T                                            # (F, 1)
    # m_w rows are (c-major, tap-minor): index = c*K2 + k.  Repack to
    # (E, K2*C) with column index = k*C + c to match the im2col row order,
    # then pad the contraction dim to KCROWS with zero columns.
    mwE = jnp.transpose(m_w.reshape(IN_CHANNELS, K2, EDGES),
                        (2, 1, 0)).reshape(EDGES, KC)
    mwE = jnp.pad(mwE, ((0, 0), (0, KCROWS - KC)))         # (E, KCROWS)
    mbT = m_b.T                                            # (E, 1)
    w2T = w2.T                                             # (OUT, C)
    b2T = b2.T                                             # (OUT, 1)
    return pwT, awT, pbT, abT, mwE, mbT, w2T, b2T


@jax.jit
def hypergraph_conv(x, params):
    """x: (B, C, H, W) float32 NCHW.  Returns (B, OUT_CHANNELS, H, W)."""
    B, C, Hh, Ww = x.shape
    assert (C, Hh, Ww) == (IN_CHANNELS, FEAT_H, FEAT_W)
    V = Hh * Ww
    pwT, awT, pbT, abT, mwE, mbT, w2T, b2T = _pack_params(params)
    masks = jnp.asarray(_CONV_MASKS)                       # (K2, V)

    # NCHW is already channel-major over the flattened vertices (free reshape);
    # lane-pad so every 7x7 tap is a static in-bounds window.
    xflat = x.reshape(B, C, V)
    xbig = jnp.pad(xflat, ((0, 0), (0, 0), (PADL, PADL)))  # (B, C, PADW)

    # One batch per grid step on every chip generation: avoids the unrolled
    # two-batch body (vreg pressure on single-TC v5e/v6e) and lets v7x shard
    # batches across its two TensorCores via "parallel".
    # TODO(synk): A/B test a fused single-step (all batches in one body) on
    # v7x if per-step launch overhead ever dominates.
    grid = (B,)

    out_flat = pl.pallas_call(
        _hypergraph_kernel,
        out_shape=jax.ShapeDtypeStruct((B, OUT_CHANNELS, V), jnp.float32),
        grid_spec=pltpu.PrefetchScalarGridSpec(
            num_scalar_prefetch=0,
            grid=grid,
            in_specs=[
                pl.BlockSpec((1, C, PADW), lambda b: (b, 0, 0)),       # xbig
                pl.BlockSpec((K2, V), lambda b: (0, 0)),               # tap masks
                pl.BlockSpec((FILTERS, C), lambda b: (0, 0)),          # phi W^T
                pl.BlockSpec((FILTERS, C), lambda b: (0, 0)),          # A W^T
                pl.BlockSpec((FILTERS, 1), lambda b: (0, 0)),          # phi bias
                pl.BlockSpec((FILTERS, 1), lambda b: (0, 0)),          # A bias
                pl.BlockSpec((EDGES, KCROWS), lambda b: (0, 0)),       # M weights
                pl.BlockSpec((EDGES, 1), lambda b: (0, 0)),            # M bias
                pl.BlockSpec((OUT_CHANNELS, C), lambda b: (0, 0)),     # weight_2^T
                pl.BlockSpec((OUT_CHANNELS, 1), lambda b: (0, 0)),     # bias_2^T
            ],
            out_specs=pl.BlockSpec((1, OUT_CHANNELS, V), lambda b: (b, 0, 0)),
            scratch_shapes=[pltpu.VMEM((KCROWS, V), jnp.float32)],     # im2col
        ),
        compiler_params=pltpu.CompilerParams(
            dimension_semantics=("parallel",)),
    )(xbig, masks, pwT, awT, pbT, abT, mwE, mbT, w2T, b2T)

    # (B, OUT, V) un-flattened is already NCHW -- no transpose.
    return out_flat.reshape(B, OUT_CHANNELS, Hh, Ww)


# ------------------------- pure-JAX reference (check) -----------------------
def hypergraph_conv_ref(x, params):
    pw, pb, aw, ab, mw, mb, w2, b2 = params
    B, C, Hh, Ww = x.shape
    V = Hh * Ww
    xf = jnp.transpose(x.reshape(B, C, V), (0, 2, 1))                 # (B, V, C)
    phi = jnp.einsum("bvc,cf->bvf", xf, pw) + pb                      # (B, V, F)
    sA = jnp.mean(xf, axis=1) @ aw + ab[0]                            # (B, F)

    pad = KSIZE // 2
    xpad = jnp.pad(x, ((0, 0), (0, 0), (pad, pad), (pad, pad)))
    patches = jnp.stack(
        [xpad[:, :, kh:kh + Hh, kw:kw + Ww]
         for kh in range(KSIZE) for kw in range(KSIZE)], axis=2)
    xp = jnp.transpose(patches.reshape(B, C * K2, V), (0, 2, 1))
    M = jnp.einsum("bvk,ke->bve", xp, mw) + mb                        # (B, V, E)

    t1 = jnp.einsum("bvf,bve->bfe", phi, M)
    t2 = sA[:, :, None] * t1
    Hm = jnp.abs(jnp.einsum("bvf,bfe->bve", phi, t2))
    D = jnp.sum(Hm, axis=2, keepdims=True)
    DH = (D + 1e-10) ** -0.5 * Hm
    Binv = 1.0 / jnp.sum(Hm, axis=1)                                  # (B, E)
    t3 = jnp.einsum("bve,bvc->bec", DH, xf)
    t4 = Binv[:, :, None] * t3
    out = xf - jnp.einsum("bve,bec->bvc", DH, t4)
    out = jnp.einsum("bvc,co->bvo", out, w2) + b2
    out = jnp.maximum(out, 0.0)
    out = out.reshape(B, Hh, Ww, OUT_CHANNELS)
    return jnp.transpose(out, (0, 3, 1, 2))


# ----------------------------------- main ------------------------------------
if __name__ == "__main__":
    key = jax.random.PRNGKey(0)
    ks = jax.random.split(key, 9)
    C = IN_CHANNELS

    # Deterministic synthetic parameters (shapes from the module __init__),
    # kept in the original torch-like layout; packing happens in the wrapper.
    phi_w = 0.1 * jax.random.normal(ks[0], (C, FILTERS), jnp.float32)   # phi_conv 1x1
    phi_b = 0.1 * jax.random.normal(ks[1], (1, FILTERS), jnp.float32)
    a_w = 0.1 * jax.random.normal(ks[2], (C, FILTERS), jnp.float32)     # A_conv 1x1
    a_b = 0.1 * jax.random.normal(ks[3], (1, FILTERS), jnp.float32)
    m_w = 0.1 * jax.random.normal(ks[4], (C * K2, EDGES), jnp.float32)  # M_conv 7x7
    m_b = 0.1 * jax.random.normal(ks[5], (1, EDGES), jnp.float32)
    w2 = jax.random.normal(ks[6], (C, OUT_CHANNELS), jnp.float32)       # weight_2
    b2 = jax.random.normal(ks[7], (1, OUT_CHANNELS), jnp.float32)       # bias_2
    params = (phi_w, phi_b, a_w, a_b, m_w, m_b, w2, b2)

    x = jax.random.normal(ks[8], (2, IN_CHANNELS, FEAT_H, FEAT_W), jnp.float32)

    out = hypergraph_conv(x, params)
    out = jax.block_until_ready(out)

    ref = jax.block_until_ready(hypergraph_conv_ref(x, params))
    assert out.shape == (2, OUT_CHANNELS, FEAT_H, FEAT_W)
    assert bool(jnp.all(jnp.isfinite(out)))
    assert bool(jnp.allclose(out, ref, rtol=1e-2, atol=1e-2)), "mismatch vs reference"

    print("KERNEL_OK")
</pallas_src>

<mosaic_0001>
module attributes {stable_mosaic.version = 11 : i64} {
  func.func @_hypergraph_kernel(%arg0: i32, %arg1: memref<1x4x512xf32, #tpu.memory_space<vmem>>, %arg2: memref<49x256xf32, #tpu.memory_space<vmem>>, %arg3: memref<64x4xf32, #tpu.memory_space<vmem>>, %arg4: memref<64x4xf32, #tpu.memory_space<vmem>>, %arg5: memref<64x1xf32, #tpu.memory_space<vmem>>, %arg6: memref<64x1xf32, #tpu.memory_space<vmem>>, %arg7: memref<16x200xf32, #tpu.memory_space<vmem>>, %arg8: memref<16x1xf32, #tpu.memory_space<vmem>>, %arg9: memref<8x4xf32, #tpu.memory_space<vmem>>, %arg10: memref<8x1xf32, #tpu.memory_space<vmem>>, %arg11: memref<1x8x256xf32, #tpu.memory_space<vmem>>, %arg12: memref<200x256xf32, #tpu.memory_space<vmem>>) attributes {dimension_semantics = [#tpu.dimension_semantics<parallel>], iteration_bounds = array<i64: 2>, scalar_prefetch = 0 : i64, scratch_operands = 1 : i64, tpu.core_type = #tpu.core_type<tc>, window_params = [{transform_indices = @transform_0, window_bounds = array<i64: 1, 4, 512>}, {pipeline_mode = #tpu.pipeline_mode<synchronous>, transform_indices = @transform_1, window_bounds = array<i64: 49, 256>}, {pipeline_mode = #tpu.pipeline_mode<synchronous>, transform_indices = @transform_2, window_bounds = array<i64: 64, 4>}, {pipeline_mode = #tpu.pipeline_mode<synchronous>, transform_indices = @transform_3, window_bounds = array<i64: 64, 4>}, {pipeline_mode = #tpu.pipeline_mode<synchronous>, transform_indices = @transform_4, window_bounds = array<i64: 64, 1>}, {pipeline_mode = #tpu.pipeline_mode<synchronous>, transform_indices = @transform_5, window_bounds = array<i64: 64, 1>}, {pipeline_mode = #tpu.pipeline_mode<synchronous>, transform_indices = @transform_6, window_bounds = array<i64: 16, 200>}, {pipeline_mode = #tpu.pipeline_mode<synchronous>, transform_indices = @transform_7, window_bounds = array<i64: 16, 1>}, {pipeline_mode = #tpu.pipeline_mode<synchronous>, transform_indices = @transform_8, window_bounds = array<i64: 8, 4>}, {pipeline_mode = #tpu.pipeline_mode<synchronous>, transform_indices = @transform_9, window_bounds = array<i64: 8, 1>}, {transform_indices = @transform_10, window_bounds = array<i64: 1, 8, 256>}]} {
    %c0 = arith.constant 0 : index
    %c0_0 = arith.constant 0 : index
    %c0_1 = arith.constant 0 : index
    %0 = vector.load %arg1[%c0, %c0_0, %c0_1] : memref<1x4x512xf32, #tpu.memory_space<vmem>>, vector<1x4x512xf32>
    %1 = vector.shape_cast %0 : vector<1x4x512xf32> to vector<4x512xf32>
    %2 = vector.extract_strided_slice %1 {offsets = [0, 128], sizes = [4, 256], strides = [1, 1]} : vector<4x512xf32> to vector<4x256xf32>
    %c0_2 = arith.constant 0 : index
    %c0_3 = arith.constant 0 : index
    %3 = vector.load %arg3[%c0_2, %c0_3] : memref<64x4xf32, #tpu.memory_space<vmem>>, vector<64x4xf32>
    %cst = arith.constant dense<0.000000e+00> : vector<64x256xf32>
    %4 = tpu.matmul %3, %2, %cst {dimension_numbers = #tpu.dot_dimension_numbers<[1], [0], [0], [1], [0, 0, 1, 1], [], []>} : vector<64x4xf32>, vector<4x256xf32>, vector<64x256xf32> -> vector<64x256xf32>
    %c0_4 = arith.constant 0 : index
    %c0_5 = arith.constant 0 : index
    %5 = vector.load %arg5[%c0_4, %c0_5] : memref<64x1xf32, #tpu.memory_space<vmem>>, vector<64x1xf32>
    %6 = vector.broadcast %5 : vector<64x1xf32> to vector<64x256xf32>
    %7 = arith.addf %4, %6 : vector<64x256xf32>
    %cst_6 = arith.constant dense<0.000000e+00> : vector<4xf32>
    %8 = vector.multi_reduction <add>, %2, %cst_6 [1] : vector<4x256xf32> to vector<4xf32>
    %9 = vector.shape_cast %8 : vector<4xf32> to vector<4x1xf32>
    %cst_7 = arith.constant 2.560000e+02 : f32
    %10 = vector.broadcast %cst_7 : f32 to vector<4x1xf32>
    %11 = arith.divf %9, %10 : vector<4x1xf32>
    %c0_8 = arith.constant 0 : index
    %c0_9 = arith.constant 0 : index
    %12 = vector.load %arg4[%c0_8, %c0_9] : memref<64x4xf32, #tpu.memory_space<vmem>>, vector<64x4xf32>
    %cst_10 = arith.constant dense<0.000000e+00> : vector<64x1xf32>
    %13 = tpu.matmul %12, %11, %cst_10 {dimension_numbers = #tpu.dot_dimension_numbers<[1], [0], [0], [1], [0, 0, 1, 1], [], []>} : vector<64x4xf32>, vector<4x1xf32>, vector<64x1xf32> -> vector<64x1xf32>
    %c0_11 = arith.constant 0 : index
    %c0_12 = arith.constant 0 : index
    %14 = vector.load %arg6[%c0_11, %c0_12] : memref<64x1xf32, #tpu.memory_space<vmem>>, vector<64x1xf32>
    %15 = arith.addf %13, %14 : vector<64x1xf32>
    %cst_13 = arith.constant 0.000000e+00 : f32
    %16 = vector.broadcast %cst_13 : f32 to vector<4x256xf32>
    %c196 = arith.constant 196 : index
    %c0_14 = arith.constant 0 : index
    %17 = vector.load %arg12[%c196, %c0_14] : memref<200x256xf32, #tpu.memory_space<vmem>>, vector<4x256xf32>
    tpu.vector_store %arg12[%c196, %c0_14], %16 {strides = array<i32>} : memref<200x256xf32, #tpu.memory_space<vmem>>, vector<4x256xf32>,
    %18 = vector.extract_strided_slice %1 {offsets = [0, 77], sizes = [4, 256], strides = [1, 1]} : vector<4x512xf32> to vector<4x256xf32>
    %c0_15 = arith.constant 0 : index
    %c0_16 = arith.constant 0 : index
    %19 = vector.load %arg2[%c0_15, %c0_16] : memref<49x256xf32, #tpu.memory_space<vmem>>, vector<1x256xf32>
    %20 = vector.broadcast %19 : vector<1x256xf32> to vector<4x256xf32>
    %21 = arith.mulf %18, %20 : vector<4x256xf32>
    %c0_17 = arith.constant 0 : index
    %c0_18 = arith.constant 0 : index
    %22 = vector.load %arg12[%c0_17, %c0_18] : memref<200x256xf32, #tpu.memory_space<vmem>>, vector<4x256xf32>
    tpu.vector_store %arg12[%c0_17, %c0_18], %21 {strides = array<i32>} : memref<200x256xf32, #tpu.memory_space<vmem>>, vector<4x256xf32>,
    %23 = vector.extract_strided_slice %1 {offsets = [0, 78], sizes = [4, 256], strides = [1, 1]} : vector<4x512xf32> to vector<4x256xf32>
    %c1 = arith.constant 1 : index
    %c0_19 = arith.constant 0 : index
    %24 = vector.load %arg2[%c1, %c0_19] : memref<49x256xf32, #tpu.memory_space<vmem>>, vector<1x256xf32>
    %25 = vector.broadcast %24 : vector<1x256xf32> to vector<4x256xf32>
    %26 = arith.mulf %23, %25 : vector<4x256xf32>
    %c4 = arith.constant 4 : index
    %c0_20 = arith.constant 0 : index
    %27 = vector.load %arg12[%c4, %c0_20] : memref<200x256xf32, #tpu.memory_space<vmem>>, vector<4x256xf32>
    tpu.vector_store %arg12[%c4, %c0_20], %26 {strides = array<i32>} : memref<200x256xf32, #tpu.memory_space<vmem>>, vector<4x256xf32>,
    %28 = vector.extract_strided_slice %1 {offsets = [0, 79], sizes = [4, 256], strides = [1, 1]} : vector<4x512xf32> to vector<4x256xf32>
    %c2 = arith.constant 2 : index
    %c0_21 = arith.constant 0 : index
    %29 = vector.load %arg2[%c2, %c0_21] : memref<49x256xf32, #tpu.memory_space<vmem>>, vector<1x256xf32>
    %30 = vector.broadcast %29 : vector<1x256xf32> to vector<4x256xf32>
    %31 = arith.mulf %28, %30 : vector<4x256xf32>
    %c8 = arith.constant 8 : index
    %c0_22 = arith.constant 0 : index
    %32 = vector.load %arg12[%c8, %c0_22] : memref<200x256xf32, #tpu.memory_space<vmem>>, vector<4x256xf32>
    tpu.vector_store %arg12[%c8, %c0_22], %31 {strides = array<i32>} : memref<200x256xf32, #tpu.memory_space<vmem>>, vector<4x256xf32>,
    %33 = vector.extract_strided_slice %1 {offsets = [0, 80], sizes = [4, 256], strides = [1, 1]} : vector<4x512xf32> to vector<4x256xf32>
    %c12 = arith.constant 12 : index
    %c0_23 = arith.constant 0 : index
    %34 = vector.load %arg12[%c12, %c0_23] : memref<200x256xf32, #tpu.memory_space<vmem>>, vector<4x256xf32>
    tpu.vector_store %arg12[%c12, %c0_23], %33 {strides = array<i32>} : memref<200x256xf32, #tpu.memory_space<vmem>>, vector<4x256xf32>,
    %35 = vector.extract_strided_slice %1 {offsets = [0, 81], sizes = [4, 256], strides = [1, 1]} : vector<4x512xf32> to vector<4x256xf32>
    %c4_24 = arith.constant 4 : index
    %c0_25 = arith.constant 0 : index
    %36 = vector.load %arg2[%c4_24, %c0_25] : memref<49x256xf32, #tpu.memory_space<vmem>>, vector<1x256xf32>
    %37 = vector.broadcast %36 : vector<1x256xf32> to vector<4x256xf32>
    %38 = arith.mulf %35, %37 : vector<4x256xf32>
    %c16 = arith.constant 16 : index
    %c0_26 = arith.constant 0 : index
    %39 = vector.load %arg12[%c16, %c0_26] : memref<200x256xf32, #tpu.memory_space<vmem>>, vector<4x256xf32>
    tpu.vector_store %arg12[%c16, %c0_26], %38 {strides = array<i32>} : memref<200x256xf32, #tpu.memory_space<vmem>>, vector<4x256xf32>,
    %40 = vector.extract_strided_slice %1 {offsets = [0, 82], sizes = [4, 256], strides = [1, 1]} : vector<4x512xf32> to vector<4x256xf32>
    %c5 = arith.constant 5 : index
    %c0_27 = arith.constant 0 : index
    %41 = vector.load %arg2[%c5, %c0_27] : memref<49x256xf32, #tpu.memory_space<vmem>>, vector<1x256xf32>
    %42 = vector.broadcast %41 : vector<1x256xf32> to vector<4x256xf32>
    %43 = arith.mulf %40, %42 : vector<4x256xf32>
    %c20 = arith.constant 20 : index
    %c0_28 = arith.constant 0 : index
    %44 = vector.load %arg12[%c20, %c0_28] : memref<200x256xf32, #tpu.memory_space<vmem>>, vector<4x256xf32>
    tpu.vector_store %arg12[%c20, %c0_28], %43 {strides = array<i32>} : memref<200x256xf32, #tpu.memory_space<vmem>>, vector<4x256xf32>,
    %45 = vector.extract_strided_slice %1 {offsets = [0, 83], sizes = [4, 256], strides = [1, 1]} : vector<4x512xf32> to vector<4x256xf32>
    %c6 = arith.constant 6 : index
    %c0_29 = arith.constant 0 : index
    %46 = vector.load %arg2[%c6, %c0_29] : memref<49x256xf32, #tpu.memory_space<vmem>>, vector<1x256xf32>
    %47 = vector.broadcast %46 : vector<1x256xf32> to vector<4x256xf32>
    %48 = arith.mulf %45, %47 : vector<4x256xf32>
    %c24 = arith.constant 24 : index
    %c0_30 = arith.constant 0 : index
    %49 = vector.load %arg12[%c24, %c0_30] : memref<200x256xf32, #tpu.memory_space<vmem>>, vector<4x256xf32>
    tpu.vector_store %arg12[%c24, %c0_30], %48 {strides = array<i32>} : memref<200x256xf32, #tpu.memory_space<vmem>>, vector<4x256xf32>,
    %50 = vector.extract_strided_slice %1 {offsets = [0, 93], sizes = [4, 256], strides = [1, 1]} : vector<4x512xf32> to vector<4x256xf32>
    %c7 = arith.constant 7 : index
    %c0_31 = arith.constant 0 : index
    %51 = vector.load %arg2[%c7, %c0_31] : memref<49x256xf32, #tpu.memory_space<vmem>>, vector<1x256xf32>
    %52 = vector.broadcast %51 : vector<1x256xf32> to vector<4x256xf32>
    %53 = arith.mulf %50, %52 : vector<4x256xf32>
    %c28 = arith.constant 28 : index
    %c0_32 = arith.constant 0 : index
    %54 = vector.load %arg12[%c28, %c0_32] : memref<200x256xf32, #tpu.memory_space<vmem>>, vector<4x256xf32>
    tpu.vector_store %arg12[%c28, %c0_32], %53 {strides = array<i32>} : memref<200x256xf32, #tpu.memory_space<vmem>>, vector<4x256xf32>,
    %55 = vector.extract_strided_slice %1 {offsets = [0, 94], sizes = [4, 256], strides = [1, 1]} : vector<4x512xf32> to vector<4x256xf32>
    %c8_33 = arith.constant 8 : index
    %c0_34 = arith.constant 0 : index
    %56 = vector.load %arg2[%c8_33, %c0_34] : memref<49x256xf32, #tpu.memory_space<vmem>>, vector<1x256xf32>
    %57 = vector.broadcast %56 : vector<1x256xf32> to vector<4x256xf32>
    %58 = arith.mulf %55, %57 : vector<4x256xf32>
    %c32 = arith.constant 32 : index
    %c0_35 = arith.constant 0 : index
    %59 = vector.load %arg12[%c32, %c0_35] : memref<200x256xf32, #tpu.memory_space<vmem>>, vector<4x256xf32>
    tpu.vector_store %arg12[%c32, %c0_35], %58 {strides = array<i32>} : memref<200x256xf32, #tpu.memory_space<vmem>>, vector<4x256xf32>,
    %60 = vector.extract_strided_slice %1 {offsets = [0, 95], sizes = [4, 256], strides = [1, 1]} : vector<4x512xf32> to vector<4x256xf32>
    %c9 = arith.constant 9 : index
    %c0_36 = arith.constant 0 : index
    %61 = vector.load %arg2[%c9, %c0_36] : memref<49x256xf32, #tpu.memory_space<vmem>>, vector<1x256xf32>
    %62 = vector.broadcast %61 : vector<1x256xf32> to vector<4x256xf32>
    %63 = arith.mulf %60, %62 : vector<4x256xf32>
    %c36 = arith.constant 36 : index
    %c0_37 = arith.constant 0 : index
    %64 = vector.load %arg12[%c36, %c0_37] : memref<200x256xf32, #tpu.memory_space<vmem>>, vector<4x256xf32>
    tpu.vector_store %arg12[%c36, %c0_37], %63 {strides = array<i32>} : memref<200x256xf32, #tpu.memory_space<vmem>>, vector<4x256xf32>,
    %65 = vector.extract_strided_slice %1 {offsets = [0, 96], sizes = [4, 256], strides = [1, 1]} : vector<4x512xf32> to vector<4x256xf32>
    %c40 = arith.constant 40 : index
    %c0_38 = arith.constant 0 : index
    %66 = vector.load %arg12[%c40, %c0_38] : memref<200x256xf32, #tpu.memory_space<vmem>>, vector<4x256xf32>
    tpu.vector_store %arg12[%c40, %c0_38], %65 {strides = array<i32>} : memref<200x256xf32, #tpu.memory_space<vmem>>, vector<4x256xf32>,
    %67 = vector.extract_strided_slice %1 {offsets = [0, 97], sizes = [4, 256], strides = [1, 1]} : vector<4x512xf32> to vector<4x256xf32>
    %c11 = arith.constant 11 : index
    %c0_39 = arith.constant 0 : index
    %68 = vector.load %arg2[%c11, %c0_39] : memref<49x256xf32, #tpu.memory_space<vmem>>, vector<1x256xf32>
    %69 = vector.broadcast %68 : vector<1x256xf32> to vector<4x256xf32>
    %70 = arith.mulf %67, %69 : vector<4x256xf32>
    %c44 = arith.constant 44 : index
    %c0_40 = arith.constant 0 : index
    %71 = vector.load %arg12[%c44, %c0_40] : memref<200x256xf32, #tpu.memory_space<vmem>>, vector<4x256xf32>
    tpu.vector_store %arg12[%c44, %c0_40], %70 {strides = array<i32>} : memref<200x256xf32, #tpu.memory_space<vmem>>, vector<4x256xf32>,
    %72 = vector.extract_strided_slice %1 {offsets = [0, 98], sizes = [4, 256], strides = [1, 1]} : vector<4x512xf32> to vector<4x256xf32>
    %c12_41 = arith.constant 12 : index
    %c0_42 = arith.constant 0 : index
    %73 = vector.load %arg2[%c12_41, %c0_42] : memref<49x256xf32, #tpu.memory_space<vmem>>, vector<1x256xf32>
    %74 = vector.broadcast %73 : vector<1x256xf32> to vector<4x256xf32>
    %75 = arith.mulf %72, %74 : vector<4x256xf32>
    %c48 = arith.constant 48 : index
    %c0_43 = arith.constant 0 : index
    %76 = vector.load %arg12[%c48, %c0_43] : memref<200x256xf32, #tpu.memory_space<vmem>>, vector<4x256xf32>
    tpu.vector_store %arg12[%c48, %c0_43], %75 {strides = array<i32>} : memref<200x256xf32, #tpu.memory_space<vmem>>, vector<4x256xf32>,
    %77 = vector.extract_strided_slice %1 {offsets = [0, 99], sizes = [4, 256], strides = [1, 1]} : vector<4x512xf32> to vector<4x256xf32>
    %c13 = arith.constant 13 : index
    %c0_44 = arith.constant 0 : index
    %78 = vector.load %arg2[%c13, %c0_44] : memref<49x256xf32, #tpu.memory_space<vmem>>, vector<1x256xf32>
    %79 = vector.broadcast %78 : vector<1x256xf32> to vector<4x256xf32>
    %80 = arith.mulf %77, %79 : vector<4x256xf32>
    %c52 = arith.constant 52 : index
    %c0_45 = arith.constant 0 : index
    %81 = vector.load %arg12[%c52, %c0_45] : memref<200x256xf32, #tpu.memory_space<vmem>>, vector<4x256xf32>
    tpu.vector_store %arg12[%c52, %c0_45], %80 {strides = array<i32>} : memref<200x256xf32, #tpu.memory_space<vmem>>, vector<4x256xf32>,
    %82 = vector.extract_strided_slice %1 {offsets = [0, 109], sizes = [4, 256], strides = [1, 1]} : vector<4x512xf32> to vector<4x256xf32>
    %c14 = arith.constant 14 : index
    %c0_46 = arith.constant 0 : index
    %83 = vector.load %arg2[%c14, %c0_46] : memref<49x256xf32, #tpu.memory_space<vmem>>, vector<1x256xf32>
    %84 = vector.broadcast %83 : vector<1x256xf32> to vector<4x256xf32>
    %85 = arith.mulf %82, %84 : vector<4x256xf32>
    %c56 = arith.constant 56 : index
    %c0_47 = arith.constant 0 : index
    %86 = vector.load %arg12[%c56, %c0_47] : memref<200x256xf32, #tpu.memory_space<vmem>>, vector<4x256xf32>
    tpu.vector_store %arg12[%c56, %c0_47], %85 {strides = array<i32>} : memref<200x256xf32, #tpu.memory_space<vmem>>, vector<4x256xf32>,
    %87 = vector.extract_strided_slice %1 {offsets = [0, 110], sizes = [4, 256], strides = [1, 1]} : vector<4x512xf32> to vector<4x256xf32>
    %c15 = arith.constant 15 : index
    %c0_48 = arith.constant 0 : index
    %88 = vector.load %arg2[%c15, %c0_48] : memref<49x256xf32, #tpu.memory_space<vmem>>, vector<1x256xf32>
    %89 = vector.broadcast %88 : vector<1x256xf32> to vector<4x256xf32>
    %90 = arith.mulf %87, %89 : vector<4x256xf32>
    %c60 = arith.constant 60 : index
    %c0_49 = arith.constant 0 : index
    %91 = vector.load %arg12[%c60, %c0_49] : memref<200x256xf32, #tpu.memory_space<vmem>>, vector<4x256xf32>
    tpu.vector_store %arg12[%c60, %c0_49], %90 {strides = array<i32>} : memref<200x256xf32, #tpu.memory_space<vmem>>, vector<4x256xf32>,
    %92 = vector.extract_strided_slice %1 {offsets = [0, 111], sizes = [4, 256], strides = [1, 1]} : vector<4x512xf32> to vector<4x256xf32>
    %c16_50 = arith.constant 16 : index
    %c0_51 = arith.constant 0 : index
    %93 = vector.load %arg2[%c16_50, %c0_51] : memref<49x256xf32, #tpu.memory_space<vmem>>, vector<1x256xf32>
    %94 = vector.broadcast %93 : vector<1x256xf32> to vector<4x256xf32>
    %95 = arith.mulf %92, %94 : vector<4x256xf32>
    %c64 = arith.constant 64 : index
    %c0_52 = arith.constant 0 : index
    %96 = vector.load %arg12[%c64, %c0_52] : memref<200x256xf32, #tpu.memory_space<vmem>>, vector<4x256xf32>
    tpu.vector_store %arg12[%c64, %c0_52], %95 {strides = array<i32>} : memref<200x256xf32, #tpu.memory_space<vmem>>, vector<4x256xf32>,
    %97 = vector.extract_strided_slice %1 {offsets = [0, 112], sizes = [4, 256], strides = [1, 1]} : vector<4x512xf32> to vector<4x256xf32>
    %c68 = arith.constant 68 : index
    %c0_53 = arith.constant 0 : index
    %98 = vector.load %arg12[%c68, %c0_53] : memref<200x256xf32, #tpu.memory_space<vmem>>, vector<4x256xf32>
    tpu.vector_store %arg12[%c68, %c0_53], %97 {strides = array<i32>} : memref<200x256xf32, #tpu.memory_space<vmem>>, vector<4x256xf32>,
    %99 = vector.extract_strided_slice %1 {offsets = [0, 113], sizes = [4, 256], strides = [1, 1]} : vector<4x512xf32> to vector<4x256xf32>
    %c18 = arith.constant 18 : index
    %c0_54 = arith.constant 0 : index
    %100 = vector.load %arg2[%c18, %c0_54] : memref<49x256xf32, #tpu.memory_space<vmem>>, vector<1x256xf32>
    %101 = vector.broadcast %100 : vector<1x256xf32> to vector<4x256xf32>
    %102 = arith.mulf %99, %101 : vector<4x256xf32>
    %c72 = arith.constant 72 : index
    %c0_55 = arith.constant 0 : index
    %103 = vector.load %arg12[%c72, %c0_55] : memref<200x256xf32, #tpu.memory_space<vmem>>, vector<4x256xf32>
    tpu.vector_store %arg12[%c72, %c0_55], %102 {strides = array<i32>} : memref<200x256xf32, #tpu.memory_space<vmem>>, vector<4x256xf32>,
    %104 = vector.extract_strided_slice %1 {offsets = [0, 114], sizes = [4, 256], strides = [1, 1]} : vector<4x512xf32> to vector<4x256xf32>
    %c19 = arith.constant 19 : index
    %c0_56 = arith.constant 0 : index
    %105 = vector.load %arg2[%c19, %c0_56] : memref<49x256xf32, #tpu.memory_space<vmem>>, vector<1x256xf32>
    %106 = vector.broadcast %105 : vector<1x256xf32> to vector<4x256xf32>
    %107 = arith.mulf %104, %106 : vector<4x256xf32>
    %c76 = arith.constant 76 : index
    %c0_57 = arith.constant 0 : index
    %108 = vector.load %arg12[%c76, %c0_57] : memref<200x256xf32, #tpu.memory_space<vmem>>, vector<4x256xf32>
    tpu.vector_store %arg12[%c76, %c0_57], %107 {strides = array<i32>} : memref<200x256xf32, #tpu.memory_space<vmem>>, vector<4x256xf32>,
    %109 = vector.extract_strided_slice %1 {offsets = [0, 115], sizes = [4, 256], strides = [1, 1]} : vector<4x512xf32> to vector<4x256xf32>
    %c20_58 = arith.constant 20 : index
    %c0_59 = arith.constant 0 : index
    %110 = vector.load %arg2[%c20_58, %c0_59] : memref<49x256xf32, #tpu.memory_space<vmem>>, vector<1x256xf32>
    %111 = vector.broadcast %110 : vector<1x256xf32> to vector<4x256xf32>
    %112 = arith.mulf %109, %111 : vector<4x256xf32>
    %c80 = arith.constant 80 : index
    %c0_60 = arith.constant 0 : index
    %113 = vector.load %arg12[%c80, %c0_60] : memref<200x256xf32, #tpu.memory_space<vmem>>, vector<4x256xf32>
    tpu.vector_store %arg12[%c80, %c0_60], %112 {strides = array<i32>} : memref<200x256xf32, #tpu.memory_space<vmem>>, vector<4x256xf32>,
    %114 = vector.extract_strided_slice %1 {offsets = [0, 125], sizes = [4, 256], strides = [1, 1]} : vector<4x512xf32> to vector<4x256xf32>
    %c21 = arith.constant 21 : index
    %c0_61 = arith.constant 0 : index
    %115 = vector.load %arg2[%c21, %c0_61] : memref<49x256xf32, #tpu.memory_space<vmem>>, vector<1x256xf32>
    %116 = vector.broadcast %115 : vector<1x256xf32> to vector<4x256xf32>
    %117 = arith.mulf %114, %116 : vector<4x256xf32>
    %c84 = arith.constant 84 : index
    %c0_62 = arith.constant 0 : index
    %118 = vector.load %arg12[%c84, %c0_62] : memref<200x256xf32, #tpu.memory_space<vmem>>, vector<4x256xf32>
    tpu.vector_store %arg12[%c84, %c0_62], %117 {strides = array<i32>} : memref<200x256xf32, #tpu.memory_space<vmem>>, vector<4x256xf32>,
    %119 = vector.extract_strided_slice %1 {offsets = [0, 126], sizes = [4, 256], strides = [1, 1]} : vector<4x512xf32> to vector<4x256xf32>
    %c22 = arith.constant 22 : index
    %c0_63 = arith.constant 0 : index
    %120 = vector.load %arg2[%c22, %c0_63] : memref<49x256xf32, #tpu.memory_space<vmem>>, vector<1x256xf32>
    %121 = vector.broadcast %120 : vector<1x256xf32> to vector<4x256xf32>
    %122 = arith.mulf %119, %121 : vector<4x256xf32>
    %c88 = arith.constant 88 : index
    %c0_64 = arith.constant 0 : index
    %123 = vector.load %arg12[%c88, %c0_64] : memref<200x256xf32, #tpu.memory_space<vmem>>, vector<4x256xf32>
    tpu.vector_store %arg12[%c88, %c0_64], %122 {strides = array<i32>} : memref<200x256xf32, #tpu.memory_space<vmem>>, vector<4x256xf32>,
    %124 = vector.extract_strided_slice %1 {offsets = [0, 127], sizes = [4, 256], strides = [1, 1]} : vector<4x512xf32> to vector<4x256xf32>
    %c23 = arith.constant 23 : index
    %c0_65 = arith.constant 0 : index
    %125 = vector.load %arg2[%c23, %c0_65] : memref<49x256xf32, #tpu.memory_space<vmem>>, vector<1x256xf32>
    %126 = vector.broadcast %125 : vector<1x256xf32> to vector<4x256xf32>
    %127 = arith.mulf %124, %126 : vector<4x256xf32>
    %c92 = arith.constant 92 : index
    %c0_66 = arith.constant 0 : index
    %128 = vector.load %arg12[%c92, %c0_66] : memref<200x256xf32, #tpu.memory_space<vmem>>, vector<4x256xf32>
    tpu.vector_store %arg12[%c92, %c0_66], %127 {strides = array<i32>} : memref<200x256xf32, #tpu.memory_space<vmem>>, vector<4x256xf32>,
    %129 = vector.extract_strided_slice %1 {offsets = [0, 128], sizes = [4, 256], strides = [1, 1]} : vector<4x512xf32> to vector<4x256xf32>
    %c96 = arith.constant 96 : index
    %c0_67 = arith.constant 0 : index
    %130 = vector.load %arg12[%c96, %c0_67] : memref<200x256xf32, #tpu.memory_space<vmem>>, vector<4x256xf32>
    tpu.vector_store %arg12[%c96, %c0_67], %129 {strides = array<i32>} : memref<200x256xf32, #tpu.memory_space<vmem>>, vector<4x256xf32>,
    %131 = vector.extract_strided_slice %1 {offsets = [0, 129], sizes = [4, 256], strides = [1, 1]} : vector<4x512xf32> to vector<4x256xf32>
    %c25 = arith.constant 25 : index
    %c0_68 = arith.constant 0 : index
    %132 = vector.load %arg2[%c25, %c0_68] : memref<49x256xf32, #tpu.memory_space<vmem>>, vector<1x256xf32>
    %133 = vector.broadcast %132 : vector<1x256xf32> to vector<4x256xf32>
    %134 = arith.mulf %131, %133 : vector<4x256xf32>
    %c100 = arith.constant 100 : index
    %c0_69 = arith.constant 0 : index
    %135 = vector.load %arg12[%c100, %c0_69] : memref<200x256xf32, #tpu.memory_space<vmem>>, vector<4x256xf32>
    tpu.vector_store %arg12[%c100, %c0_69], %134 {strides = array<i32>} : memref<200x256xf32, #tpu.memory_space<vmem>>, vector<4x256xf32>,
    %136 = vector.extract_strided_slice %1 {offsets = [0, 130], sizes = [4, 256], strides = [1, 1]} : vector<4x512xf32> to vector<4x256xf32>
    %c26 = arith.constant 26 : index
    %c0_70 = arith.constant 0 : index
    %137 = vector.load %arg2[%c26, %c0_70] : memref<49x256xf32, #tpu.memory_space<vmem>>, vector<1x256xf32>
    %138 = vector.broadcast %137 : vector<1x256xf32> to vector<4x256xf32>
    %139 = arith.mulf %136, %138 : vector<4x256xf32>
    %c104 = arith.constant 104 : index
    %c0_71 = arith.constant 0 : index
    %140 = vector.load %arg12[%c104, %c0_71] : memref<200x256xf32, #tpu.memory_space<vmem>>, vector<4x256xf32>
    tpu.vector_store %arg12[%c104, %c0_71], %139 {strides = array<i32>} : memref<200x256xf32, #tpu.memory_space<vmem>>, vector<4x256xf32>,
    %141 = vector.extract_strided_slice %1 {offsets = [0, 131], sizes = [4, 256], strides = [1, 1]} : vector<4x512xf32> to vector<4x256xf32>
    %c27 = arith.constant 27 : index
    %c0_72 = arith.constant 0 : index
    %142 = vector.load %arg2[%c27, %c0_72] : memref<49x256xf32, #tpu.memory_space<vmem>>, vector<1x256xf32>
    %143 = vector.broadcast %142 : vector<1x256xf32> to vector<4x256xf32>
    %144 = arith.mulf %141, %143 : vector<4x256xf32>
    %c108 = arith.constant 108 : index
    %c0_73 = arith.constant 0 : index
    %145 = vector.load %arg12[%c108, %c0_73] : memref<200x256xf32, #tpu.memory_space<vmem>>, vector<4x256xf32>
    tpu.vector_store %arg12[%c108, %c0_73], %144 {strides = array<i32>} : memref<200x256xf32, #tpu.memory_space<vmem>>, vector<4x256xf32>,
    %146 = vector.extract_strided_slice %1 {offsets = [0, 141], sizes = [4, 256], strides = [1, 1]} : vector<4x512xf32> to vector<4x256xf32>
    %c28_74 = arith.constant 28 : index
    %c0_75 = arith.constant 0 : index
    %147 = vector.load %arg2[%c28_74, %c0_75] : memref<49x256xf32, #tpu.memory_space<vmem>>, vector<1x256xf32>
    %148 = vector.broadcast %147 : vector<1x256xf32> to vector<4x256xf32>
    %149 = arith.mulf %146, %148 : vector<4x256xf32>
    %c112 = arith.constant 112 : index
    %c0_76 = arith.constant 0 : index
    %150 = vector.load %arg12[%c112, %c0_76] : memref<200x256xf32, #tpu.memory_space<vmem>>, vector<4x256xf32>
    tpu.vector_store %arg12[%c112, %c0_76], %149 {strides = array<i32>} : memref<200x256xf32, #tpu.memory_space<vmem>>, vector<4x256xf32>,
    %151 = vector.extract_strided_slice %1 {offsets = [0, 142], sizes = [4, 256], strides = [1, 1]} : vector<4x512xf32> to vector<4x256xf32>
    %c29 = arith.constant 29 : index
    %c0_77 = arith.constant 0 : index
    %152 = vector.load %arg2[%c29, %c0_77] : memref<49x256xf32, #tpu.memory_space<vmem>>, vector<1x256xf32>
    %153 = vector.broadcast %152 : vector<1x256xf32> to vector<4x256xf32>
    %154 = arith.mulf %151, %153 : vector<4x256xf32>
    %c116 = arith.constant 116 : index
    %c0_78 = arith.constant 0 : index
    %155 = vector.load %arg12[%c116, %c0_78] : memref<200x256xf32, #tpu.memory_space<vmem>>, vector<4x256xf32>
    tpu.vector_store %arg12[%c116, %c0_78], %154 {strides = array<i32>} : memref<200x256xf32, #tpu.memory_space<vmem>>, vector<4x256xf32>,
    %156 = vector.extract_strided_slice %1 {offsets = [0, 143], sizes = [4, 256], strides = [1, 1]} : vector<4x512xf32> to vector<4x256xf32>
    %c30 = arith.constant 30 : index
    %c0_79 = arith.constant 0 : index
    %157 = vector.load %arg2[%c30, %c0_79] : memref<49x256xf32, #tpu.memory_space<vmem>>, vector<1x256xf32>
    %158 = vector.broadcast %157 : vector<1x256xf32> to vector<4x256xf32>
    %159 = arith.mulf %156, %158 : vector<4x256xf32>
    %c120 = arith.constant 120 : index
    %c0_80 = arith.constant 0 : index
    %160 = vector.load %arg12[%c120, %c0_80] : memref<200x256xf32, #tpu.memory_space<vmem>>, vector<4x256xf32>
    tpu.vector_store %arg12[%c120, %c0_80], %159 {strides = array<i32>} : memref<200x256xf32, #tpu.memory_space<vmem>>, vector<4x256xf32>,
    %161 = vector.extract_strided_slice %1 {offsets = [0, 144], sizes = [4, 256], strides = [1, 1]} : vector<4x512xf32> to vector<4x256xf32>
    %c124 = arith.constant 124 : index
    %c0_81 = arith.constant 0 : index
    %162 = vector.load %arg12[%c124, %c0_81] : memref<200x256xf32, #tpu.memory_space<vmem>>, vector<4x256xf32>
    tpu.vector_store %arg12[%c124, %c0_81], %161 {strides = array<i32>} : memref<200x256xf32, #tpu.memory_space<vmem>>, vector<4x256xf32>,
    %163 = vector.extract_strided_slice %1 {offsets = [0, 145], sizes = [4, 256], strides = [1, 1]} : vector<4x512xf32> to vector<4x256xf32>
    %c32_82 = arith.constant 32 : index
    %c0_83 = arith.constant 0 : index
    %164 = vector.load %arg2[%c32_82, %c0_83] : memref<49x256xf32, #tpu.memory_space<vmem>>, vector<1x256xf32>
    %165 = vector.broadcast %164 : vector<1x256xf32> to vector<4x256xf32>
    %166 = arith.mulf %163, %165 : vector<4x256xf32>
    %c128 = arith.constant 128 : index
    %c0_84 = arith.constant 0 : index
    %167 = vector.load %arg12[%c128, %c0_84] : memref<200x256xf32, #tpu.memory_space<vmem>>, vector<4x256xf32>
    tpu.vector_store %arg12[%c128, %c0_84], %166 {strides = array<i32>} : memref<200x256xf32, #tpu.memory_space<vmem>>, vector<4x256xf32>,
    %168 = vector.extract_strided_slice %1 {offsets = [0, 146], sizes = [4, 256], strides = [1, 1]} : vector<4x512xf32> to vector<4x256xf32>
    %c33 = arith.constant 33 : index
    %c0_85 = arith.constant 0 : index
    %169 = vector.load %arg2[%c33, %c0_85] : memref<49x256xf32, #tpu.memory_space<vmem>>, vector<1x256xf32>
    %170 = vector.broadcast %169 : vector<1x256xf32> to vector<4x256xf32>
    %171 = arith.mulf %168, %170 : vector<4x256xf32>
    %c132 = arith.constant 132 : index
    %c0_86 = arith.constant 0 : index
    %172 = vector.load %arg12[%c132, %c0_86] : memref<200x256xf32, #tpu.memory_space<vmem>>, vector<4x256xf32>
    tpu.vector_store %arg12[%c132, %c0_86], %171 {strides = array<i32>} : memref<200x256xf32, #tpu.memory_space<vmem>>, vector<4x256xf32>,
    %173 = vector.extract_strided_slice %1 {offsets = [0, 147], sizes = [4, 256], strides = [1, 1]} : vector<4x512xf32> to vector<4x256xf32>
    %c34 = arith.constant 34 : index
    %c0_87 = arith.constant 0 : index
    %174 = vector.load %arg2[%c34, %c0_87] : memref<49x256xf32, #tpu.memory_space<vmem>>, vector<1x256xf32>
    %175 = vector.broadcast %174 : vector<1x256xf32> to vector<4x256xf32>
    %176 = arith.mulf %173, %175 : vector<4x256xf32>
    %c136 = arith.constant 136 : index
    %c0_88 = arith.constant 0 : index
    %177 = vector.load %arg12[%c136, %c0_88] : memref<200x256xf32, #tpu.memory_space<vmem>>, vector<4x256xf32>
    tpu.vector_store %arg12[%c136, %c0_88], %176 {strides = array<i32>} : memref<200x256xf32, #tpu.memory_space<vmem>>, vector<4x256xf32>,
    %178 = vector.extract_strided_slice %1 {offsets = [0, 157], sizes = [4, 256], strides = [1, 1]} : vector<4x512xf32> to vector<4x256xf32>
    %c35 = arith.constant 35 : index
    %c0_89 = arith.constant 0 : index
    %179 = vector.load %arg2[%c35, %c0_89] : memref<49x256xf32, #tpu.memory_space<vmem>>, vector<1x256xf32>
    %180 = vector.broadcast %179 : vector<1x256xf32> to vector<4x256xf32>
    %181 = arith.mulf %178, %180 : vector<4x256xf32>
    %c140 = arith.constant 140 : index
    %c0_90 = arith.constant 0 : index
    %182 = vector.load %arg12[%c140, %c0_90] : memref<200x256xf32, #tpu.memory_space<vmem>>, vector<4x256xf32>
    tpu.vector_store %arg12[%c140, %c0_90], %181 {strides = array<i32>} : memref<200x256xf32, #tpu.memory_space<vmem>>, vector<4x256xf32>,
    %183 = vector.extract_strided_slice %1 {offsets = [0, 158], sizes = [4, 256], strides = [1, 1]} : vector<4x512xf32> to vector<4x256xf32>
    %c36_91 = arith.constant 36 : index
    %c0_92 = arith.constant 0 : index
    %184 = vector.load %arg2[%c36_91, %c0_92] : memref<49x256xf32, #tpu.memory_space<vmem>>, vector<1x256xf32>
    %185 = vector.broadcast %184 : vector<1x256xf32> to vector<4x256xf32>
    %186 = arith.mulf %183, %185 : vector<4x256xf32>
    %c144 = arith.constant 144 : index
    %c0_93 = arith.constant 0 : index
    %187 = vector.load %arg12[%c144, %c0_93] : memref<200x256xf32, #tpu.memory_space<vmem>>, vector<4x256xf32>
    tpu.vector_store %arg12[%c144, %c0_93], %186 {strides = array<i32>} : memref<200x256xf32, #tpu.memory_space<vmem>>, vector<4x256xf32>,
    %188 = vector.extract_strided_slice %1 {offsets = [0, 159], sizes = [4, 256], strides = [1, 1]} : vector<4x512xf32> to vector<4x256xf32>
    %c37 = arith.constant 37 : index
    %c0_94 = arith.constant 0 : index
    %189 = vector.load %arg2[%c37, %c0_94] : memref<49x256xf32, #tpu.memory_space<vmem>>, vector<1x256xf32>
    %190 = vector.broadcast %189 : vector<1x256xf32> to vector<4x256xf32>
    %191 = arith.mulf %188, %190 : vector<4x256xf32>
    %c148 = arith.constant 148 : index
    %c0_95 = arith.constant 0 : index
    %192 = vector.load %arg12[%c148, %c0_95] : memref<200x256xf32, #tpu.memory_space<vmem>>, vector<4x256xf32>
    tpu.vector_store %arg12[%c148, %c0_95], %191 {strides = array<i32>} : memref<200x256xf32, #tpu.memory_space<vmem>>, vector<4x256xf32>,
    %193 = vector.extract_strided_slice %1 {offsets = [0, 160], sizes = [4, 256], strides = [1, 1]} : vector<4x512xf32> to vector<4x256xf32>
    %c152 = arith.constant 152 : index
    %c0_96 = arith.constant 0 : index
    %194 = vector.load %arg12[%c152, %c0_96] : memref<200x256xf32, #tpu.memory_space<vmem>>, vector<4x256xf32>
    tpu.vector_store %arg12[%c152, %c0_96], %193 {strides = array<i32>} : memref<200x256xf32, #tpu.memory_space<vmem>>, vector<4x256xf32>,
    %195 = vector.extract_strided_slice %1 {offsets = [0, 161], sizes = [4, 256], strides = [1, 1]} : vector<4x512xf32> to vector<4x256xf32>
    %c39 = arith.constant 39 : index
    %c0_97 = arith.constant 0 : index
    %196 = vector.load %arg2[%c39, %c0_97] : memref<49x256xf32, #tpu.memory_space<vmem>>, vector<1x256xf32>
    %197 = vector.broadcast %196 : vector<1x256xf32> to vector<4x256xf32>
    %198 = arith.mulf %195, %197 : vector<4x256xf32>
    %c156 = arith.constant 156 : index
    %c0_98 = arith.constant 0 : index
    %199 = vector.load %arg12[%c156, %c0_98] : memref<200x256xf32, #tpu.memory_space<vmem>>, vector<4x256xf32>
    tpu.vector_store %arg12[%c156, %c0_98], %198 {strides = array<i32>} : memref<200x256xf32, #tpu.memory_space<vmem>>, vector<4x256xf32>,
    %200 = vector.extract_strided_slice %1 {offsets = [0, 162], sizes = [4, 256], strides = [1, 1]} : vector<4x512xf32> to vector<4x256xf32>
    %c40_99 = arith.constant 40 : index
    %c0_100 = arith.constant 0 : index
    %201 = vector.load %arg2[%c40_99, %c0_100] : memref<49x256xf32, #tpu.memory_space<vmem>>, vector<1x256xf32>
    %202 = vector.broadcast %201 : vector<1x256xf32> to vector<4x256xf32>
    %203 = arith.mulf %200, %202 : vector<4x256xf32>
    %c160 = arith.constant 160 : index
    %c0_101 = arith.constant 0 : index
    %204 = vector.load %arg12[%c160, %c0_101] : memref<200x256xf32, #tpu.memory_space<vmem>>, vector<4x256xf32>
    tpu.vector_store %arg12[%c160, %c0_101], %203 {strides = array<i32>} : memref<200x256xf32, #tpu.memory_space<vmem>>, vector<4x256xf32>,
    %205 = vector.extract_strided_slice %1 {offsets = [0, 163], sizes = [4, 256], strides = [1, 1]} : vector<4x512xf32> to vector<4x256xf32>
    %c41 = arith.constant 41 : index
    %c0_102 = arith.constant 0 : index
    %206 = vector.load %arg2[%c41, %c0_102] : memref<49x256xf32, #tpu.memory_space<vmem>>, vector<1x256xf32>
    %207 = vector.broadcast %206 : vector<1x256xf32> to vector<4x256xf32>
    %208 = arith.mulf %205, %207 : vector<4x256xf32>
    %c164 = arith.constant 164 : index
    %c0_103 = arith.constant 0 : index
    %209 = vector.load %arg12[%c164, %c0_103] : memref<200x256xf32, #tpu.memory_space<vmem>>, vector<4x256xf32>
    tpu.vector_store %arg12[%c164, %c0_103], %208 {strides = array<i32>} : memref<200x256xf32, #tpu.memory_space<vmem>>, vector<4x256xf32>,
    %210 = vector.extract_strided_slice %1 {offsets = [0, 173], sizes = [4, 256], strides = [1, 1]} : vector<4x512xf32> to vector<4x256xf32>
    %c42 = arith.constant 42 : index
    %c0_104 = arith.constant 0 : index
    %211 = vector.load %arg2[%c42, %c0_104] : memref<49x256xf32, #tpu.memory_space<vmem>>, vector<1x256xf32>
    %212 = vector.broadcast %211 : vector<1x256xf32> to vector<4x256xf32>
    %213 = arith.mulf %210, %212 : vector<4x256xf32>
    %c168 = arith.constant 168 : index
    %c0_105 = arith.constant 0 : index
    %214 = vector.load %arg12[%c168, %c0_105] : memref<200x256xf32, #tpu.memory_space<vmem>>, vector<4x256xf32>
    tpu.vector_store %arg12[%c168, %c0_105], %213 {strides = array<i32>} : memref<200x256xf32, #tpu.memory_space<vmem>>, vector<4x256xf32>,
    %215 = vector.extract_strided_slice %1 {offsets = [0, 174], sizes = [4, 256], strides = [1, 1]} : vector<4x512xf32> to vector<4x256xf32>
    %c43 = arith.constant 43 : index
    %c0_106 = arith.constant 0 : index
    %216 = vector.load %arg2[%c43, %c0_106] : memref<49x256xf32, #tpu.memory_space<vmem>>, vector<1x256xf32>
    %217 = vector.broadcast %216 : vector<1x256xf32> to vector<4x256xf32>
    %218 = arith.mulf %215, %217 : vector<4x256xf32>
    %c172 = arith.constant 172 : index
    %c0_107 = arith.constant 0 : index
    %219 = vector.load %arg12[%c172, %c0_107] : memref<200x256xf32, #tpu.memory_space<vmem>>, vector<4x256xf32>
    tpu.vector_store %arg12[%c172, %c0_107], %218 {strides = array<i32>} : memref<200x256xf32, #tpu.memory_space<vmem>>, vector<4x256xf32>,
    %220 = vector.extract_strided_slice %1 {offsets = [0, 175], sizes = [4, 256], strides = [1, 1]} : vector<4x512xf32> to vector<4x256xf32>
    %c44_108 = arith.constant 44 : index
    %c0_109 = arith.constant 0 : index
    %221 = vector.load %arg2[%c44_108, %c0_109] : memref<49x256xf32, #tpu.memory_space<vmem>>, vector<1x256xf32>
    %222 = vector.broadcast %221 : vector<1x256xf32> to vector<4x256xf32>
    %223 = arith.mulf %220, %222 : vector<4x256xf32>
    %c176 = arith.constant 176 : index
    %c0_110 = arith.constant 0 : index
    %224 = vector.load %arg12[%c176, %c0_110] : memref<200x256xf32, #tpu.memory_space<vmem>>, vector<4x256xf32>
    tpu.vector_store %arg12[%c176, %c0_110], %223 {strides = array<i32>} : memref<200x256xf32, #tpu.memory_space<vmem>>, vector<4x256xf32>,
    %225 = vector.extract_strided_slice %1 {offsets = [0, 176], sizes = [4, 256], strides = [1, 1]} : vector<4x512xf32> to vector<4x256xf32>
    %c180 = arith.constant 180 : index
    %c0_111 = arith.constant 0 : index
    %226 = vector.load %arg12[%c180, %c0_111] : memref<200x256xf32, #tpu.memory_space<vmem>>, vector<4x256xf32>
    tpu.vector_store %arg12[%c180, %c0_111], %225 {strides = array<i32>} : memref<200x256xf32, #tpu.memory_space<vmem>>, vector<4x256xf32>,
    %227 = vector.extract_strided_slice %1 {offsets = [0, 177], sizes = [4, 256], strides = [1, 1]} : vector<4x512xf32> to vector<4x256xf32>
    %c46 = arith.constant 46 : index
    %c0_112 = arith.constant 0 : index
    %228 = vector.load %arg2[%c46, %c0_112] : memref<49x256xf32, #tpu.memory_space<vmem>>, vector<1x256xf32>
    %229 = vector.broadcast %228 : vector<1x256xf32> to vector<4x256xf32>
    %230 = arith.mulf %227, %229 : vector<4x256xf32>
    %c184 = arith.constant 184 : index
    %c0_113 = arith.constant 0 : index
    %231 = vector.load %arg12[%c184, %c0_113] : memref<200x256xf32, #tpu.memory_space<vmem>>, vector<4x256xf32>
    tpu.vector_store %arg12[%c184, %c0_113], %230 {strides = array<i32>} : memref<200x256xf32, #tpu.memory_space<vmem>>, vector<4x256xf32>,
    %232 = vector.extract_strided_slice %1 {offsets = [0, 178], sizes = [4, 256], strides = [1, 1]} : vector<4x512xf32> to vector<4x256xf32>
    %c47 = arith.constant 47 : index
    %c0_114 = arith.constant 0 : index
    %233 = vector.load %arg2[%c47, %c0_114] : memref<49x256xf32, #tpu.memory_space<vmem>>, vector<1x256xf32>
    %234 = vector.broadcast %233 : vector<1x256xf32> to vector<4x256xf32>
    %235 = arith.mulf %232, %234 : vector<4x256xf32>
    %c188 = arith.constant 188 : index
    %c0_115 = arith.constant 0 : index
    %236 = vector.load %arg12[%c188, %c0_115] : memref<200x256xf32, #tpu.memory_space<vmem>>, vector<4x256xf32>
    tpu.vector_store %arg12[%c188, %c0_115], %235 {strides = array<i32>} : memref<200x256xf32, #tpu.memory_space<vmem>>, vector<4x256xf32>,
    %237 = vector.extract_strided_slice %1 {offsets = [0, 179], sizes = [4, 256], strides = [1, 1]} : vector<4x512xf32> to vector<4x256xf32>
    %c48_116 = arith.constant 48 : index
    %c0_117 = arith.constant 0 : index
    %238 = vector.load %arg2[%c48_116, %c0_117] : memref<49x256xf32, #tpu.memory_space<vmem>>, vector<1x256xf32>
    %239 = vector.broadcast %238 : vector<1x256xf32> to vector<4x256xf32>
    %240 = arith.mulf %237, %239 : vector<4x256xf32>
    %c192 = arith.constant 192 : index
    %c0_118 = arith.constant 0 : index
    %241 = vector.load %arg12[%c192, %c0_118] : memref<200x256xf32, #tpu.memory_space<vmem>>, vector<4x256xf32>
    tpu.vector_store %arg12[%c192, %c0_118], %240 {strides = array<i32>} : memref<200x256xf32, #tpu.memory_space<vmem>>, vector<4x256xf32>,
    %c0_119 = arith.constant 0 : index
    %c0_120 = arith.constant 0 : index
    %242 = vector.load %arg7[%c0_119, %c0_120] : memref<16x200xf32, #tpu.memory_space<vmem>>, vector<16x200xf32>
    %c0_121 = arith.constant 0 : index
    %c0_122 = arith.constant 0 : index
    %243 = vector.load %arg12[%c0_121, %c0_122] : memref<200x256xf32, #tpu.memory_space<vmem>>, vector<200x256xf32>
    %cst_123 = arith.constant dense<0.000000e+00> : vector<16x256xf32>
    %244 = tpu.matmul %242, %243, %cst_123 {dimension_numbers = #tpu.dot_dimension_numbers<[1], [0], [0], [1], [0, 0, 1, 1], [], []>} : vector<16x200xf32>, vector<200x256xf32>, vector<16x256xf32> -> vector<16x256xf32>
    %c0_124 = arith.constant 0 : index
    %c0_125 = arith.constant 0 : index
    %245 = vector.load %arg8[%c0_124, %c0_125] : memref<16x1xf32, #tpu.memory_space<vmem>>, vector<16x1xf32>
    %246 = vector.broadcast %245 : vector<16x1xf32> to vector<16x256xf32>
    %247 = arith.addf %244, %246 : vector<16x256xf32>
    %cst_126 = arith.constant dense<0.000000e+00> : vector<64x16xf32>
    %248 = tpu.matmul %7, %247, %cst_126 {dimension_numbers = #tpu.dot_dimension_numbers<[1], [1], [0], [0], [0, 0, 1, 0], [], []>} : vector<64x256xf32>, vector<16x256xf32>, vector<64x16xf32> -> vector<64x16xf32>
    %249 = vector.broadcast %15 : vector<64x1xf32> to vector<64x16xf32>
    %250 = arith.mulf %249, %248 : vector<64x16xf32>
    %cst_127 = arith.constant dense<0.000000e+00> : vector<16x256xf32>
    %251 = tpu.matmul %250, %7, %cst_127 {dimension_numbers = #tpu.dot_dimension_numbers<[0], [0], [1], [1], [0, 1, 1, 1], [], []>} : vector<64x16xf32>, vector<64x256xf32>, vector<16x256xf32> -> vector<16x256xf32>
    %252 = math.absf %251 : vector<16x256xf32>
    %cst_128 = arith.constant dense<0.000000e+00> : vector<256xf32>
    %253 = vector.multi_reduction <add>, %252, %cst_128 [0] : vector<16x256xf32> to vector<256xf32>
    %254 = vector.shape_cast %253 : vector<256xf32> to vector<1x256xf32>
    %cst_129 = arith.constant 1.000000e-10 : f32
    %255 = vector.broadcast %cst_129 : f32 to vector<1x256xf32>
    %256 = arith.addf %254, %255 : vector<1x256xf32>
    %257 = math.rsqrt %256 : vector<1x256xf32>
    %258 = vector.broadcast %257 : vector<1x256xf32> to vector<16x256xf32>
    %259 = arith.mulf %258, %252 : vector<16x256xf32>
    %cst_130 = arith.constant dense<0.000000e+00> : vector<16xf32>
    %260 = vector.multi_reduction <add>, %252, %cst_130 [1] : vector<16x256xf32> to vector<16xf32>
    %261 = vector.shape_cast %260 : vector<16xf32> to vector<16x1xf32>
    %262 = tpu.reciprocal %261 {approx = true} : vector<16x1xf32> -> vector<16x1xf32>
    %cst_131 = arith.constant dense<0.000000e+00> : vector<16x4xf32>
    %263 = tpu.matmul %259, %2, %cst_131 {dimension_numbers = #tpu.dot_dimension_numbers<[1], [1], [0], [0], [0, 0, 1, 0], [], []>} : vector<16x256xf32>, vector<4x256xf32>, vector<16x4xf32> -> vector<16x4xf32>
    %264 = vector.broadcast %262 : vector<16x1xf32> to vector<16x4xf32>
    %265 = arith.mulf %264, %263 : vector<16x4xf32>
    %cst_132 = arith.constant dense<0.000000e+00> : vector<4x256xf32>
    %266 = tpu.matmul %265, %259, %cst_132 {dimension_numbers = #tpu.dot_dimension_numbers<[0], [0], [1], [1], [0, 1, 1, 1], [], []>} : vector<16x4xf32>, vector<16x256xf32>, vector<4x256xf32> -> vector<4x256xf32>
    %267 = arith.subf %2, %266 : vector<4x256xf32>
    %c0_133 = arith.constant 0 : index
    %c0_134 = arith.constant 0 : index
    %268 = vector.load %arg9[%c0_133, %c0_134] : memref<8x4xf32, #tpu.memory_space<vmem>>, vector<8x4xf32>
    %cst_135 = arith.constant dense<0.000000e+00> : vector<8x256xf32>
    %269 = tpu.matmul %268, %267, %cst_135 {dimension_numbers = #tpu.dot_dimension_numbers<[1], [0], [0], [1], [0, 0, 1, 1], [], []>} : vector<8x4xf32>, vector<4x256xf32>, vector<8x256xf32> -> vector<8x256xf32>
    %c0_136 = arith.constant 0 : index
    %c0_137 = arith.constant 0 : index
    %270 = vector.load %arg10[%c0_136, %c0_137] : memref<8x1xf32, #tpu.memory_space<vmem>>, vector<8x1xf32>
    %271 = vector.broadcast %270 : vector<8x1xf32> to vector<8x256xf32>
    %272 = arith.addf %269, %271 : vector<8x256xf32>
    %cst_138 = arith.constant 0.000000e+00 : f32
    %273 = vector.broadcast %cst_138 : f32 to vector<8x256xf32>
    %274 = arith.maximumf %272, %273 : vector<8x256xf32>
    %c0_139 = arith.constant 0 : index
    %c0_140 = arith.constant 0 : index
    %c0_141 = arith.constant 0 : index
    %275 = vector.load %arg11[%c0_139, %c0_140, %c0_141] : memref<1x8x256xf32, #tpu.memory_space<vmem>>, vector<1x8x256xf32>
    %276 = vector.shape_cast %275 : vector<1x8x256xf32> to vector<8x256xf32>
    %277 = vector.shape_cast %274 : vector<8x256xf32> to vector<1x8x256xf32>
    tpu.vector_store %arg11[%c0_139, %c0_140, %c0_141], %277 {strides = array<i32>} : memref<1x8x256xf32, #tpu.memory_space<vmem>>, vector<1x8x256xf32>,
    return
  }
  func.func @transform_0(%arg0: i32) -> (i32, i32, i32) {
    %c0_i32 = arith.constant 0 : i32
    %c0_i32_0 = arith.constant 0 : i32
    %c0_i32_1 = arith.constant 0 : i32
    return %arg0, %c0_i32, %c0_i32_0 : i32, i32, i32
  }
  func.func @transform_1(%arg0: i32) -> (i32, i32) {
    %c0_i32 = arith.constant 0 : i32
    %c0_i32_0 = arith.constant 0 : i32
    %c0_i32_1 = arith.constant 0 : i32
    return %c0_i32, %c0_i32_0 : i32, i32
  }
  func.func @transform_2(%arg0: i32) -> (i32, i32) {
    %c0_i32 = arith.constant 0 : i32
    %c0_i32_0 = arith.constant 0 : i32
    %c0_i32_1 = arith.constant 0 : i32
    return %c0_i32, %c0_i32_0 : i32, i32
  }
  func.func @transform_3(%arg0: i32) -> (i32, i32) {
    %c0_i32 = arith.constant 0 : i32
    %c0_i32_0 = arith.constant 0 : i32
    %c0_i32_1 = arith.constant 0 : i32
    return %c0_i32, %c0_i32_0 : i32, i32
  }
  func.func @transform_4(%arg0: i32) -> (i32, i32) {
    %c0_i32 = arith.constant 0 : i32
    %c0_i32_0 = arith.constant 0 : i32
    %c0_i32_1 = arith.constant 0 : i32
    return %c0_i32, %c0_i32_0 : i32, i32
  }
  func.func @transform_5(%arg0: i32) -> (i32, i32) {
    %c0_i32 = arith.constant 0 : i32
    %c0_i32_0 = arith.constant 0 : i32
    %c0_i32_1 = arith.constant 0 : i32
    return %c0_i32, %c0_i32_0 : i32, i32
  }
  func.func @transform_6(%arg0: i32) -> (i32, i32) {
    %c0_i32 = arith.constant 0 : i32
    %c0_i32_0 = arith.constant 0 : i32
    %c0_i32_1 = arith.constant 0 : i32
    return %c0_i32, %c0_i32_0 : i32, i32
  }
  func.func @transform_7(%arg0: i32) -> (i32, i32) {
    %c0_i32 = arith.constant 0 : i32
    %c0_i32_0 = arith.constant 0 : i32
    %c0_i32_1 = arith.constant 0 : i32
    return %c0_i32, %c0_i32_0 : i32, i32
  }
  func.func @transform_8(%arg0: i32) -> (i32, i32) {
    %c0_i32 = arith.constant 0 : i32
    %c0_i32_0 = arith.constant 0 : i32
    %c0_i32_1 = arith.constant 0 : i32
    return %c0_i32, %c0_i32_0 : i32, i32
  }
  func.func @transform_9(%arg0: i32) -> (i32, i32) {
    %c0_i32 = arith.constant 0 : i32
    %c0_i32_0 = arith.constant 0 : i32
    %c0_i32_1 = arith.constant 0 : i32
    return %c0_i32, %c0_i32_0 : i32, i32
  }
  func.func @transform_10(%arg0: i32) -> (i32, i32, i32) {
    %c0_i32 = arith.constant 0 : i32
    %c0_i32_0 = arith.constant 0 : i32
    %c0_i32_1 = arith.constant 0 : i32
    return %arg0, %c0_i32, %c0_i32_0 : i32, i32, i32
  }
}

</mosaic_0001>

<llo_original>
// kernel: hypergraph_conv.1
$region0: #{hypergraph_conv.1}
  #allocation0 [shape = 'u32[]', space=smem, size = 0x4, offset = 0x4, fixed_abs, tag = 'smem constant byte address 0x4 - core index']
  #allocation1 [shape = 'u32[144,128]{1,0:T(1,128)}', space=vmem, size = 0x12000, scoped, tag = 'internal scratch']
  #allocation2 [shape = 'f32[200,256]{1,0:T(8,128)}', space=vmem, size = 0x32000, scoped, tag = 'scratch operand']
  %s0 = inlined_call_operand.vmem [shape: f32[2,4,512], index: 0, kind: input, shape index: {}]
  %s1 = inlined_call_operand.vmem [shape: f32[49,256], index: 1, kind: input, shape index: {}]
  %s2 = inlined_call_operand.vmem [shape: f32[64,4], index: 2, kind: input, shape index: {}]
  %s3 = inlined_call_operand.vmem [shape: f32[64,4], index: 3, kind: input, shape index: {}]
  %s4 = inlined_call_operand.vmem [shape: f32[64,1], index: 4, kind: input, shape index: {}]
  %s5 = inlined_call_operand.vmem [shape: f32[64,1], index: 5, kind: input, shape index: {}]
  %s6 = inlined_call_operand.vmem [shape: f32[16,200], index: 6, kind: input, shape index: {}]
  %s7 = inlined_call_operand.vmem [shape: f32[16,1], index: 7, kind: input, shape index: {}]
  %s8 = inlined_call_operand.vmem [shape: f32[8,4], index: 8, kind: input, shape index: {}]
  %s9 = inlined_call_operand.vmem [shape: f32[8,1], index: 9, kind: input, shape index: {}]
  %s10 = inlined_call_operand.vmem [shape: f32[2,8,256], index: 10, kind: output, shape index: {}]
  %s11 = sld [smem:[#allocation0]]
  $region73: #{hypergraph_conv.1} parent=0
    _
  %s13 = ssub.s32 1, %s11
  %s14 = scalar_select 0, %s13, %s11
  loop: start=0, step=1, limit=4
  $region2: #{hypergraph_conv.1} parent=0 // loop_pre_header
    _
  $region3: #{hypergraph_conv.1} parent=0 // loop_header
    %s16 = sphi 0, %s20
    %p17 = scmp.ge.s32.totalorder %s16, 4
    %s26 = sphi 0, %s28
    %s29 = sphi 0, %s26
    %s30 = sphi 0, %s29
    %s46 = sphi 0, %s30
    %s50 = sphi 0, %s50
    %s52 = sphi 0, %s50
    %s53 = sphi 0, %s52
    %s67 = sphi 0, %s53
    %s71 = sphi 0, %s71
    %s73 = sphi 0, %s71
    %s74 = sphi 0, %s73
    %s88 = sphi 0, %s74
    %s92 = sphi 0, %s92
    %s94 = sphi 0, %s92
    %s95 = sphi 0, %s94
    %s109 = sphi 0, %s95
    %s113 = sphi 0, %s113
    %s115 = sphi 0, %s113
    %s116 = sphi 0, %s115
    %s130 = sphi 0, %s116
    %s134 = sphi 0, %s134
    %s136 = sphi 0, %s134
    %s137 = sphi 0, %s136
    %s151 = sphi 0, %s137
    %s155 = sphi 0, %s155
    %s157 = sphi 0, %s155
    %s158 = sphi 0, %s157
    %s172 = sphi 0, %s158
    %s176 = sphi 0, %s176
    %s178 = sphi 0, %s176
    %s179 = sphi 0, %s178
    %s193 = sphi 0, %s179
    %s197 = sphi 0, %s197
    %s199 = sphi 0, %s197
    %s200 = sphi 0, %s199
    %s214 = sphi 0, %s200
    %s218 = sphi 0, %s218
    %s220 = sphi 0, %s218
    %s221 = sphi 0, %s220
    %s235 = sphi 0, %s221
    %s241 = sphi 0, %s243
    %s244 = sphi 0, %s241
    %s245 = sphi 0, %s244
    %s261 = sphi 0, %s245
  $region4: #{hypergraph_conv.1} parent=0 // loop_header_branch
    %19 = sbr.rel (%p17) target = $region8
  $region5: #{hypergraph_conv.1} parent=0 // loop_body
    %s21 = ssub.s32 %s16, 1
    %s22 = ssub.s32 %s16, 2
    %s23 = sadd.s32 %s16, 1
    %s24 = ssub.s32 %s16, %s23
    %p25 = scmp.eq.s32.totalorder %s24, 0
    %s27 = sadd.s32 %s26, 1
    %s28 = scalar_select %p25, %s26, %s27
    %p31 = pneg %p25
    %p32 = scmp.eq.s32.totalorder %s16, 1
    %p33 = por %p31, %p32
    %p34 = scmp.ne.s32.totalorder %s26, %s29
    %p35 = scmp.eq.s32.totalorder %s16, 0
    %p36 = por %p34, %p35
    %p37 = scmp.ne.s32.totalorder %s26, %s29
    %p38 = scmp.eq.s32.totalorder %s21, 1
    %p39 = por %p37, %p38
    %p40 = scmp.ne.s32.totalorder %s29, %s30
    %p41 = scmp.eq.s32.totalorder %s21, 0
    %p42 = por %p40, %p41
    %p43 = scmp.ne.s32.totalorder %s29, %s30
    %p44 = scmp.eq.s32.totalorder %s22, 1
    %p45 = por %p43, %p44
    %p47 = scmp.ne.s32.totalorder %s30, %s46
    %p48 = scmp.eq.s32.totalorder %s22, 0
    %p49 = por %p47, %p48
    %s51 = sadd.s32 %s50, 1
    %p54 = scmp.eq.s32.totalorder %s16, 1
    %p55 = scmp.ne.s32.totalorder %s50, %s52
    %p56 = scmp.eq.s32.totalorder %s16, 0
    %p57 = por %p55, %p56
    %p58 = scmp.ne.s32.totalorder %s50, %s52
    %p59 = scmp.eq.s32.totalorder %s21, 1
    %p60 = por %p58, %p59
    %p61 = scmp.ne.s32.totalorder %s52, %s53
    %p62 = scmp.eq.s32.totalorder %s21, 0
    %p63 = por %p61, %p62
    %p64 = scmp.ne.s32.totalorder %s52, %s53
    %p65 = scmp.eq.s32.totalorder %s22, 1
    %p66 = por %p64, %p65
    %p68 = scmp.ne.s32.totalorder %s53, %s67
    %p69 = scmp.eq.s32.totalorder %s22, 0
    %p70 = por %p68, %p69
    %s72 = sadd.s32 %s71, 1
    %p75 = scmp.eq.s32.totalorder %s16, 1
    %p76 = scmp.ne.s32.totalorder %s71, %s73
    %p77 = scmp.eq.s32.totalorder %s16, 0
    %p78 = por %p76, %p77
    %p79 = scmp.ne.s32.totalorder %s71, %s73
    %p80 = scmp.eq.s32.totalorder %s21, 1
    %p81 = por %p79, %p80
    %p82 = scmp.ne.s32.totalorder %s73, %s74
    %p83 = scmp.eq.s32.totalorder %s21, 0
    %p84 = por %p82, %p83
    %p85 = scmp.ne.s32.totalorder %s73, %s74
    %p86 = scmp.eq.s32.totalorder %s22, 1
    %p87 = por %p85, %p86
    %p89 = scmp.ne.s32.totalorder %s74, %s88
    %p90 = scmp.eq.s32.totalorder %s22, 0
    %p91 = por %p89, %p90
    %s93 = sadd.s32 %s92, 1
    %p96 = scmp.eq.s32.totalorder %s16, 1
    %p97 = scmp.ne.s32.totalorder %s92, %s94
    %p98 = scmp.eq.s32.totalorder %s16, 0
    %p99 = por %p97, %p98
    %p100 = scmp.ne.s32.totalorder %s92, %s94
    %p101 = scmp.eq.s32.totalorder %s21, 1
    %p102 = por %p100, %p101
    %p103 = scmp.ne.s32.totalorder %s94, %s95
    %p104 = scmp.eq.s32.totalorder %s21, 0
    %p105 = por %p103, %p104
    %p106 = scmp.ne.s32.totalorder %s94, %s95
    %p107 = scmp.eq.s32.totalorder %s22, 1
    %p108 = por %p106, %p107
    %p110 = scmp.ne.s32.totalorder %s95, %s109
    %p111 = scmp.eq.s32.totalorder %s22, 0
    %p112 = por %p110, %p111
    %s114 = sadd.s32 %s113, 1
    %p117 = scmp.eq.s32.totalorder %s16, 1
    %p118 = scmp.ne.s32.totalorder %s113, %s115
    %p119 = scmp.eq.s32.totalorder %s16, 0
    %p120 = por %p118, %p119
    %p121 = scmp.ne.s32.totalorder %s113, %s115
    %p122 = scmp.eq.s32.totalorder %s21, 1
    %p123 = por %p121, %p122
    %p124 = scmp.ne.s32.totalorder %s115, %s116
    %p125 = scmp.eq.s32.totalorder %s21, 0
    %p126 = por %p124, %p125
    %p127 = scmp.ne.s32.totalorder %s115, %s116
    %p128 = scmp.eq.s32.totalorder %s22, 1
    %p129 = por %p127, %p128
    %p131 = scmp.ne.s32.totalorder %s116, %s130
    %p132 = scmp.eq.s32.totalorder %s22, 0
    %p133 = por %p131, %p132
    %s135 = sadd.s32 %s134, 1
    %p138 = scmp.eq.s32.totalorder %s16, 1
    %p139 = scmp.ne.s32.totalorder %s134, %s136
    %p140 = scmp.eq.s32.totalorder %s16, 0
    %p141 = por %p139, %p140
    %p142 = scmp.ne.s32.totalorder %s134, %s136
    %p143 = scmp.eq.s32.totalorder %s21, 1
    %p144 = por %p142, %p143
    %p145 = scmp.ne.s32.totalorder %s136, %s137
    %p146 = scmp.eq.s32.totalorder %s21, 0
    %p147 = por %p145, %p146
    %p148 = scmp.ne.s32.totalorder %s136, %s137
    %p149 = scmp.eq.s32.totalorder %s22, 1
    %p150 = por %p148, %p149
    %p152 = scmp.ne.s32.totalorder %s137, %s151
    %p153 = scmp.eq.s32.totalorder %s22, 0
    %p154 = por %p152, %p153
    %s156 = sadd.s32 %s155, 1
    %p159 = scmp.eq.s32.totalorder %s16, 1
    %p160 = scmp.ne.s32.totalorder %s155, %s157
    %p161 = scmp.eq.s32.totalorder %s16, 0
    %p162 = por %p160, %p161
    %p163 = scmp.ne.s32.totalorder %s155, %s157
    %p164 = scmp.eq.s32.totalorder %s21, 1
    %p165 = por %p163, %p164
    %p166 = scmp.ne.s32.totalorder %s157, %s158
    %p167 = scmp.eq.s32.totalorder %s21, 0
    %p168 = por %p166, %p167
    %p169 = scmp.ne.s32.totalorder %s157, %s158
    %p170 = scmp.eq.s32.totalorder %s22, 1
    %p171 = por %p169, %p170
    %p173 = scmp.ne.s32.totalorder %s158, %s172
    %p174 = scmp.eq.s32.totalorder %s22, 0
    %p175 = por %p173, %p174
    %s177 = sadd.s32 %s176, 1
    %p180 = scmp.eq.s32.totalorder %s16, 1
    %p181 = scmp.ne.s32.totalorder %s176, %s178
    %p182 = scmp.eq.s32.totalorder %s16, 0
    %p183 = por %p181, %p182
    %p184 = scmp.ne.s32.totalorder %s176, %s178
    %p185 = scmp.eq.s32.totalorder %s21, 1
    %p186 = por %p184, %p185
    %p187 = scmp.ne.s32.totalorder %s178, %s179
    %p188 = scmp.eq.s32.totalorder %s21, 0
    %p189 = por %p187, %p188
    %p190 = scmp.ne.s32.totalorder %s178, %s179
    %p191 = scmp.eq.s32.totalorder %s22, 1
    %p192 = por %p190, %p191
    %p194 = scmp.ne.s32.totalorder %s179, %s193
    %p195 = scmp.eq.s32.totalorder %s22, 0
    %p196 = por %p194, %p195
    %s198 = sadd.s32 %s197, 1
    %p201 = scmp.eq.s32.totalorder %s16, 1
    %p202 = scmp.ne.s32.totalorder %s197, %s199
    %p203 = scmp.eq.s32.totalorder %s16, 0
    %p204 = por %p202, %p203
    %p205 = scmp.ne.s32.totalorder %s197, %s199
    %p206 = scmp.eq.s32.totalorder %s21, 1
    %p207 = por %p205, %p206
    %p208 = scmp.ne.s32.totalorder %s199, %s200
    %p209 = scmp.eq.s32.totalorder %s21, 0
    %p210 = por %p208, %p209
    %p211 = scmp.ne.s32.totalorder %s199, %s200
    %p212 = scmp.eq.s32.totalorder %s22, 1
    %p213 = por %p211, %p212
    %p215 = scmp.ne.s32.totalorder %s200, %s214
    %p216 = scmp.eq.s32.totalorder %s22, 0
    %p217 = por %p215, %p216
    %s219 = sadd.s32 %s218, 1
    %p222 = scmp.eq.s32.totalorder %s16, 1
    %p223 = scmp.ne.s32.totalorder %s218, %s220
    %p224 = scmp.eq.s32.totalorder %s16, 0
    %p225 = por %p223, %p224
    %p226 = scmp.ne.s32.totalorder %s218, %s220
    %p227 = scmp.eq.s32.totalorder %s21, 1
    %p228 = por %p226, %p227
    %p229 = scmp.ne.s32.totalorder %s220, %s221
    %p230 = scmp.eq.s32.totalorder %s21, 0
    %p231 = por %p229, %p230
    %p232 = scmp.ne.s32.totalorder %s220, %s221
    %p233 = scmp.eq.s32.totalorder %s22, 1
    %p234 = por %p232, %p233
    %p236 = scmp.ne.s32.totalorder %s221, %s235
    %p237 = scmp.eq.s32.totalorder %s22, 0
    %p238 = por %p236, %p237
    %s239 = ssub.s32 %s16, %s23
    %p240 = scmp.eq.s32.totalorder %s239, 0
    %s242 = sadd.s32 %s241, 1
    %s243 = scalar_select %p240, %s241, %s242
    %p246 = pneg %p240
    %p247 = scmp.eq.s32.totalorder %s16, 1
    %p248 = por %p246, %p247
    %p249 = scmp.ne.s32.totalorder %s241, %s244
    %p250 = scmp.eq.s32.totalorder %s16, 0
    %p251 = por %p249, %p250
    %p252 = scmp.ne.s32.totalorder %s241, %s244
    %p253 = scmp.eq.s32.totalorder %s21, 1
    %p254 = por %p252, %p253
    %p255 = scmp.ne.s32.totalorder %s244, %s245
    %p256 = scmp.eq.s32.totalorder %s21, 0
    %p257 = por %p255, %p256
    %p258 = scmp.ne.s32.totalorder %s244, %s245
    %p259 = scmp.eq.s32.totalorder %s22, 1
    %p260 = por %p258, %p259
    %p262 = scmp.ne.s32.totalorder %s245, %s261
    %p263 = scmp.eq.s32.totalorder %s22, 0
    %p264 = por %p262, %p263
    %p265 = scmp.le.s32.totalorder 1, %s16
    %p266 = scmp.lt.s32.totalorder %s16, 3
    %p267 = pnand %p265, %p266
    %p268 = pneg %p267
    // Predicated region
    $region9: #{hypergraph_conv.1} parent=5 // pred_check
      _
    $region10: #{hypergraph_conv.1} parent=5 // pred_check_branch
      %270 = sbr.rel (%p267) target = $region12
    $region11: #{hypergraph_conv.1} parent=5 // pred_region
      %s271 = ssub.s32 %s16, 1
      // Predicated region
      $region13: #{hypergraph_conv.1} parent=11 // pred_check
        %p272 = pneg %p63
      $region14: #{hypergraph_conv.1} parent=11 // pred_check_branch
        %274 = sbr.rel (%p272) target = $region16
      $region15: #{hypergraph_conv.1} parent=11 // pred_region
        _
      $region16: #{hypergraph_conv.1} parent=11 // pred_fallthru
        _
      // Predicated region
      $region17: #{hypergraph_conv.1} parent=11 // pred_check
        %p275 = pneg %p84
      $region18: #{hypergraph_conv.1} parent=11 // pred_check_branch
        %277 = sbr.rel (%p275) target = $region20
      $region19: #{hypergraph_conv.1} parent=11 // pred_region
        _
      $region20: #{hypergraph_conv.1} parent=11 // pred_fallthru
        _
      // Predicated region
      $region21: #{hypergraph_conv.1} parent=11 // pred_check
        %p278 = pneg %p105
      $region22: #{hypergraph_conv.1} parent=11 // pred_check_branch
        %280 = sbr.rel (%p278) target = $region24
      $region23: #{hypergraph_conv.1} parent=11 // pred_region
        _
      $region24: #{hypergraph_conv.1} parent=11 // pred_fallthru
        _
      // Predicated region
      $region25: #{hypergraph_conv.1} parent=11 // pred_check
        %p281 = pneg %p126
      $region26: #{hypergraph_conv.1} parent=11 // pred_check_branch
        %283 = sbr.rel (%p281) target = $region28
      $region27: #{hypergraph_conv.1} parent=11 // pred_region
        _
      $region28: #{hypergraph_conv.1} parent=11 // pred_fallthru
        _
      // Predicated region
      $region29: #{hypergraph_conv.1} parent=11 // pred_check
        %p284 = pneg %p147
      $region30: #{hypergraph_conv.1} parent=11 // pred_check_branch
        %286 = sbr.rel (%p284) target = $region32
      $region31: #{hypergraph_conv.1} parent=11 // pred_region
        _
      $region32: #{hypergraph_conv.1} parent=11 // pred_fallthru
        _
      // Predicated region
      $region33: #{hypergraph_conv.1} parent=11 // pred_check
        %p287 = pneg %p168
      $region34: #{hypergraph_conv.1} parent=11 // pred_check_branch
        %289 = sbr.rel (%p287) target = $region36
      $region35: #{hypergraph_conv.1} parent=11 // pred_region
        _
      $region36: #{hypergraph_conv.1} parent=11 // pred_fallthru
        _
      // Predicated region
      $region37: #{hypergraph_conv.1} parent=11 // pred_check
        %p290 = pneg %p189
      $region38: #{hypergraph_conv.1} parent=11 // pred_check_branch
        %292 = sbr.rel (%p290) target = $region40
      $region39: #{hypergraph_conv.1} parent=11 // pred_region
        _
      $region40: #{hypergraph_conv.1} parent=11 // pred_fallthru
        _
      // Predicated region
      $region41: #{hypergraph_conv.1} parent=11 // pred_check
        %p293 = pneg %p210
      $region42: #{hypergraph_conv.1} parent=11 // pred_check_branch
        %295 = sbr.rel (%p293) target = $region44
      $region43: #{hypergraph_conv.1} parent=11 // pred_region
        _
      $region44: #{hypergraph_conv.1} parent=11 // pred_fallthru
        _
      // Predicated region
      $region45: #{hypergraph_conv.1} parent=11 // pred_check
        %p296 = pneg %p231
      $region46: #{hypergraph_conv.1} parent=11 // pred_check_branch
        %298 = sbr.rel (%p296) target = $region48
      $region47: #{hypergraph_conv.1} parent=11 // pred_region
        _
      $region48: #{hypergraph_conv.1} parent=11 // pred_fallthru
        _
    $region12: #{hypergraph_conv.1} parent=5 // pred_fallthru
      _
    %p299 = scmp.lt.s32.totalorder %s16, 2
    // Predicated region
    $region49: #{hypergraph_conv.1} parent=5 // pred_check
      %p300 = pneg %p299
    $region50: #{hypergraph_conv.1} parent=5 // pred_check_branch
      %302 = sbr.rel (%p300) target = $region52
    $region51: #{hypergraph_conv.1} parent=5 // pred_region
      // Predicated region
      $region53: #{hypergraph_conv.1} parent=51 // pred_check
        %p303 = pneg %p36
      $region54: #{hypergraph_conv.1} parent=51 // pred_check_branch
        %305 = sbr.rel (%p303) target = $region56
      $region55: #{hypergraph_conv.1} parent=51 // pred_region
        %p306 = scmp.lt.s32.totalorder %s16, 1
        %s307 = scalar_select %p306, %s16, 1
        %s308 = smul.addr %s307, 4
        %s309 = smul.addr %s308, 4
        %s310 = scalar_lea.vmem %s0, %s309
      $region56: #{hypergraph_conv.1} parent=51 // pred_fallthru
        _
    $region52: #{hypergraph_conv.1} parent=5 // pred_fallthru
      _
    %p311 = scmp.le.s32.totalorder 1, %s16
    %p312 = scmp.lt.s32.totalorder %s16, 3
    %p313 = pnand %p311, %p312
    %p314 = pneg %p313
    // Predicated region
    $region57: #{hypergraph_conv.1} parent=5 // pred_check
      _
    $region58: #{hypergraph_conv.1} parent=5 // pred_check_branch
      %316 = sbr.rel (%p313) target = $region60
    $region59: #{hypergraph_conv.1} parent=5 // pred_region
      %s317 = ssub.s32 %s16, 1
      %p318 = scmp.lt.s32.totalorder %s21, 1
      %s319 = scalar_select %p318, %s21, 1
      %s320 = smul.addr %s319, 4
      %s321 = smul.addr %s320, 4
      %s322 = scalar_lea.vmem %s0, %s321
      %p323 = pneg %p42
      %p324 = pneg %p39
      %p325 = pneg %p63
      %p326 = pneg %p60
      %p327 = pneg %p84
      %p328 = pneg %p81
      %p329 = pneg %p105
      %p330 = pneg %p102
      %p331 = pneg %p126
      %p332 = pneg %p123
      %p333 = pneg %p147
      %p334 = pneg %p144
      %p335 = pneg %p168
      %p336 = pneg %p165
      %p337 = pneg %p189
      %p338 = pneg %p186
      %p339 = pneg %p210
      %p340 = pneg %p207
      %p341 = pneg %p231
      %p342 = pneg %p228
      %p343 = pneg %p257
      %p344 = pneg %p254
      %p345 = scmp.lt.s32.totalorder %s21, 1
      %s346 = scalar_select %p345, %s21, 1
      %s347 = smul.addr %s346, 2
      %s348 = smul.addr %s347, 8
      %s349 = scalar_lea.vmem %s10, %s348
      %p350 = scmp.lt.s32.totalorder %s21, 1
      %s351 = scalar_select %p350, %s21, 1
      %s352 = smul.addr %s351, 4
      %s353 = smul.addr %s352, 4
      %s354 = scalar_lea.vmem %s0, %s353
      %p355 = scmp.lt.s32.totalorder %s21, 1
      %s356 = scalar_select %p355, %s21, 1
      %s357 = smul.addr %s356, 2
      %s358 = smul.addr %s357, 8
      %s359 = scalar_lea.vmem %s10, %s358
      %v360 = vld [vmem:[%s354] sm:$0xff]
      %v361 = vld [vmem:[%s354 + $0x8] sm:$0xff]
      %v362 = vld [vmem:[%s2] sm:$0xff]
      %v363 = vld [vmem:[%s2 + $0x8] sm:$0xff]
      %v364 = vld [vmem:[%s2 + $0x10] sm:$0xff]
      %v365 = vld [vmem:[%s2 + $0x18] sm:$0xff]
      %v366 = vld [vmem:[%s2 + $0x20] sm:$0xff]
      %v367 = vld [vmem:[%s2 + $0x28] sm:$0xff]
      %v368 = vld [vmem:[%s2 + $0x30] sm:$0xff]
      %v369 = vld [vmem:[%s2 + $0x38] sm:$0xff]
      %v370 = vld [vmem:[%s4] sm:$0xff]
      %v371 = vld [vmem:[%s4 + $0x8] sm:$0xff]
      %v372 = vld [vmem:[%s4 + $0x10] sm:$0xff]
      %v373 = vld [vmem:[%s4 + $0x18] sm:$0xff]
      %v374 = vld [vmem:[%s4 + $0x20] sm:$0xff]
      %v375 = vld [vmem:[%s4 + $0x28] sm:$0xff]
      %v376 = vld [vmem:[%s4 + $0x30] sm:$0xff]
      %v377 = vld [vmem:[%s4 + $0x38] sm:$0xff]
      %379 = vset.pattern.permute.xlu0 0
      %380 = vperm.xlu0 %379, %v370
      %v381 = vpop.permute.xlu0 %380
      %384 = vset.pattern.permute.xlu0 0
      %385 = vperm.xlu0 %384, %v371
      %v386 = vpop.permute.xlu0 %385
      %389 = vset.pattern.permute.xlu0 0
      %390 = vperm.xlu0 %389, %v372
      %v391 = vpop.permute.xlu0 %390
      %394 = vset.pattern.permute.xlu0 0
      %395 = vperm.xlu0 %394, %v373
      %v396 = vpop.permute.xlu0 %395
      %399 = vset.pattern.permute.xlu0 0
      %400 = vperm.xlu0 %399, %v374
      %v401 = vpop.permute.xlu0 %400
      %404 = vset.pattern.permute.xlu0 0
      %405 = vperm.xlu0 %404, %v375
      %v406 = vpop.permute.xlu0 %405
      %409 = vset.pattern.permute.xlu0 0
      %410 = vperm.xlu0 %409, %v376
      %v411 = vpop.permute.xlu0 %410
      %414 = vset.pattern.permute.xlu0 0
      %415 = vperm.xlu0 %414, %v377
      %v416 = vpop.permute.xlu0 %415
      %v420 = vcombine.high %v360, %v360
      %vm421 = vcmask 31744
      %v423 = vsel %vm421, %v362, 0
      %v426 = vsel %vm421, %v363, 0
      %v429 = vsel %vm421, %v364, 0
      %v432 = vsel %vm421, %v365, 0
      %v435 = vsel %vm421, %v366, 0
      %v438 = vsel %vm421, %v367, 0
      %v441 = vsel %vm421, %v368, 0
      %v444 = vsel %vm421, %v369, 0
      %vm446 = vcmask 1043456
      %v447 = vsel %vm446, %v420, 0
      %v449 = vsel %vm446, %v361, 0
      %451 = vmatprep.subr.mxu0 0.0
      %452 = vmatpush1.msra.mxu0 0.0
      %453 = vmatprep.subr.mxu0 0.0
      %454 = vmatpush1.msra.mxu0 0.0
      %455 = vmatprep.subr.mxu0 0.0
      %456 = vmatpush1.msra.mxu0 0.0
      %457 = vmatprep.subr.mxu0 0.0
      %458 = vmatpush1.msra.mxu0 0.0
      %459 = vmatprep.subr.mxu0 0.0
      %460 = vmatpush1.msra.mxu0 0.0
      %461 = vmatprep.subr.mxu0 0.0
      %462 = vmatpush1.msra.mxu0 0.0
      %463 = vmatprep.subr.mxu0 0.0
      %464 = vmatpush1.msra.mxu0 0.0
      %465 = vmatprep.subr.mxu0 0.0
      %466 = vmatpush1.msra.mxu0 0.0
      %467 = vmatprep.subr.mxu0 0.0
      %468 = vmatpush1.msra.mxu0 0.0
      %469 = vmatprep.subr.mxu0 0.0
      %470 = vmatpush1.msra.mxu0 0.0
      %471 = vmatprep.subr.mxu0 0.0
      %472 = vmatpush1.msra.mxu0 0.0
      %473 = vmatprep.subr.mxu0 0.0
      %474 = vmatpush1.msra.mxu0 0.0
      %475 = vmatprep.subr.mxu0 0.0
      %476 = vmatpush1.msra.mxu0 0.0
      %477 = vmatprep.subr.mxu0 0.0
      %478 = vmatpush1.msra.mxu0 0.0
      %479 = vmatprep.subr.mxu0 0.0
      %480 = vmatpush1.msra.mxu0 0.0
      %481 = vmatprep.subr.mxu0 %v449
      %482 = vmatpush1.msra.mxu0 %v447
      %483 = vmatprep.subr.mxu0 0.0
      %484 = vmatpush2.msra.mxu0 0.0
      %485 = vmatprep.subr.mxu0 0.0
      %486 = vmatpush2.msra.mxu0 0.0
      %487 = vmatprep.subr.mxu0 0.0
      %488 = vmatpush2.msra.mxu0 0.0
      %489 = vmatprep.subr.mxu0 0.0
      %490 = vmatpush2.msra.mxu0 0.0
      %491 = vmatprep.subr.mxu0 0.0
      %492 = vmatpush2.msra.mxu0 0.0
      %493 = vmatprep.subr.mxu0 0.0
      %494 = vmatpush2.msra.mxu0 0.0
      %495 = vmatprep.subr.mxu0 0.0
      %496 = vmatpush2.msra.mxu0 0.0
      %497 = vmatprep.subr.mxu0 0.0
      %498 = vmatpush2.msra.mxu0 0.0
      %499 = vmatprep.subr.mxu0 0.0
      %500 = vmatpush2.msra.mxu0 0.0
      %501 = vmatprep.subr.mxu0 0.0
      %502 = vmatpush2.msra.mxu0 0.0
      %503 = vmatprep.subr.mxu0 0.0
      %504 = vmatpush2.msra.mxu0 0.0
      %505 = vmatprep.subr.mxu0 0.0
      %506 = vmatpush2.msra.mxu0 0.0
      %507 = vmatprep.subr.mxu0 0.0
      %508 = vmatpush2.msra.mxu0 0.0
      %509 = vmatprep.subr.mxu0 0.0
      %510 = vmatpush2.msra.mxu0 0.0
      %511 = vmatprep.subr.mxu0 0.0
      %512 = vmatpush2.msra.mxu0 0.0
      %513 = vmatprep.subr.mxu0 0.0
      %514 = vmatpush2.msra.mxu0 0.0
      %515 = vmatprep.mubr.f32.mxu0 0.0
      %516 = vmatmul.mubr.f32.gmra.mxu0 %v423
      %v517 = vpop.f32.mrf.mxu0
      %v518 = vadd.f32 %v381, %v517
      %v519 = vpop.f32.mrf.mxu0
      %v520 = vadd.f32 %v381, %v519
      %521 = vmatprep.mubr.f32.mxu0 0.0
      %522 = vmatmul.mubr.f32.gmra.mxu0 %v426
      %v523 = vpop.f32.mrf.mxu0
      %v524 = vadd.f32 %v386, %v523
      %v525 = vpop.f32.mrf.mxu0
      %v526 = vadd.f32 %v386, %v525
      %527 = vmatprep.mubr.f32.mxu0 0.0
      %528 = vmatmul.mubr.f32.gmra.mxu0 %v429
      %v529 = vpop.f32.mrf.mxu0
      %v530 = vadd.f32 %v391, %v529
      %v531 = vpop.f32.mrf.mxu0
      %v532 = vadd.f32 %v391, %v531
      %533 = vmatprep.mubr.f32.mxu0 0.0
      %534 = vmatmul.mubr.f32.gmra.mxu0 %v432
      %v535 = vpop.f32.mrf.mxu0
      %v536 = vadd.f32 %v396, %v535
      %v537 = vpop.f32.mrf.mxu0
      %v538 = vadd.f32 %v396, %v537
      %539 = vmatprep.mubr.f32.mxu0 0.0
      %540 = vmatmul.mubr.f32.gmra.mxu0 %v435
      %v541 = vpop.f32.mrf.mxu0
      %v542 = vadd.f32 %v401, %v541
      %v543 = vpop.f32.mrf.mxu0
      %v544 = vadd.f32 %v401, %v543
      %545 = vmatprep.mubr.f32.mxu0 0.0
      %546 = vmatmul.mubr.f32.gmra.mxu0 %v438
      %v547 = vpop.f32.mrf.mxu0
      %v548 = vadd.f32 %v406, %v547
      %v549 = vpop.f32.mrf.mxu0
      %v550 = vadd.f32 %v406, %v549
      %551 = vmatprep.mubr.f32.mxu0 0.0
      %552 = vmatmul.mubr.f32.gmra.mxu0 %v441
      %v553 = vpop.f32.mrf.mxu0
      %v554 = vadd.f32 %v411, %v553
      %v555 = vpop.f32.mrf.mxu0
      %v556 = vadd.f32 %v411, %v555
      %557 = vmatprep.mubr.f32.mxu0 0.0
      %558 = vmatmul.mubr.f32.gmra.mxu0 %v444
      %v559 = vpop.f32.mrf.mxu0
      %v560 = vadd.f32 %v416, %v559
      %v561 = vpop.f32.mrf.mxu0
      %v562 = vadd.f32 %v416, %v561
      %563 = vdwg.mxu0
      %v565 = vsel %vm446, %v420, 0.0
      %v566 = vsel %vm446, %v361, 0.0
      %v567 = vadd.f32 %v565, %v566
      %568 = vadd.xlane.f32.xlu0 %v567
      %v569 = vpop.xlane.xlu0 %568
      %v570 = vrcp.pop 256.0
      %v571 = vmul.f32 %v569, %v570
      %v572 = vld [vmem:[%s3] sm:$0xff]
      %v573 = vld [vmem:[%s3 + $0x8] sm:$0xff]
      %v574 = vld [vmem:[%s3 + $0x10] sm:$0xff]
      %v575 = vld [vmem:[%s3 + $0x18] sm:$0xff]
      %v576 = vld [vmem:[%s3 + $0x20] sm:$0xff]
      %v577 = vld [vmem:[%s3 + $0x28] sm:$0xff]
      %v578 = vld [vmem:[%s3 + $0x30] sm:$0xff]
      %v579 = vld [vmem:[%s3 + $0x38] sm:$0xff]
      %v580 = vld [vmem:[%s5] sm:$0xff]
      %v581 = vld [vmem:[%s5 + $0x8] sm:$0xff]
      %v582 = vld [vmem:[%s5 + $0x10] sm:$0xff]
      %v583 = vld [vmem:[%s5 + $0x18] sm:$0xff]
      %v584 = vld [vmem:[%s5 + $0x20] sm:$0xff]
      %v585 = vld [vmem:[%s5 + $0x28] sm:$0xff]
      %v586 = vld [vmem:[%s5 + $0x30] sm:$0xff]
      %v587 = vld [vmem:[%s5 + $0x38] sm:$0xff]
      %v589 = vsel %vm421, %v572, 0
      %v592 = vsel %vm421, %v573, 0
      %v595 = vsel %vm421, %v574, 0
      %v598 = vsel %vm421, %v575, 0
      %v601 = vsel %vm421, %v576, 0
      %v604 = vsel %vm421, %v577, 0
      %v607 = vsel %vm421, %v578, 0
      %v610 = vsel %vm421, %v579, 0
      %v613 = vsel %vm446, %v571, 0
      %615 = vmatprep.subr.mxu0 0.0
      %616 = vmatpush1.msra.mxu0 0.0
      %617 = vmatprep.subr.mxu0 0.0
      %618 = vmatpush1.msra.mxu0 0.0
      %619 = vmatprep.subr.mxu0 0.0
      %620 = vmatpush1.msra.mxu0 0.0
      %621 = vmatprep.subr.mxu0 0.0
      %622 = vmatpush1.msra.mxu0 0.0
      %623 = vmatprep.subr.mxu0 0.0
      %624 = vmatpush1.msra.mxu0 0.0
      %625 = vmatprep.subr.mxu0 0.0
      %626 = vmatpush1.msra.mxu0 0.0
      %627 = vmatprep.subr.mxu0 0.0
      %628 = vmatpush1.msra.mxu0 0.0
      %629 = vmatprep.subr.mxu0 0.0
      %630 = vmatpush1.msra.mxu0 0.0
      %631 = vmatprep.subr.mxu0 0.0
      %632 = vmatpush1.msra.mxu0 0.0
      %633 = vmatprep.subr.mxu0 0.0
      %634 = vmatpush1.msra.mxu0 0.0
      %635 = vmatprep.subr.mxu0 0.0
      %636 = vmatpush1.msra.mxu0 0.0
      %637 = vmatprep.subr.mxu0 0.0
      %638 = vmatpush1.msra.mxu0 0.0
      %639 = vmatprep.subr.mxu0 0.0
      %640 = vmatpush1.msra.mxu0 0.0
      %641 = vmatprep.subr.mxu0 0.0
      %642 = vmatpush1.msra.mxu0 0.0
      %643 = vmatprep.subr.mxu0 0.0
      %644 = vmatpush1.msra.mxu0 0.0
      %645 = vmatprep.subr.mxu0 0.0
      %646 = vmatpush1.msra.mxu0 %v613
      %647 = vmatprep.subr.mxu0 0.0
      %648 = vmatpush2.msra.mxu0 0.0
      %649 = vmatprep.subr.mxu0 0.0
      %650 = vmatpush2.msra.mxu0 0.0
      %651 = vmatprep.subr.mxu0 0.0
      %652 = vmatpush2.msra.mxu0 0.0
      %653 = vmatprep.subr.mxu0 0.0
      %654 = vmatpush2.msra.mxu0 0.0
      %655 = vmatprep.subr.mxu0 0.0
      %656 = vmatpush2.msra.mxu0 0.0
      %657 = vmatprep.subr.mxu0 0.0
      %658 = vmatpush2.msra.mxu0 0.0
      %659 = vmatprep.subr.mxu0 0.0
      %660 = vmatpush2.msra.mxu0 0.0
      %661 = vmatprep.subr.mxu0 0.0
      %662 = vmatpush2.msra.mxu0 0.0
      %663 = vmatprep.subr.mxu0 0.0
      %664 = vmatpush2.msra.mxu0 0.0
      %665 = vmatprep.subr.mxu0 0.0
      %666 = vmatpush2.msra.mxu0 0.0
      %667 = vmatprep.subr.mxu0 0.0
      %668 = vmatpush2.msra.mxu0 0.0
      %669 = vmatprep.subr.mxu0 0.0
      %670 = vmatpush2.msra.mxu0 0.0
      %671 = vmatprep.subr.mxu0 0.0
      %672 = vmatpush2.msra.mxu0 0.0
      %673 = vmatprep.subr.mxu0 0.0
      %674 = vmatpush2.msra.mxu0 0.0
      %675 = vmatprep.subr.mxu0 0.0
      %676 = vmatpush2.msra.mxu0 0.0
      %677 = vmatprep.subr.mxu0 0.0
      %678 = vmatpush2.msra.mxu0 0.0
      %679 = vmatprep.mubr.f32.mxu0 0.0
      %680 = vmatmul.mubr.f32.gmra.mxu0 %v589
      %v681 = vpop.f32.mrf.mxu0
      %v682 = vadd.f32 %v580, %v681
      %v683 = vpop.f32.mrf.mxu0
      %684 = vmatprep.mubr.f32.mxu0 0.0
      %685 = vmatmul.mubr.f32.gmra.mxu0 %v592
      %v686 = vpop.f32.mrf.mxu0
      %v687 = vadd.f32 %v581, %v686
      %v688 = vpop.f32.mrf.mxu0
      %689 = vmatprep.mubr.f32.mxu0 0.0
      %690 = vmatmul.mubr.f32.gmra.mxu0 %v595
      %v691 = vpop.f32.mrf.mxu0
      %v692 = vadd.f32 %v582, %v691
      %v693 = vpop.f32.mrf.mxu0
      %694 = vmatprep.mubr.f32.mxu0 0.0
      %695 = vmatmul.mubr.f32.gmra.mxu0 %v598
      %v696 = vpop.f32.mrf.mxu0
      %v697 = vadd.f32 %v583, %v696
      %v698 = vpop.f32.mrf.mxu0
      %699 = vmatprep.mubr.f32.mxu0 0.0
      %700 = vmatmul.mubr.f32.gmra.mxu0 %v601
      %v701 = vpop.f32.mrf.mxu0
      %v702 = vadd.f32 %v584, %v701
      %v703 = vpop.f32.mrf.mxu0
      %704 = vmatprep.mubr.f32.mxu0 0.0
      %705 = vmatmul.mubr.f32.gmra.mxu0 %v604
      %v706 = vpop.f32.mrf.mxu0
      %v707 = vadd.f32 %v585, %v706
      %v708 = vpop.f32.mrf.mxu0
      %709 = vmatprep.mubr.f32.mxu0 0.0
      %710 = vmatmul.mubr.f32.gmra.mxu0 %v607
      %v711 = vpop.f32.mrf.mxu0
      %v712 = vadd.f32 %v586, %v711
      %v713 = vpop.f32.mrf.mxu0
      %714 = vmatprep.mubr.f32.mxu0 0.0
      %715 = vmatmul.mubr.f32.gmra.mxu0 %v610
      %v716 = vpop.f32.mrf.mxu0
      %v717 = vadd.f32 %v587, %v716
      %v718 = vpop.f32.mrf.mxu0
      %719 = vdwg.mxu0
      %720 = vst [vmem:[#allocation2 + $0x180] sm:$0xf0] 0.0
      %721 = vst [vmem:[#allocation2 + $0x188] sm:$0xf0] 0.0
      %v722 = vld [vmem:[%s1] ss:$8 sm:$0x3]
      %v724 = vlaneseq
      %v725 = vshrl.u32 %v724, 7
      %v726 = vsub.s32 0, %v725
      %v727 = vrot.slane %v722, %v726
      %v728 = vlaneseq
      %v729 = vshrl.u32 %v728, 7
      %v730 = vsub.s32 1, %v729
      %v731 = vrot.slane %v722, %v730
      %v732 = vcombine.low %v727, %v731
      %733 = vrot.lane.b32.xlu0 %v732, 77
      %v734 = vpop.permute.xlu0 %733
      %v735 = vrot.slane %v734, 4
      %vm736 = vcmask 629760
      %v737 = vsel %vm736, %v735, %v734
      %v740 = vmul.f32 %v360, %v737
      %v741 = vmul.f32 %v361, %v735
      %v744 = vcombine.high %v740, %v740
      %745 = vrot.lane.b32.xlu0 %v740, 51
      %v746 = vpop.permute.xlu0 %745
      %747 = vrot.lane.b32.xlu0 %v744, 51
      %v748 = vpop.permute.xlu0 %747
      %749 = vrot.lane.b32.xlu0 %v741, 51
      %v750 = vpop.permute.xlu0 %749
      %vm751 = vcmask 416768
      %v752 = vsel %vm751, %v746, %v748
      %v753 = vsel %vm751, %v748, %v750
      %756 = vst [vmem:[#allocation2] sm:$0xf] %v752
      %757 = vst [vmem:[#allocation2 + $0x8] sm:$0xf] %v753
      %s758 = scalar_lea.vmem %s1, 1
      %v759 = vld [vmem:[%s758] ss:$8 sm:$0x3]
      %v761 = vlaneseq
      %v762 = vshrl.u32 %v761, 7
      %v763 = vsub.s32 0, %v762
      %v764 = vrot.slane %v759, %v763
      %v765 = vlaneseq
      %v766 = vshrl.u32 %v765, 7
      %v767 = vsub.s32 1, %v766
      %v768 = vrot.slane %v759, %v767
      %v769 = vcombine.low %v764, %v768
      %770 = vrot.lane.b32.xlu0 %v769, 78
      %v771 = vpop.permute.xlu0 %770
      %v772 = vrot.slane %v771, 4
      %vm773 = vcmask 637952
      %v774 = vsel %vm773, %v772, %v771
      %v777 = vmul.f32 %v360, %v774
      %v778 = vmul.f32 %v361, %v772
      %v781 = vcombine.low %v777, %v777
      %v782 = vcombine.low %v778, %v778
      %783 = vrot.lane.b32.xlu0 %v781, 50
      %v784 = vpop.permute.xlu0 %783
      %785 = vrot.lane.b32.xlu0 %v777, 50
      %v786 = vpop.permute.xlu0 %785
      %787 = vrot.lane.b32.xlu0 %v782, 50
      %v788 = vpop.permute.xlu0 %787
      %vm789 = vcmask 408576
      %v790 = vsel %vm789, %v784, %v786
      %v791 = vsel %vm789, %v786, %v788
      %794 = vst [vmem:[#allocation2] sm:$0xf0] %v790
      %795 = vst [vmem:[#allocation2 + $0x8] sm:$0xf0] %v791
      %s796 = scalar_lea.vmem %s1, 2
      %v797 = vld [vmem:[%s796] ss:$8 sm:$0x3]
      %v799 = vlaneseq
      %v800 = vshrl.u32 %v799, 7
      %v801 = vsub.s32 0, %v800
      %v802 = vrot.slane %v797, %v801
      %v803 = vlaneseq
      %v804 = vshrl.u32 %v803, 7
      %v805 = vsub.s32 1, %v804
      %v806 = vrot.slane %v797, %v805
      %v807 = vcombine.low %v802, %v806
      %808 = vrot.lane.b32.xlu0 %v807, 79
      %v809 = vpop.permute.xlu0 %808
      %v810 = vrot.slane %v809, 4
      %vm811 = vcmask 646144
      %v812 = vsel %vm811, %v810, %v809
      %v815 = vmul.f32 %v360, %v812
      %v816 = vmul.f32 %v361, %v810
      %v819 = vcombine.high %v815, %v815
      %820 = vrot.lane.b32.xlu0 %v815, 49
      %v821 = vpop.permute.xlu0 %820
      %822 = vrot.lane.b32.xlu0 %v819, 49
      %v823 = vpop.permute.xlu0 %822
      %824 = vrot.lane.b32.xlu0 %v816, 49
      %v825 = vpop.permute.xlu0 %824
      %vm826 = vcmask 400384
      %v827 = vsel %vm826, %v821, %v823
      %v828 = vsel %vm826, %v823, %v825
      %831 = vst [vmem:[#allocation2 + $0x10] sm:$0xf] %v827
      %832 = vst [vmem:[#allocation2 + $0x18] sm:$0xf] %v828
      %v833 = vcombine.low %v360, %v360
      %v834 = vcombine.low %v361, %v361
      %835 = vrot.lane.b32.xlu0 %v833, 48
      %v836 = vpop.permute.xlu0 %835
      %837 = vrot.lane.b32.xlu0 %v360, 48
      %v838 = vpop.permute.xlu0 %837
      %839 = vrot.lane.b32.xlu0 %v834, 48
      %v840 = vpop.permute.xlu0 %839
      %vm841 = vcmask 392192
      %v842 = vsel %vm841, %v836, %v838
      %v843 = vsel %vm841, %v838, %v840
      %846 = vst [vmem:[#allocation2 + $0x10] sm:$0xf0] %v842
      %847 = vst [vmem:[#allocation2 + $0x18] sm:$0xf0] %v843
      %s848 = scalar_lea.vmem %s1, 4
      %v849 = vld [vmem:[%s848] ss:$8 sm:$0x3]
      %v851 = vlaneseq
      %v852 = vshrl.u32 %v851, 7
      %v853 = vsub.s32 0, %v852
      %v854 = vrot.slane %v849, %v853
      %v855 = vlaneseq
      %v856 = vshrl.u32 %v855, 7
      %v857 = vsub.s32 1, %v856
      %v858 = vrot.slane %v849, %v857
      %v859 = vcombine.low %v854, %v858
      %860 = vrot.lane.b32.xlu0 %v859, 81
      %v861 = vpop.permute.xlu0 %860
      %v862 = vrot.slane %v861, 4
      %vm863 = vcmask 662528
      %v864 = vsel %vm863, %v862, %v861
      %v867 = vmul.f32 %v360, %v864
      %v868 = vmul.f32 %v361, %v862
      %v871 = vcombine.high %v867, %v867
      %872 = vrot.lane.b32.xlu0 %v867, 47
      %v873 = vpop.permute.xlu0 %872
      %874 = vrot.lane.b32.xlu0 %v871, 47
      %v875 = vpop.permute.xlu0 %874
      %876 = vrot.lane.b32.xlu0 %v868, 47
      %v877 = vpop.permute.xlu0 %876
      %vm878 = vcmask 384000
      %v879 = vsel %vm878, %v873, %v875
      %v880 = vsel %vm878, %v875, %v877
      %883 = vst [vmem:[#allocation2 + $0x20] sm:$0xf] %v879
      %884 = vst [vmem:[#allocation2 + $0x28] sm:$0xf] %v880
      %s885 = scalar_lea.vmem %s1, 5
      %v886 = vld [vmem:[%s885] ss:$8 sm:$0x3]
      %v888 = vlaneseq
      %v889 = vshrl.u32 %v888, 7
      %v890 = vsub.s32 0, %v889
      %v891 = vrot.slane %v886, %v890
      %v892 = vlaneseq
      %v893 = vshrl.u32 %v892, 7
      %v894 = vsub.s32 1, %v893
      %v895 = vrot.slane %v886, %v894
      %v896 = vcombine.low %v891, %v895
      %897 = vrot.lane.b32.xlu0 %v896, 82
      %v898 = vpop.permute.xlu0 %897
      %v899 = vrot.slane %v898, 4
      %vm900 = vcmask 670720
      %v901 = vsel %vm900, %v899, %v898
      %v904 = vmul.f32 %v360, %v901
      %v905 = vmul.f32 %v361, %v899
      %v908 = vcombine.low %v904, %v904
      %v909 = vcombine.low %v905, %v905
      %910 = vrot.lane.b32.xlu0 %v908, 46
      %v911 = vpop.permute.xlu0 %910
      %912 = vrot.lane.b32.xlu0 %v904, 46
      %v913 = vpop.permute.xlu0 %912
      %914 = vrot.lane.b32.xlu0 %v909, 46
      %v915 = vpop.permute.xlu0 %914
      %vm916 = vcmask 375808
      %v917 = vsel %vm916, %v911, %v913
      %v918 = vsel %vm916, %v913, %v915
      %921 = vst [vmem:[#allocation2 + $0x20] sm:$0xf0] %v917
      %922 = vst [vmem:[#allocation2 + $0x28] sm:$0xf0] %v918
      %s923 = scalar_lea.vmem %s1, 6
      %v924 = vld [vmem:[%s923] ss:$8 sm:$0x3]
      %v926 = vlaneseq
      %v927 = vshrl.u32 %v926, 7
      %v928 = vsub.s32 0, %v927
      %v929 = vrot.slane %v924, %v928
      %v930 = vlaneseq
      %v931 = vshrl.u32 %v930, 7
      %v932 = vsub.s32 1, %v931
      %v933 = vrot.slane %v924, %v932
      %v934 = vcombine.low %v929, %v933
      %935 = vrot.lane.b32.xlu0 %v934, 83
      %v936 = vpop.permute.xlu0 %935
      %v937 = vrot.slane %v936, 4
      %vm938 = vcmask 678912
      %v939 = vsel %vm938, %v937, %v936
      %v942 = vmul.f32 %v360, %v939
      %v943 = vmul.f32 %v361, %v937
      %v946 = vcombine.high %v942, %v942
      %947 = vrot.lane.b32.xlu0 %v942, 45
      %v948 = vpop.permute.xlu0 %947
      %949 = vrot.lane.b32.xlu0 %v946, 45
      %v950 = vpop.permute.xlu0 %949
      %951 = vrot.lane.b32.xlu0 %v943, 45
      %v952 = vpop.permute.xlu0 %951
      %vm953 = vcmask 367616
      %v954 = vsel %vm953, %v948, %v950
      %v955 = vsel %vm953, %v950, %v952
      %958 = vst [vmem:[#allocation2 + $0x30] sm:$0xf] %v954
      %959 = vst [vmem:[#allocation2 + $0x38] sm:$0xf] %v955
      %s960 = scalar_lea.vmem %s1, 7
      %v961 = vld [vmem:[%s960] ss:$8 sm:$0x3]
      %v963 = vlaneseq
      %v964 = vshrl.u32 %v963, 7
      %v965 = vsub.s32 0, %v964
      %v966 = vrot.slane %v961, %v965
      %v967 = vlaneseq
      %v968 = vshrl.u32 %v967, 7
      %v969 = vsub.s32 1, %v968
      %v970 = vrot.slane %v961, %v969
      %v971 = vcombine.low %v966, %v970
      %972 = vrot.lane.b32.xlu0 %v971, 93
      %v973 = vpop.permute.xlu0 %972
      %v974 = vrot.slane %v973, 4
      %vm975 = vcmask 760832
      %v976 = vsel %vm975, %v974, %v973
      %v979 = vmul.f32 %v360, %v976
      %v980 = vmul.f32 %v361, %v974
      %v983 = vcombine.low %v979, %v979
      %v984 = vcombine.low %v980, %v980
      %985 = vrot.lane.b32.xlu0 %v983, 35
      %v986 = vpop.permute.xlu0 %985
      %987 = vrot.lane.b32.xlu0 %v979, 35
      %v988 = vpop.permute.xlu0 %987
      %989 = vrot.lane.b32.xlu0 %v984, 35
      %v990 = vpop.permute.xlu0 %989
      %vm991 = vcmask 285696
      %v992 = vsel %vm991, %v986, %v988
      %v993 = vsel %vm991, %v988, %v990
      %996 = vst [vmem:[#allocation2 + $0x30] sm:$0xf0] %v992
      %997 = vst [vmem:[#allocation2 + $0x38] sm:$0xf0] %v993
      %s998 = scalar_lea.vmem %s1, 16
      %v999 = vld [vmem:[%s998] ss:$8 sm:$0x3]
      %v1001 = vlaneseq
      %v1002 = vshrl.u32 %v1001, 7
      %v1003 = vsub.s32 0, %v1002
      %v1004 = vrot.slane %v999, %v1003
      %v1005 = vlaneseq
      %v1006 = vshrl.u32 %v1005, 7
      %v1007 = vsub.s32 1, %v1006
      %v1008 = vrot.slane %v999, %v1007
      %v1009 = vcombine.low %v1004, %v1008
      %1010 = vrot.lane.b32.xlu0 %v1009, 94
      %v1011 = vpop.permute.xlu0 %1010
      %v1012 = vrot.slane %v1011, 4
      %vm1013 = vcmask 769024
      %v1014 = vsel %vm1013, %v1012, %v1011
      %v1017 = vmul.f32 %v360, %v1014
      %v1018 = vmul.f32 %v361, %v1012
      %v1021 = vcombine.high %v1017, %v1017
      %1022 = vrot.lane.b32.xlu0 %v1017, 34
      %v1023 = vpop.permute.xlu0 %1022
      %1024 = vrot.lane.b32.xlu0 %v1021, 34
      %v1025 = vpop.permute.xlu0 %1024
      %1026 = vrot.lane.b32.xlu0 %v1018, 34
      %v1027 = vpop.permute.xlu0 %1026
      %vm1028 = vcmask 277504
      %v1029 = vsel %vm1028, %v1023, %v1025
      %v1030 = vsel %vm1028, %v1025, %v1027
      %1033 = vst [vmem:[#allocation2 + $0x40] sm:$0xf] %v1029
      %1034 = vst [vmem:[#allocation2 + $0x48] sm:$0xf] %v1030
      %s1035 = scalar_lea.vmem %s1, 17
      %v1036 = vld [vmem:[%s1035] ss:$8 sm:$0x3]
      %v1038 = vlaneseq
      %v1039 = vshrl.u32 %v1038, 7
      %v1040 = vsub.s32 0, %v1039
      %v1041 = vrot.slane %v1036, %v1040
      %v1042 = vlaneseq
      %v1043 = vshrl.u32 %v1042, 7
      %v1044 = vsub.s32 1, %v1043
      %v1045 = vrot.slane %v1036, %v1044
      %v1046 = vcombine.low %v1041, %v1045
      %1047 = vrot.lane.b32.xlu0 %v1046, 95
      %v1048 = vpop.permute.xlu0 %1047
      %v1049 = vrot.slane %v1048, 4
      %vm1050 = vcmask 777216
      %v1051 = vsel %vm1050, %v1049, %v1048
      %v1054 = vmul.f32 %v360, %v1051
      %v1055 = vmul.f32 %v361, %v1049
      %v1058 = vcombine.low %v1054, %v1054
      %v1059 = vcombine.low %v1055, %v1055
      %1060 = vrot.lane.b32.xlu0 %v1058, 33
      %v1061 = vpop.permute.xlu0 %1060
      %1062 = vrot.lane.b32.xlu0 %v1054, 33
      %v1063 = vpop.permute.xlu0 %1062
      %1064 = vrot.lane.b32.xlu0 %v1059, 33
      %v1065 = vpop.permute.xlu0 %1064
      %vm1066 = vcmask 269312
      %v1067 = vsel %vm1066, %v1061, %v1063
      %v1068 = vsel %vm1066, %v1063, %v1065
      %1071 = vst [vmem:[#allocation2 + $0x40] sm:$0xf0] %v1067
      %1072 = vst [vmem:[#allocation2 + $0x48] sm:$0xf0] %v1068
      %1073 = vrot.lane.b32.xlu0 %v360, 32
      %v1074 = vpop.permute.xlu0 %1073
      %1075 = vrot.lane.b32.xlu0 %v420, 32
      %v1076 = vpop.permute.xlu0 %1075
      %1077 = vrot.lane.b32.xlu0 %v361, 32
      %v1078 = vpop.permute.xlu0 %1077
      %vm1079 = vcmask 261120
      %v1080 = vsel %vm1079, %v1074, %v1076
      %v1081 = vsel %vm1079, %v1076, %v1078
      %1084 = vst [vmem:[#allocation2 + $0x50] sm:$0xf] %v1080
      %1085 = vst [vmem:[#allocation2 + $0x58] sm:$0xf] %v1081
      %s1086 = scalar_lea.vmem %s1, 19
      %v1087 = vld [vmem:[%s1086] ss:$8 sm:$0x3]
      %v1089 = vlaneseq
      %v1090 = vshrl.u32 %v1089, 7
      %v1091 = vsub.s32 0, %v1090
      %v1092 = vrot.slane %v1087, %v1091
      %v1093 = vlaneseq
      %v1094 = vshrl.u32 %v1093, 7
      %v1095 = vsub.s32 1, %v1094
      %v1096 = vrot.slane %v1087, %v1095
      %v1097 = vcombine.low %v1092, %v1096
      %1098 = vrot.lane.b32.xlu0 %v1097, 97
      %v1099 = vpop.permute.xlu0 %1098
      %v1100 = vrot.slane %v1099, 4
      %vm1101 = vcmask 793600
      %v1102 = vsel %vm1101, %v1100, %v1099
      %v1105 = vmul.f32 %v360, %v1102
      %v1106 = vmul.f32 %v361, %v1100
      %v1109 = vcombine.low %v1105, %v1105
      %v1110 = vcombine.low %v1106, %v1106
      %1111 = vrot.lane.b32.xlu0 %v1109, 31
      %v1112 = vpop.permute.xlu0 %1111
      %1113 = vrot.lane.b32.xlu0 %v1105, 31
      %v1114 = vpop.permute.xlu0 %1113
      %1115 = vrot.lane.b32.xlu0 %v1110, 31
      %v1116 = vpop.permute.xlu0 %1115
      %vm1117 = vcmask 252928
      %v1118 = vsel %vm1117, %v1112, %v1114
      %v1119 = vsel %vm1117, %v1114, %v1116
      %1122 = vst [vmem:[#allocation2 + $0x50] sm:$0xf0] %v1118
      %1123 = vst [vmem:[#allocation2 + $0x58] sm:$0xf0] %v1119
      %s1124 = scalar_lea.vmem %s1, 20
      %v1125 = vld [vmem:[%s1124] ss:$8 sm:$0x3]
      %v1127 = vlaneseq
      %v1128 = vshrl.u32 %v1127, 7
      %v1129 = vsub.s32 0, %v1128
      %v1130 = vrot.slane %v1125, %v1129
      %v1131 = vlaneseq
      %v1132 = vshrl.u32 %v1131, 7
      %v1133 = vsub.s32 1, %v1132
      %v1134 = vrot.slane %v1125, %v1133
      %v1135 = vcombine.low %v1130, %v1134
      %1136 = vrot.lane.b32.xlu0 %v1135, 98
      %v1137 = vpop.permute.xlu0 %1136
      %v1138 = vrot.slane %v1137, 4
      %vm1139 = vcmask 801792
      %v1140 = vsel %vm1139, %v1138, %v1137
      %v1143 = vmul.f32 %v360, %v1140
      %v1144 = vmul.f32 %v361, %v1138
      %v1147 = vcombine.high %v1143, %v1143
      %1148 = vrot.lane.b32.xlu0 %v1143, 30
      %v1149 = vpop.permute.xlu0 %1148
      %1150 = vrot.lane.b32.xlu0 %v1147, 30
      %v1151 = vpop.permute.xlu0 %1150
      %1152 = vrot.lane.b32.xlu0 %v1144, 30
      %v1153 = vpop.permute.xlu0 %1152
      %vm1154 = vcmask 244736
      %v1155 = vsel %vm1154, %v1149, %v1151
      %v1156 = vsel %vm1154, %v1151, %v1153
      %1159 = vst [vmem:[#allocation2 + $0x60] sm:$0xf] %v1155
      %1160 = vst [vmem:[#allocation2 + $0x68] sm:$0xf] %v1156
      %s1161 = scalar_lea.vmem %s1, 21
      %v1162 = vld [vmem:[%s1161] ss:$8 sm:$0x3]
      %v1164 = vlaneseq
      %v1165 = vshrl.u32 %v1164, 7
      %v1166 = vsub.s32 0, %v1165
      %v1167 = vrot.slane %v1162, %v1166
      %v1168 = vlaneseq
      %v1169 = vshrl.u32 %v1168, 7
      %v1170 = vsub.s32 1, %v1169
      %v1171 = vrot.slane %v1162, %v1170
      %v1172 = vcombine.low %v1167, %v1171
      %1173 = vrot.lane.b32.xlu0 %v1172, 99
      %v1174 = vpop.permute.xlu0 %1173
      %v1175 = vrot.slane %v1174, 4
      %vm1176 = vcmask 809984
      %v1177 = vsel %vm1176, %v1175, %v1174
      %v1180 = vmul.f32 %v360, %v1177
      %v1181 = vmul.f32 %v361, %v1175
      %v1184 = vcombine.low %v1180, %v1180
      %v1185 = vcombine.low %v1181, %v1181
      %1186 = vrot.lane.b32.xlu0 %v1184, 29
      %v1187 = vpop.permute.xlu0 %1186
      %1188 = vrot.lane.b32.xlu0 %v1180, 29
      %v1189 = vpop.permute.xlu0 %1188
      %1190 = vrot.lane.b32.xlu0 %v1185, 29
      %v1191 = vpop.permute.xlu0 %1190
      %vm1192 = vcmask 236544
      %v1193 = vsel %vm1192, %v1187, %v1189
      %v1194 = vsel %vm1192, %v1189, %v1191
      %1197 = vst [vmem:[#allocation2 + $0x60] sm:$0xf0] %v1193
      %1198 = vst [vmem:[#allocation2 + $0x68] sm:$0xf0] %v1194
      %s1199 = scalar_lea.vmem %s1, 22
      %v1200 = vld [vmem:[%s1199] ss:$8 sm:$0x3]
      %v1202 = vlaneseq
      %v1203 = vshrl.u32 %v1202, 7
      %v1204 = vsub.s32 0, %v1203
      %v1205 = vrot.slane %v1200, %v1204
      %v1206 = vlaneseq
      %v1207 = vshrl.u32 %v1206, 7
      %v1208 = vsub.s32 1, %v1207
      %v1209 = vrot.slane %v1200, %v1208
      %v1210 = vcombine.low %v1205, %v1209
      %1211 = vrot.lane.b32.xlu0 %v1210, 109
      %v1212 = vpop.permute.xlu0 %1211
      %v1213 = vrot.slane %v1212, 4
      %vm1214 = vcmask 891904
      %v1215 = vsel %vm1214, %v1213, %v1212
      %v1218 = vmul.f32 %v360, %v1215
      %v1219 = vmul.f32 %v361, %v1213
      %v1222 = vcombine.high %v1218, %v1218
      %1223 = vrot.lane.b32.xlu0 %v1218, 19
      %v1224 = vpop.permute.xlu0 %1223
      %1225 = vrot.lane.b32.xlu0 %v1222, 19
      %v1226 = vpop.permute.xlu0 %1225
      %1227 = vrot.lane.b32.xlu0 %v1219, 19
      %v1228 = vpop.permute.xlu0 %1227
      %vm1229 = vcmask 154624
      %v1230 = vsel %vm1229, %v1224, %v1226
      %v1231 = vsel %vm1229, %v1226, %v1228
      %1234 = vst [vmem:[#allocation2 + $0x70] sm:$0xf] %v1230
      %1235 = vst [vmem:[#allocation2 + $0x78] sm:$0xf] %v1231
      %s1236 = scalar_lea.vmem %s1, 23
      %v1237 = vld [vmem:[%s1236] ss:$8 sm:$0x3]
      %v1239 = vlaneseq
      %v1240 = vshrl.u32 %v1239, 7
      %v1241 = vsub.s32 0, %v1240
      %v1242 = vrot.slane %v1237, %v1241
      %v1243 = vlaneseq
      %v1244 = vshrl.u32 %v1243, 7
      %v1245 = vsub.s32 1, %v1244
      %v1246 = vrot.slane %v1237, %v1245
      %v1247 = vcombine.low %v1242, %v1246
      %1248 = vrot.lane.b32.xlu0 %v1247, 110
      %v1249 = vpop.permute.xlu0 %1248
      %v1250 = vrot.slane %v1249, 4
      %vm1251 = vcmask 900096
      %v1252 = vsel %vm1251, %v1250, %v1249
      %v1255 = vmul.f32 %v360, %v1252
      %v1256 = vmul.f32 %v361, %v1250
      %v1259 = vcombine.low %v1255, %v1255
      %v1260 = vcombine.low %v1256, %v1256
      %1261 = vrot.lane.b32.xlu0 %v1259, 18
      %v1262 = vpop.permute.xlu0 %1261
      %1263 = vrot.lane.b32.xlu0 %v1255, 18
      %v1264 = vpop.permute.xlu0 %1263
      %1265 = vrot.lane.b32.xlu0 %v1260, 18
      %v1266 = vpop.permute.xlu0 %1265
      %vm1267 = vcmask 146432
      %v1268 = vsel %vm1267, %v1262, %v1264
      %v1269 = vsel %vm1267, %v1264, %v1266
      %1272 = vst [vmem:[#allocation2 + $0x70] sm:$0xf0] %v1268
      %1273 = vst [vmem:[#allocation2 + $0x78] sm:$0xf0] %v1269
      %s1274 = scalar_lea.vmem %s1, 32
      %v1275 = vld [vmem:[%s1274] ss:$8 sm:$0x3]
      %v1277 = vlaneseq
      %v1278 = vshrl.u32 %v1277, 7
      %v1279 = vsub.s32 0, %v1278
      %v1280 = vrot.slane %v1275, %v1279
      %v1281 = vlaneseq
      %v1282 = vshrl.u32 %v1281, 7
      %v1283 = vsub.s32 1, %v1282
      %v1284 = vrot.slane %v1275, %v1283
      %v1285 = vcombine.low %v1280, %v1284
      %1286 = vrot.lane.b32.xlu0 %v1285, 111
      %v1287 = vpop.permute.xlu0 %1286
      %v1288 = vrot.slane %v1287, 4
      %vm1289 = vcmask 908288
      %v1290 = vsel %vm1289, %v1288, %v1287
      %v1293 = vmul.f32 %v360, %v1290
      %v1294 = vmul.f32 %v361, %v1288
      %v1297 = vcombine.high %v1293, %v1293
      %1298 = vrot.lane.b32.xlu0 %v1293, 17
      %v1299 = vpop.permute.xlu0 %1298
      %1300 = vrot.lane.b32.xlu0 %v1297, 17
      %v1301 = vpop.permute.xlu0 %1300
      %1302 = vrot.lane.b32.xlu0 %v1294, 17
      %v1303 = vpop.permute.xlu0 %1302
      %vm1304 = vcmask 138240
      %v1305 = vsel %vm1304, %v1299, %v1301
      %v1306 = vsel %vm1304, %v1301, %v1303
      %1309 = vst [vmem:[#allocation2 + $0x80] sm:$0xf] %v1305
      %1310 = vst [vmem:[#allocation2 + $0x88] sm:$0xf] %v1306
      %1311 = vrot.lane.b32.xlu0 %v833, 16
      %v1312 = vpop.permute.xlu0 %1311
      %1313 = vrot.lane.b32.xlu0 %v360, 16
      %v1314 = vpop.permute.xlu0 %1313
      %1315 = vrot.lane.b32.xlu0 %v834, 16
      %v1316 = vpop.permute.xlu0 %1315
      %vm1317 = vcmask 130048
      %v1318 = vsel %vm1317, %v1312, %v1314
      %v1319 = vsel %vm1317, %v1314, %v1316
      %1322 = vst [vmem:[#allocation2 + $0x80] sm:$0xf0] %v1318
      %1323 = vst [vmem:[#allocation2 + $0x88] sm:$0xf0] %v1319
      %s1324 = scalar_lea.vmem %s1, 34
      %v1325 = vld [vmem:[%s1324] ss:$8 sm:$0x3]
      %v1327 = vlaneseq
      %v1328 = vshrl.u32 %v1327, 7
      %v1329 = vsub.s32 0, %v1328
      %v1330 = vrot.slane %v1325, %v1329
      %v1331 = vlaneseq
      %v1332 = vshrl.u32 %v1331, 7
      %v1333 = vsub.s32 1, %v1332
      %v1334 = vrot.slane %v1325, %v1333
      %v1335 = vcombine.low %v1330, %v1334
      %1336 = vrot.lane.b32.xlu0 %v1335, 113
      %v1337 = vpop.permute.xlu0 %1336
      %v1338 = vrot.slane %v1337, 4
      %vm1339 = vcmask 924672
      %v1340 = vsel %vm1339, %v1338, %v1337
      %v1343 = vmul.f32 %v360, %v1340
      %v1344 = vmul.f32 %v361, %v1338
      %v1347 = vcombine.high %v1343, %v1343
      %1348 = vrot.lane.b32.xlu0 %v1343, 15
      %v1349 = vpop.permute.xlu0 %1348
      %1350 = vrot.lane.b32.xlu0 %v1347, 15
      %v1351 = vpop.permute.xlu0 %1350
      %1352 = vrot.lane.b32.xlu0 %v1344, 15
      %v1353 = vpop.permute.xlu0 %1352
      %vm1354 = vcmask 121856
      %v1355 = vsel %vm1354, %v1349, %v1351
      %v1356 = vsel %vm1354, %v1351, %v1353
      %1359 = vst [vmem:[#allocation2 + $0x90] sm:$0xf] %v1355
      %1360 = vst [vmem:[#allocation2 + $0x98] sm:$0xf] %v1356
      %s1361 = scalar_lea.vmem %s1, 35
      %v1362 = vld [vmem:[%s1361] ss:$8 sm:$0x3]
      %v1364 = vlaneseq
      %v1365 = vshrl.u32 %v1364, 7
      %v1366 = vsub.s32 0, %v1365
      %v1367 = vrot.slane %v1362, %v1366
      %v1368 = vlaneseq
      %v1369 = vshrl.u32 %v1368, 7
      %v1370 = vsub.s32 1, %v1369
      %v1371 = vrot.slane %v1362, %v1370
      %v1372 = vcombine.low %v1367, %v1371
      %1373 = vrot.lane.b32.xlu0 %v1372, 114
      %v1374 = vpop.permute.xlu0 %1373
      %v1375 = vrot.slane %v1374, 4
      %vm1376 = vcmask 932864
      %v1377 = vsel %vm1376, %v1375, %v1374
      %v1380 = vmul.f32 %v360, %v1377
      %v1381 = vmul.f32 %v361, %v1375
      %v1384 = vcombine.low %v1380, %v1380
      %v1385 = vcombine.low %v1381, %v1381
      %1386 = vrot.lane.b32.xlu0 %v1384, 14
      %v1387 = vpop.permute.xlu0 %1386
      %1388 = vrot.lane.b32.xlu0 %v1380, 14
      %v1389 = vpop.permute.xlu0 %1388
      %1390 = vrot.lane.b32.xlu0 %v1385, 14
      %v1391 = vpop.permute.xlu0 %1390
      %vm1392 = vcmask 113664
      %v1393 = vsel %vm1392, %v1387, %v1389
      %v1394 = vsel %vm1392, %v1389, %v1391
      %1397 = vst [vmem:[#allocation2 + $0x90] sm:$0xf0] %v1393
      %1398 = vst [vmem:[#allocation2 + $0x98] sm:$0xf0] %v1394
      %s1399 = scalar_lea.vmem %s1, 36
      %v1400 = vld [vmem:[%s1399] ss:$8 sm:$0x3]
      %v1402 = vlaneseq
      %v1403 = vshrl.u32 %v1402, 7
      %v1404 = vsub.s32 0, %v1403
      %v1405 = vrot.slane %v1400, %v1404
      %v1406 = vlaneseq
      %v1407 = vshrl.u32 %v1406, 7
      %v1408 = vsub.s32 1, %v1407
      %v1409 = vrot.slane %v1400, %v1408
      %v1410 = vcombine.low %v1405, %v1409
      %1411 = vrot.lane.b32.xlu0 %v1410, 115
      %v1412 = vpop.permute.xlu0 %1411
      %v1413 = vrot.slane %v1412, 4
      %vm1414 = vcmask 941056
      %v1415 = vsel %vm1414, %v1413, %v1412
      %v1418 = vmul.f32 %v360, %v1415
      %v1419 = vmul.f32 %v361, %v1413
      %v1422 = vcombine.high %v1418, %v1418
      %1423 = vrot.lane.b32.xlu0 %v1418, 13
      %v1424 = vpop.permute.xlu0 %1423
      %1425 = vrot.lane.b32.xlu0 %v1422, 13
      %v1426 = vpop.permute.xlu0 %1425
      %1427 = vrot.lane.b32.xlu0 %v1419, 13
      %v1428 = vpop.permute.xlu0 %1427
      %vm1429 = vcmask 105472
      %v1430 = vsel %vm1429, %v1424, %v1426
      %v1431 = vsel %vm1429, %v1426, %v1428
      %1434 = vst [vmem:[#allocation2 + $0xa0] sm:$0xf] %v1430
      %1435 = vst [vmem:[#allocation2 + $0xa8] sm:$0xf] %v1431
      %s1436 = scalar_lea.vmem %s1, 37
      %v1437 = vld [vmem:[%s1436] ss:$8 sm:$0x3]
      %v1439 = vlaneseq
      %v1440 = vshrl.u32 %v1439, 7
      %v1441 = vsub.s32 0, %v1440
      %v1442 = vrot.slane %v1437, %v1441
      %v1443 = vlaneseq
      %v1444 = vshrl.u32 %v1443, 7
      %v1445 = vsub.s32 1, %v1444
      %v1446 = vrot.slane %v1437, %v1445
      %v1447 = vcombine.low %v1442, %v1446
      %1448 = vrot.lane.b32.xlu0 %v1447, 125
      %v1449 = vpop.permute.xlu0 %1448
      %v1450 = vrot.slane %v1449, 4
      %vm1451 = vcmask 1022976
      %v1452 = vsel %vm1451, %v1450, %v1449
      %v1455 = vmul.f32 %v360, %v1452
      %v1456 = vmul.f32 %v361, %v1450
      %v1459 = vcombine.low %v1455, %v1455
      %v1460 = vcombine.low %v1456, %v1456
      %1461 = vrot.lane.b32.xlu0 %v1459, 3
      %v1462 = vpop.permute.xlu0 %1461
      %1463 = vrot.lane.b32.xlu0 %v1455, 3
      %v1464 = vpop.permute.xlu0 %1463
      %1465 = vrot.lane.b32.xlu0 %v1460, 3
      %v1466 = vpop.permute.xlu0 %1465
      %vm1467 = vcmask 23552
      %v1468 = vsel %vm1467, %v1462, %v1464
      %v1469 = vsel %vm1467, %v1464, %v1466
      %1472 = vst [vmem:[#allocation2 + $0xa0] sm:$0xf0] %v1468
      %1473 = vst [vmem:[#allocation2 + $0xa8] sm:$0xf0] %v1469
      %s1474 = scalar_lea.vmem %s1, 38
      %v1475 = vld [vmem:[%s1474] ss:$8 sm:$0x3]
      %v1477 = vlaneseq
      %v1478 = vshrl.u32 %v1477, 7
      %v1479 = vsub.s32 0, %v1478
      %v1480 = vrot.slane %v1475, %v1479
      %v1481 = vlaneseq
      %v1482 = vshrl.u32 %v1481, 7
      %v1483 = vsub.s32 1, %v1482
      %v1484 = vrot.slane %v1475, %v1483
      %v1485 = vcombine.low %v1480, %v1484
      %1486 = vrot.lane.b32.xlu0 %v1485, 126
      %v1487 = vpop.permute.xlu0 %1486
      %v1488 = vrot.slane %v1487, 4
      %vm1489 = vcmask 1031168
      %v1490 = vsel %vm1489, %v1488, %v1487
      %v1493 = vmul.f32 %v360, %v1490
      %v1494 = vmul.f32 %v361, %v1488
      %v1497 = vcombine.high %v1493, %v1493
      %1498 = vrot.lane.b32.xlu0 %v1493, 2
      %v1499 = vpop.permute.xlu0 %1498
      %1500 = vrot.lane.b32.xlu0 %v1497, 2
      %v1501 = vpop.permute.xlu0 %1500
      %1502 = vrot.lane.b32.xlu0 %v1494, 2
      %v1503 = vpop.permute.xlu0 %1502
      %vm1504 = vcmask 15360
      %v1505 = vsel %vm1504, %v1499, %v1501
      %v1506 = vsel %vm1504, %v1501, %v1503
      %1509 = vst [vmem:[#allocation2 + $0xb0] sm:$0xf] %v1505
      %1510 = vst [vmem:[#allocation2 + $0xb8] sm:$0xf] %v1506
      %s1511 = scalar_lea.vmem %s1, 39
      %v1512 = vld [vmem:[%s1511] ss:$8 sm:$0x3]
      %v1514 = vlaneseq
      %v1515 = vshrl.u32 %v1514, 7
      %v1516 = vsub.s32 0, %v1515
      %v1517 = vrot.slane %v1512, %v1516
      %v1518 = vlaneseq
      %v1519 = vshrl.u32 %v1518, 7
      %v1520 = vsub.s32 1, %v1519
      %v1521 = vrot.slane %v1512, %v1520
      %v1522 = vcombine.low %v1517, %v1521
      %1523 = vrot.lane.b32.xlu0 %v1522, 127
      %v1524 = vpop.permute.xlu0 %1523
      %v1525 = vrot.slane %v1524, 4
      %vm1526 = vcmask 1039360
      %v1527 = vsel %vm1526, %v1525, %v1524
      %v1530 = vmul.f32 %v360, %v1527
      %v1531 = vmul.f32 %v361, %v1525
      %v1534 = vcombine.low %v1530, %v1530
      %v1535 = vcombine.low %v1531, %v1531
      %1536 = vrot.lane.b32.xlu0 %v1534, 1
      %v1537 = vpop.permute.xlu0 %1536
      %1538 = vrot.lane.b32.xlu0 %v1530, 1
      %v1539 = vpop.permute.xlu0 %1538
      %1540 = vrot.lane.b32.xlu0 %v1535, 1
      %v1541 = vpop.permute.xlu0 %1540
      %vm1542 = vcmask 7168
      %v1543 = vsel %vm1542, %v1537, %v1539
      %v1544 = vsel %vm1542, %v1539, %v1541
      %1547 = vst [vmem:[#allocation2 + $0xb0] sm:$0xf0] %v1543
      %1548 = vst [vmem:[#allocation2 + $0xb8] sm:$0xf0] %v1544
      %1549 = vst [vmem:[#allocation2 + $0xc0] sm:$0xf] %v420
      %1550 = vst [vmem:[#allocation2 + $0xc8] sm:$0xf] %v361
      %s1551 = scalar_lea.vmem %s1, 49
      %v1552 = vld [vmem:[%s1551] ss:$8 sm:$0x3]
      %v1554 = vlaneseq
      %v1555 = vshrl.u32 %v1554, 7
      %v1556 = vsub.s32 0, %v1555
      %v1557 = vrot.slane %v1552, %v1556
      %v1558 = vlaneseq
      %v1559 = vshrl.u32 %v1558, 7
      %v1560 = vsub.s32 1, %v1559
      %v1561 = vrot.slane %v1552, %v1560
      %1562 = vrot.lane.b32.xlu0 %v360, 127
      %v1563 = vpop.permute.xlu0 %1562
      %1564 = vrot.lane.b32.xlu0 %v361, 127
      %v1565 = vpop.permute.xlu0 %1564
      %v1566 = vrot.slane %v1563, 4
      %v1567 = vrot.slane %v1565, 4
      %v1568 = vsel %vm446, %v1566, %v1567
      %v1569 = vsel %vm1526, %v1568, %v1565
      %v1571 = vcombine.low %v1557, %v1561
      %v1573 = vmul.f32 %v1569, %v1571
      %v1575 = vcombine.low %v1573, %v1573
      %1577 = vst [vmem:[#allocation2 + $0xc0] sm:$0xf0] %v1575
      %1578 = vst [vmem:[#allocation2 + $0xc8] sm:$0xf0] %v1573
      %s1579 = scalar_lea.vmem %s1, 50
      %v1580 = vld [vmem:[%s1579] ss:$8 sm:$0x3]
      %v1582 = vlaneseq
      %v1583 = vshrl.u32 %v1582, 7
      %v1584 = vsub.s32 0, %v1583
      %v1585 = vrot.slane %v1580, %v1584
      %v1586 = vlaneseq
      %v1587 = vshrl.u32 %v1586, 7
      %v1588 = vsub.s32 1, %v1587
      %v1589 = vrot.slane %v1580, %v1588
      %1590 = vrot.lane.b32.xlu0 %v360, 126
      %v1591 = vpop.permute.xlu0 %1590
      %1592 = vrot.lane.b32.xlu0 %v361, 126
      %v1593 = vpop.permute.xlu0 %1592
      %v1594 = vrot.slane %v1591, 4
      %v1595 = vrot.slane %v1593, 4
      %v1596 = vsel %vm446, %v1594, %v1595
      %v1597 = vsel %vm1489, %v1596, %v1593
      %v1599 = vcombine.low %v1585, %v1589
      %v1601 = vmul.f32 %v1597, %v1599
      %v1603 = vcombine.high %v1601, %v1601
      %1605 = vst [vmem:[#allocation2 + $0xd0] sm:$0xf] %v1601
      %1606 = vst [vmem:[#allocation2 + $0xd8] sm:$0xf] %v1603
      %s1607 = scalar_lea.vmem %s1, 51
      %v1608 = vld [vmem:[%s1607] ss:$8 sm:$0x3]
      %v1610 = vlaneseq
      %v1611 = vshrl.u32 %v1610, 7
      %v1612 = vsub.s32 0, %v1611
      %v1613 = vrot.slane %v1608, %v1612
      %v1614 = vlaneseq
      %v1615 = vshrl.u32 %v1614, 7
      %v1616 = vsub.s32 1, %v1615
      %v1617 = vrot.slane %v1608, %v1616
      %1618 = vrot.lane.b32.xlu0 %v360, 125
      %v1619 = vpop.permute.xlu0 %1618
      %1620 = vrot.lane.b32.xlu0 %v361, 125
      %v1621 = vpop.permute.xlu0 %1620
      %v1622 = vrot.slane %v1619, 4
      %v1623 = vrot.slane %v1621, 4
      %v1624 = vsel %vm446, %v1622, %v1623
      %v1625 = vsel %vm1451, %v1624, %v1621
      %v1627 = vcombine.low %v1613, %v1617
      %v1629 = vmul.f32 %v1625, %v1627
      %v1631 = vcombine.low %v1629, %v1629
      %1633 = vst [vmem:[#allocation2 + $0xd0] sm:$0xf0] %v1631
      %1634 = vst [vmem:[#allocation2 + $0xd8] sm:$0xf0] %v1629
      %s1635 = scalar_lea.vmem %s1, 52
      %v1636 = vld [vmem:[%s1635] ss:$8 sm:$0x3]
      %v1638 = vlaneseq
      %v1639 = vshrl.u32 %v1638, 7
      %v1640 = vsub.s32 0, %v1639
      %v1641 = vrot.slane %v1636, %v1640
      %v1642 = vlaneseq
      %v1643 = vshrl.u32 %v1642, 7
      %v1644 = vsub.s32 1, %v1643
      %v1645 = vrot.slane %v1636, %v1644
      %1646 = vrot.lane.b32.xlu0 %v360, 115
      %v1647 = vpop.permute.xlu0 %1646
      %1648 = vrot.lane.b32.xlu0 %v361, 115
      %v1649 = vpop.permute.xlu0 %1648
      %v1650 = vrot.slane %v1647, 4
      %v1651 = vrot.slane %v1649, 4
      %v1652 = vsel %vm446, %v1650, %v1651
      %v1653 = vsel %vm1414, %v1652, %v1649
      %v1655 = vcombine.low %v1641, %v1645
      %v1657 = vmul.f32 %v1653, %v1655
      %v1659 = vcombine.high %v1657, %v1657
      %1661 = vst [vmem:[#allocation2 + $0xe0] sm:$0xf] %v1657
      %1662 = vst [vmem:[#allocation2 + $0xe8] sm:$0xf] %v1659
      %s1663 = scalar_lea.vmem %s1, 53
      %v1664 = vld [vmem:[%s1663] ss:$8 sm:$0x3]
      %v1666 = vlaneseq
      %v1667 = vshrl.u32 %v1666, 7
      %v1668 = vsub.s32 0, %v1667
      %v1669 = vrot.slane %v1664, %v1668
      %v1670 = vlaneseq
      %v1671 = vshrl.u32 %v1670, 7
      %v1672 = vsub.s32 1, %v1671
      %v1673 = vrot.slane %v1664, %v1672
      %1674 = vrot.lane.b32.xlu0 %v360, 114
      %v1675 = vpop.permute.xlu0 %1674
      %1676 = vrot.lane.b32.xlu0 %v361, 114
      %v1677 = vpop.permute.xlu0 %1676
      %v1678 = vrot.slane %v1675, 4
      %v1679 = vrot.slane %v1677, 4
      %v1680 = vsel %vm446, %v1678, %v1679
      %v1681 = vsel %vm1376, %v1680, %v1677
      %v1683 = vcombine.low %v1669, %v1673
      %v1685 = vmul.f32 %v1681, %v1683
      %v1687 = vcombine.low %v1685, %v1685
      %1689 = vst [vmem:[#allocation2 + $0xe0] sm:$0xf0] %v1687
      %1690 = vst [vmem:[#allocation2 + $0xe8] sm:$0xf0] %v1685
      %s1691 = scalar_lea.vmem %s1, 54
      %v1692 = vld [vmem:[%s1691] ss:$8 sm:$0x3]
      %v1694 = vlaneseq
      %v1695 = vshrl.u32 %v1694, 7
      %v1696 = vsub.s32 0, %v1695
      %v1697 = vrot.slane %v1692, %v1696
      %v1698 = vlaneseq
      %v1699 = vshrl.u32 %v1698, 7
      %v1700 = vsub.s32 1, %v1699
      %v1701 = vrot.slane %v1692, %v1700
      %1702 = vrot.lane.b32.xlu0 %v360, 113
      %v1703 = vpop.permute.xlu0 %1702
      %1704 = vrot.lane.b32.xlu0 %v361, 113
      %v1705 = vpop.permute.xlu0 %1704
      %v1706 = vrot.slane %v1703, 4
      %v1707 = vrot.slane %v1705, 4
      %v1708 = vsel %vm446, %v1706, %v1707
      %v1709 = vsel %vm1339, %v1708, %v1705
      %v1711 = vcombine.low %v1697, %v1701
      %v1713 = vmul.f32 %v1709, %v1711
      %v1715 = vcombine.high %v1713, %v1713
      %1717 = vst [vmem:[#allocation2 + $0xf0] sm:$0xf] %v1713
      %1718 = vst [vmem:[#allocation2 + $0xf8] sm:$0xf] %v1715
      %1719 = vrot.lane.b32.xlu0 %v360, 112
      %v1720 = vpop.permute.xlu0 %1719
      %1721 = vrot.lane.b32.xlu0 %v834, 112
      %v1722 = vpop.permute.xlu0 %1721
      %1723 = vrot.lane.b32.xlu0 %v361, 112
      %v1724 = vpop.permute.xlu0 %1723
      %vm1725 = vcmask 916480
      %v1726 = vsel %vm1725, %v1720, %v1722
      %v1727 = vsel %vm1725, %v1722, %v1724
      %1730 = vst [vmem:[#allocation2 + $0xf0] sm:$0xf0] %v1726
      %1731 = vst [vmem:[#allocation2 + $0xf8] sm:$0xf0] %v1727
      %s1732 = scalar_lea.vmem %s1, 64
      %v1733 = vld [vmem:[%s1732] ss:$8 sm:$0x3]
      %v1735 = vlaneseq
      %v1736 = vshrl.u32 %v1735, 7
      %v1737 = vsub.s32 0, %v1736
      %v1738 = vrot.slane %v1733, %v1737
      %v1739 = vlaneseq
      %v1740 = vshrl.u32 %v1739, 7
      %v1741 = vsub.s32 1, %v1740
      %v1742 = vrot.slane %v1733, %v1741
      %1743 = vrot.lane.b32.xlu0 %v360, 111
      %v1744 = vpop.permute.xlu0 %1743
      %1745 = vrot.lane.b32.xlu0 %v361, 111
      %v1746 = vpop.permute.xlu0 %1745
      %v1747 = vrot.slane %v1744, 4
      %v1748 = vrot.slane %v1746, 4
      %v1749 = vsel %vm446, %v1747, %v1748
      %v1750 = vsel %vm1289, %v1749, %v1746
      %v1752 = vcombine.low %v1738, %v1742
      %v1754 = vmul.f32 %v1750, %v1752
      %v1756 = vcombine.high %v1754, %v1754
      %1758 = vst [vmem:[#allocation2 + $0x100] sm:$0xf] %v1754
      %1759 = vst [vmem:[#allocation2 + $0x108] sm:$0xf] %v1756
      %s1760 = scalar_lea.vmem %s1, 65
      %v1761 = vld [vmem:[%s1760] ss:$8 sm:$0x3]
      %v1763 = vlaneseq
      %v1764 = vshrl.u32 %v1763, 7
      %v1765 = vsub.s32 0, %v1764
      %v1766 = vrot.slane %v1761, %v1765
      %v1767 = vlaneseq
      %v1768 = vshrl.u32 %v1767, 7
      %v1769 = vsub.s32 1, %v1768
      %v1770 = vrot.slane %v1761, %v1769
      %1771 = vrot.lane.b32.xlu0 %v360, 110
      %v1772 = vpop.permute.xlu0 %1771
      %1773 = vrot.lane.b32.xlu0 %v361, 110
      %v1774 = vpop.permute.xlu0 %1773
      %v1775 = vrot.slane %v1772, 4
      %v1776 = vrot.slane %v1774, 4
      %v1777 = vsel %vm446, %v1775, %v1776
      %v1778 = vsel %vm1251, %v1777, %v1774
      %v1780 = vcombine.low %v1766, %v1770
      %v1782 = vmul.f32 %v1778, %v1780
      %v1784 = vcombine.low %v1782, %v1782
      %1786 = vst [vmem:[#allocation2 + $0x100] sm:$0xf0] %v1784
      %1787 = vst [vmem:[#allocation2 + $0x108] sm:$0xf0] %v1782
      %s1788 = scalar_lea.vmem %s1, 66
      %v1789 = vld [vmem:[%s1788] ss:$8 sm:$0x3]
      %v1791 = vlaneseq
      %v1792 = vshrl.u32 %v1791, 7
      %v1793 = vsub.s32 0, %v1792
      %v1794 = vrot.slane %v1789, %v1793
      %v1795 = vlaneseq
      %v1796 = vshrl.u32 %v1795, 7
      %v1797 = vsub.s32 1, %v1796
      %v1798 = vrot.slane %v1789, %v1797
      %1799 = vrot.lane.b32.xlu0 %v360, 109
      %v1800 = vpop.permute.xlu0 %1799
      %1801 = vrot.lane.b32.xlu0 %v361, 109
      %v1802 = vpop.permute.xlu0 %1801
      %v1803 = vrot.slane %v1800, 4
      %v1804 = vrot.slane %v1802, 4
      %v1805 = vsel %vm446, %v1803, %v1804
      %v1806 = vsel %vm1214, %v1805, %v1802
      %v1808 = vcombine.low %v1794, %v1798
      %v1810 = vmul.f32 %v1806, %v1808
      %v1812 = vcombine.high %v1810, %v1810
      %1814 = vst [vmem:[#allocation2 + $0x110] sm:$0xf] %v1810
      %1815 = vst [vmem:[#allocation2 + $0x118] sm:$0xf] %v1812
      %s1816 = scalar_lea.vmem %s1, 67
      %v1817 = vld [vmem:[%s1816] ss:$8 sm:$0x3]
      %v1819 = vlaneseq
      %v1820 = vshrl.u32 %v1819, 7
      %v1821 = vsub.s32 0, %v1820
      %v1822 = vrot.slane %v1817, %v1821
      %v1823 = vlaneseq
      %v1824 = vshrl.u32 %v1823, 7
      %v1825 = vsub.s32 1, %v1824
      %v1826 = vrot.slane %v1817, %v1825
      %1827 = vrot.lane.b32.xlu0 %v360, 99
      %v1828 = vpop.permute.xlu0 %1827
      %1829 = vrot.lane.b32.xlu0 %v361, 99
      %v1830 = vpop.permute.xlu0 %1829
      %v1831 = vrot.slane %v1828, 4
      %v1832 = vrot.slane %v1830, 4
      %v1833 = vsel %vm446, %v1831, %v1832
      %v1834 = vsel %vm1176, %v1833, %v1830
      %v1836 = vcombine.low %v1822, %v1826
      %v1838 = vmul.f32 %v1834, %v1836
      %v1840 = vcombine.low %v1838, %v1838
      %1842 = vst [vmem:[#allocation2 + $0x110] sm:$0xf0] %v1840
      %1843 = vst [vmem:[#allocation2 + $0x118] sm:$0xf0] %v1838
      %s1844 = scalar_lea.vmem %s1, 68
      %v1845 = vld [vmem:[%s1844] ss:$8 sm:$0x3]
      %v1847 = vlaneseq
      %v1848 = vshrl.u32 %v1847, 7
      %v1849 = vsub.s32 0, %v1848
      %v1850 = vrot.slane %v1845, %v1849
      %v1851 = vlaneseq
      %v1852 = vshrl.u32 %v1851, 7
      %v1853 = vsub.s32 1, %v1852
      %v1854 = vrot.slane %v1845, %v1853
      %1855 = vrot.lane.b32.xlu0 %v360, 98
      %v1856 = vpop.permute.xlu0 %1855
      %1857 = vrot.lane.b32.xlu0 %v361, 98
      %v1858 = vpop.permute.xlu0 %1857
      %v1859 = vrot.slane %v1856, 4
      %v1860 = vrot.slane %v1858, 4
      %v1861 = vsel %vm446, %v1859, %v1860
      %v1862 = vsel %vm1139, %v1861, %v1858
      %v1864 = vcombine.low %v1850, %v1854
      %v1866 = vmul.f32 %v1862, %v1864
      %v1868 = vcombine.high %v1866, %v1866
      %1870 = vst [vmem:[#allocation2 + $0x120] sm:$0xf] %v1866
      %1871 = vst [vmem:[#allocation2 + $0x128] sm:$0xf] %v1868
      %s1872 = scalar_lea.vmem %s1, 69
      %v1873 = vld [vmem:[%s1872] ss:$8 sm:$0x3]
      %v1875 = vlaneseq
      %v1876 = vshrl.u32 %v1875, 7
      %v1877 = vsub.s32 0, %v1876
      %v1878 = vrot.slane %v1873, %v1877
      %v1879 = vlaneseq
      %v1880 = vshrl.u32 %v1879, 7
      %v1881 = vsub.s32 1, %v1880
      %v1882 = vrot.slane %v1873, %v1881
      %1883 = vrot.lane.b32.xlu0 %v360, 97
      %v1884 = vpop.permute.xlu0 %1883
      %1885 = vrot.lane.b32.xlu0 %v361, 97
      %v1886 = vpop.permute.xlu0 %1885
      %v1887 = vrot.slane %v1884, 4
      %v1888 = vrot.slane %v1886, 4
      %v1889 = vsel %vm446, %v1887, %v1888
      %v1890 = vsel %vm1101, %v1889, %v1886
      %v1892 = vcombine.low %v1878, %v1882
      %v1894 = vmul.f32 %v1890, %v1892
      %v1896 = vcombine.low %v1894, %v1894
      %1898 = vst [vmem:[#allocation2 + $0x120] sm:$0xf0] %v1896
      %1899 = vst [vmem:[#allocation2 + $0x128] sm:$0xf0] %v1894
      %v1900 = vcombine.high %v361, %v361
      %1901 = vrot.lane.b32.xlu0 %v420, 96
      %v1902 = vpop.permute.xlu0 %1901
      %1903 = vrot.lane.b32.xlu0 %v361, 96
      %v1904 = vpop.permute.xlu0 %1903
      %1905 = vrot.lane.b32.xlu0 %v1900, 96
      %v1906 = vpop.permute.xlu0 %1905
      %vm1907 = vcmask 785408
      %v1908 = vsel %vm1907, %v1902, %v1904
      %v1909 = vsel %vm1907, %v1904, %v1906
      %1912 = vst [vmem:[#allocation2 + $0x130] sm:$0xf] %v1908
      %1913 = vst [vmem:[#allocation2 + $0x138] sm:$0xf] %v1909
      %s1914 = scalar_lea.vmem %s1, 71
      %v1915 = vld [vmem:[%s1914] ss:$8 sm:$0x3]
      %v1917 = vlaneseq
      %v1918 = vshrl.u32 %v1917, 7
      %v1919 = vsub.s32 0, %v1918
      %v1920 = vrot.slane %v1915, %v1919
      %v1921 = vlaneseq
      %v1922 = vshrl.u32 %v1921, 7
      %v1923 = vsub.s32 1, %v1922
      %v1924 = vrot.slane %v1915, %v1923
      %1925 = vrot.lane.b32.xlu0 %v360, 95
      %v1926 = vpop.permute.xlu0 %1925
      %1927 = vrot.lane.b32.xlu0 %v361, 95
      %v1928 = vpop.permute.xlu0 %1927
      %v1929 = vrot.slane %v1926, 4
      %v1930 = vrot.slane %v1928, 4
      %v1931 = vsel %vm446, %v1929, %v1930
      %v1932 = vsel %vm1050, %v1931, %v1928
      %v1934 = vcombine.low %v1920, %v1924
      %v1936 = vmul.f32 %v1932, %v1934
      %v1938 = vcombine.low %v1936, %v1936
      %1940 = vst [vmem:[#allocation2 + $0x130] sm:$0xf0] %v1938
      %1941 = vst [vmem:[#allocation2 + $0x138] sm:$0xf0] %v1936
      %s1942 = scalar_lea.vmem %s1, 80
      %v1943 = vld [vmem:[%s1942] ss:$8 sm:$0x3]
      %v1945 = vlaneseq
      %v1946 = vshrl.u32 %v1945, 7
      %v1947 = vsub.s32 0, %v1946
      %v1948 = vrot.slane %v1943, %v1947
      %v1949 = vlaneseq
      %v1950 = vshrl.u32 %v1949, 7
      %v1951 = vsub.s32 1, %v1950
      %v1952 = vrot.slane %v1943, %v1951
      %1953 = vrot.lane.b32.xlu0 %v360, 94
      %v1954 = vpop.permute.xlu0 %1953
      %1955 = vrot.lane.b32.xlu0 %v361, 94
      %v1956 = vpop.permute.xlu0 %1955
      %v1957 = vrot.slane %v1954, 4
      %v1958 = vrot.slane %v1956, 4
      %v1959 = vsel %vm446, %v1957, %v1958
      %v1960 = vsel %vm1013, %v1959, %v1956
      %v1962 = vcombine.low %v1948, %v1952
      %v1964 = vmul.f32 %v1960, %v1962
      %v1966 = vcombine.high %v1964, %v1964
      %1968 = vst [vmem:[#allocation2 + $0x140] sm:$0xf] %v1964
      %1969 = vst [vmem:[#allocation2 + $0x148] sm:$0xf] %v1966
      %s1970 = scalar_lea.vmem %s1, 81
      %v1971 = vld [vmem:[%s1970] ss:$8 sm:$0x3]
      %v1973 = vlaneseq
      %v1974 = vshrl.u32 %v1973, 7
      %v1975 = vsub.s32 0, %v1974
      %v1976 = vrot.slane %v1971, %v1975
      %v1977 = vlaneseq
      %v1978 = vshrl.u32 %v1977, 7
      %v1979 = vsub.s32 1, %v1978
      %v1980 = vrot.slane %v1971, %v1979
      %1981 = vrot.lane.b32.xlu0 %v360, 93
      %v1982 = vpop.permute.xlu0 %1981
      %1983 = vrot.lane.b32.xlu0 %v361, 93
      %v1984 = vpop.permute.xlu0 %1983
      %v1985 = vrot.slane %v1982, 4
      %v1986 = vrot.slane %v1984, 4
      %v1987 = vsel %vm446, %v1985, %v1986
      %v1988 = vsel %vm975, %v1987, %v1984
      %v1990 = vcombine.low %v1976, %v1980
      %v1992 = vmul.f32 %v1988, %v1990
      %v1994 = vcombine.low %v1992, %v1992
      %1996 = vst [vmem:[#allocation2 + $0x140] sm:$0xf0] %v1994
      %1997 = vst [vmem:[#allocation2 + $0x148] sm:$0xf0] %v1992
      %s1998 = scalar_lea.vmem %s1, 82
      %v1999 = vld [vmem:[%s1998] ss:$8 sm:$0x3]
      %v2001 = vlaneseq
      %v2002 = vshrl.u32 %v2001, 7
      %v2003 = vsub.s32 0, %v2002
      %v2004 = vrot.slane %v1999, %v2003
      %v2005 = vlaneseq
      %v2006 = vshrl.u32 %v2005, 7
      %v2007 = vsub.s32 1, %v2006
      %v2008 = vrot.slane %v1999, %v2007
      %2009 = vrot.lane.b32.xlu0 %v360, 83
      %v2010 = vpop.permute.xlu0 %2009
      %2011 = vrot.lane.b32.xlu0 %v361, 83
      %v2012 = vpop.permute.xlu0 %2011
      %v2013 = vrot.slane %v2010, 4
      %v2014 = vrot.slane %v2012, 4
      %v2015 = vsel %vm446, %v2013, %v2014
      %v2016 = vsel %vm938, %v2015, %v2012
      %v2018 = vcombine.low %v2004, %v2008
      %v2020 = vmul.f32 %v2016, %v2018
      %v2022 = vcombine.high %v2020, %v2020
      %2024 = vst [vmem:[#allocation2 + $0x150] sm:$0xf] %v2020
      %2025 = vst [vmem:[#allocation2 + $0x158] sm:$0xf] %v2022
      %s2026 = scalar_lea.vmem %s1, 83
      %v2027 = vld [vmem:[%s2026] ss:$8 sm:$0x3]
      %v2029 = vlaneseq
      %v2030 = vshrl.u32 %v2029, 7
      %v2031 = vsub.s32 0, %v2030
      %v2032 = vrot.slane %v2027, %v2031
      %v2033 = vlaneseq
      %v2034 = vshrl.u32 %v2033, 7
      %v2035 = vsub.s32 1, %v2034
      %v2036 = vrot.slane %v2027, %v2035
      %2037 = vrot.lane.b32.xlu0 %v360, 82
      %v2038 = vpop.permute.xlu0 %2037
      %2039 = vrot.lane.b32.xlu0 %v361, 82
      %v2040 = vpop.permute.xlu0 %2039
      %v2041 = vrot.slane %v2038, 4
      %v2042 = vrot.slane %v2040, 4
      %v2043 = vsel %vm446, %v2041, %v2042
      %v2044 = vsel %vm900, %v2043, %v2040
      %v2046 = vcombine.low %v2032, %v2036
      %v2048 = vmul.f32 %v2044, %v2046
      %v2050 = vcombine.low %v2048, %v2048
      %2052 = vst [vmem:[#allocation2 + $0x150] sm:$0xf0] %v2050
      %2053 = vst [vmem:[#allocation2 + $0x158] sm:$0xf0] %v2048
      %s2054 = scalar_lea.vmem %s1, 84
      %v2055 = vld [vmem:[%s2054] ss:$8 sm:$0x3]
      %v2057 = vlaneseq
      %v2058 = vshrl.u32 %v2057, 7
      %v2059 = vsub.s32 0, %v2058
      %v2060 = vrot.slane %v2055, %v2059
      %v2061 = vlaneseq
      %v2062 = vshrl.u32 %v2061, 7
      %v2063 = vsub.s32 1, %v2062
      %v2064 = vrot.slane %v2055, %v2063
      %2065 = vrot.lane.b32.xlu0 %v360, 81
      %v2066 = vpop.permute.xlu0 %2065
      %2067 = vrot.lane.b32.xlu0 %v361, 81
      %v2068 = vpop.permute.xlu0 %2067
      %v2069 = vrot.slane %v2066, 4
      %v2070 = vrot.slane %v2068, 4
      %v2071 = vsel %vm446, %v2069, %v2070
      %v2072 = vsel %vm863, %v2071, %v2068
      %v2074 = vcombine.low %v2060, %v2064
      %v2076 = vmul.f32 %v2072, %v2074
      %v2078 = vcombine.high %v2076, %v2076
      %2080 = vst [vmem:[#allocation2 + $0x160] sm:$0xf] %v2076
      %2081 = vst [vmem:[#allocation2 + $0x168] sm:$0xf] %v2078
      %2082 = vrot.lane.b32.xlu0 %v360, 80
      %v2083 = vpop.permute.xlu0 %2082
      %2084 = vrot.lane.b32.xlu0 %v834, 80
      %v2085 = vpop.permute.xlu0 %2084
      %2086 = vrot.lane.b32.xlu0 %v361, 80
      %v2087 = vpop.permute.xlu0 %2086
      %vm2088 = vcmask 654336
      %v2089 = vsel %vm2088, %v2083, %v2085
      %v2090 = vsel %vm2088, %v2085, %v2087
      %2093 = vst [vmem:[#allocation2 + $0x160] sm:$0xf0] %v2089
      %2094 = vst [vmem:[#allocation2 + $0x168] sm:$0xf0] %v2090
      %s2095 = scalar_lea.vmem %s1, 86
      %v2096 = vld [vmem:[%s2095] ss:$8 sm:$0x3]
      %v2098 = vlaneseq
      %v2099 = vshrl.u32 %v2098, 7
      %v2100 = vsub.s32 0, %v2099
      %v2101 = vrot.slane %v2096, %v2100
      %v2102 = vlaneseq
      %v2103 = vshrl.u32 %v2102, 7
      %v2104 = vsub.s32 1, %v2103
      %v2105 = vrot.slane %v2096, %v2104
      %2106 = vrot.lane.b32.xlu0 %v360, 79
      %v2107 = vpop.permute.xlu0 %2106
      %2108 = vrot.lane.b32.xlu0 %v361, 79
      %v2109 = vpop.permute.xlu0 %2108
      %v2110 = vrot.slane %v2107, 4
      %v2111 = vrot.slane %v2109, 4
      %v2112 = vsel %vm446, %v2110, %v2111
      %v2113 = vsel %vm811, %v2112, %v2109
      %v2115 = vcombine.low %v2101, %v2105
      %v2117 = vmul.f32 %v2113, %v2115
      %v2119 = vcombine.high %v2117, %v2117
      %2121 = vst [vmem:[#allocation2 + $0x170] sm:$0xf] %v2117
      %2122 = vst [vmem:[#allocation2 + $0x178] sm:$0xf] %v2119
      %s2123 = scalar_lea.vmem %s1, 87
      %v2124 = vld [vmem:[%s2123] ss:$8 sm:$0x3]
      %v2126 = vlaneseq
      %v2127 = vshrl.u32 %v2126, 7
      %v2128 = vsub.s32 0, %v2127
      %v2129 = vrot.slane %v2124, %v2128
      %v2130 = vlaneseq
      %v2131 = vshrl.u32 %v2130, 7
      %v2132 = vsub.s32 1, %v2131
      %v2133 = vrot.slane %v2124, %v2132
      %2134 = vrot.lane.b32.xlu0 %v360, 78
      %v2135 = vpop.permute.xlu0 %2134
      %2136 = vrot.lane.b32.xlu0 %v361, 78
      %v2137 = vpop.permute.xlu0 %2136
      %v2138 = vrot.slane %v2135, 4
      %v2139 = vrot.slane %v2137, 4
      %v2140 = vsel %vm446, %v2138, %v2139
      %v2141 = vsel %vm773, %v2140, %v2137
      %v2143 = vcombine.low %v2129, %v2133
      %v2145 = vmul.f32 %v2141, %v2143
      %v2147 = vcombine.low %v2145, %v2145
      %2149 = vst [vmem:[#allocation2 + $0x170] sm:$0xf0] %v2147
      %2150 = vst [vmem:[#allocation2 + $0x178] sm:$0xf0] %v2145
      %s2151 = scalar_lea.vmem %s1, 96
      %v2152 = vld [vmem:[%s2151] ss:$8 sm:$0x3]
      %v2154 = vlaneseq
      %v2155 = vshrl.u32 %v2154, 7
      %v2156 = vsub.s32 0, %v2155
      %v2157 = vrot.slane %v2152, %v2156
      %v2158 = vlaneseq
      %v2159 = vshrl.u32 %v2158, 7
      %v2160 = vsub.s32 1, %v2159
      %v2161 = vrot.slane %v2152, %v2160
      %2162 = vrot.lane.b32.xlu0 %v360, 77
      %v2163 = vpop.permute.xlu0 %2162
      %2164 = vrot.lane.b32.xlu0 %v361, 77
      %v2165 = vpop.permute.xlu0 %2164
      %v2166 = vrot.slane %v2163, 4
      %v2167 = vrot.slane %v2165, 4
      %v2168 = vsel %vm446, %v2166, %v2167
      %v2169 = vsel %vm736, %v2168, %v2165
      %v2171 = vcombine.low %v2157, %v2161
      %v2173 = vmul.f32 %v2169, %v2171
      %v2175 = vcombine.high %v2173, %v2173
      %2177 = vst [vmem:[#allocation2 + $0x180] sm:$0xf] %v2173
      %2178 = vst [vmem:[#allocation2 + $0x188] sm:$0xf] %v2175
      %v2179 = vld [vmem:[%s6] sm:$0xff]
      %v2180 = vld [vmem:[%s6 + $0x8] sm:$0xff]
      %v2181 = vld [vmem:[%s6 + $0x10] sm:$0xff]
      %v2182 = vld [vmem:[%s6 + $0x18] sm:$0xff]
      %v2183 = vld [vmem:[#allocation2] sm:$0xff]
      %v2184 = vld [vmem:[#allocation2 + $0x8] sm:$0xff]
      %v2185 = vld [vmem:[#allocation2 + $0x10] sm:$0xff]
      %v2186 = vld [vmem:[#allocation2 + $0x18] sm:$0xff]
      %v2187 = vld [vmem:[#allocation2 + $0x20] sm:$0xff]
      %v2188 = vld [vmem:[#allocation2 + $0x28] sm:$0xff]
      %v2189 = vld [vmem:[#allocation2 + $0x30] sm:$0xff]
      %v2190 = vld [vmem:[#allocation2 + $0x38] sm:$0xff]
      %v2191 = vld [vmem:[#allocation2 + $0x40] sm:$0xff]
      %v2192 = vld [vmem:[#allocation2 + $0x48] sm:$0xff]
      %v2193 = vld [vmem:[#allocation2 + $0x50] sm:$0xff]
      %v2194 = vld [vmem:[#allocation2 + $0x58] sm:$0xff]
      %v2195 = vld [vmem:[#allocation2 + $0x60] sm:$0xff]
      %v2196 = vld [vmem:[#allocation2 + $0x68] sm:$0xff]
      %v2197 = vld [vmem:[#allocation2 + $0x70] sm:$0xff]
      %v2198 = vld [vmem:[#allocation2 + $0x78] sm:$0xff]
      %v2199 = vld [vmem:[#allocation2 + $0x80] sm:$0xff]
      %v2200 = vld [vmem:[#allocation2 + $0x88] sm:$0xff]
      %v2201 = vld [vmem:[#allocation2 + $0x90] sm:$0xff]
      %v2202 = vld [vmem:[#allocation2 + $0x98] sm:$0xff]
      %v2203 = vld [vmem:[#allocation2 + $0xa0] sm:$0xff]
      %v2204 = vld [vmem:[#allocation2 + $0xa8] sm:$0xff]
      %v2205 = vld [vmem:[#allocation2 + $0xb0] sm:$0xff]
      %v2206 = vld [vmem:[#allocation2 + $0xb8] sm:$0xff]
      %v2207 = vld [vmem:[#allocation2 + $0xc0] sm:$0xff]
      %v2208 = vld [vmem:[#allocation2 + $0xc8] sm:$0xff]
      %v2209 = vld [vmem:[#allocation2 + $0xd0] sm:$0xff]
      %v2210 = vld [vmem:[#allocation2 + $0xd8] sm:$0xff]
      %v2211 = vld [vmem:[#allocation2 + $0xe0] sm:$0xff]
      %v2212 = vld [vmem:[#allocation2 + $0xe8] sm:$0xff]
      %v2213 = vld [vmem:[#allocation2 + $0xf0] sm:$0xff]
      %v2214 = vld [vmem:[#allocation2 + $0xf8] sm:$0xff]
      %v2215 = vld [vmem:[#allocation2 + $0x100] sm:$0xff]
      %v2216 = vld [vmem:[#allocation2 + $0x108] sm:$0xff]
      %v2217 = vld [vmem:[#allocation2 + $0x110] sm:$0xff]
      %v2218 = vld [vmem:[#allocation2 + $0x118] sm:$0xff]
      %v2219 = vld [vmem:[#allocation2 + $0x120] sm:$0xff]
      %v2220 = vld [vmem:[#allocation2 + $0x128] sm:$0xff]
      %v2221 = vld [vmem:[#allocation2 + $0x130] sm:$0xff]
      %v2222 = vld [vmem:[#allocation2 + $0x138] sm:$0xff]
      %v2223 = vld [vmem:[#allocation2 + $0x140] sm:$0xff]
      %v2224 = vld [vmem:[#allocation2 + $0x148] sm:$0xff]
      %v2225 = vld [vmem:[#allocation2 + $0x150] sm:$0xff]
      %v2226 = vld [vmem:[#allocation2 + $0x158] sm:$0xff]
      %v2227 = vld [vmem:[#allocation2 + $0x160] sm:$0xff]
      %v2228 = vld [vmem:[#allocation2 + $0x168] sm:$0xff]
      %v2229 = vld [vmem:[#allocation2 + $0x170] sm:$0xff]
      %v2230 = vld [vmem:[#allocation2 + $0x178] sm:$0xff]
      %v2231 = vld [vmem:[#allocation2 + $0x180] sm:$0xff]
      %v2232 = vld [vmem:[#allocation2 + $0x188] sm:$0xff]
      %v2233 = vld [vmem:[%s7] sm:$0xff]
      %v2234 = vld [vmem:[%s7 + $0x8] sm:$0xff]
      %2236 = vset.pattern.permute.xlu0 0
      %2237 = vperm.xlu0 %2236, %v2233
      %v2238 = vpop.permute.xlu0 %2237
      %2241 = vset.pattern.permute.xlu0 0
      %2242 = vperm.xlu0 %2241, %v2234
      %v2243 = vpop.permute.xlu0 %2242
      %vm2245 = vcmask 588800
      %v2247 = vsel %vm2245, %v2180, 0
      %v2250 = vsel %vm2245, %v2182, 0
      %2252 = vmatprep.subr.mxu0 %v2214
      %2253 = vmatpush1.msra.mxu0 %v2213
      %2254 = vmatprep.subr.mxu0 %v2212
      %2255 = vmatpush1.msra.mxu0 %v2211
      %2256 = vmatprep.subr.mxu0 %v2210
      %2257 = vmatpush1.msra.mxu0 %v2209
      %2258 = vmatprep.subr.mxu0 %v2208
      %2259 = vmatpush1.msra.mxu0 %v2207
      %2260 = vmatprep.subr.mxu0 %v2206
      %2261 = vmatpush1.msra.mxu0 %v2205
      %2262 = vmatprep.subr.mxu0 %v2204
      %2263 = vmatpush1.msra.mxu0 %v2203
      %2264 = vmatprep.subr.mxu0 %v2202
      %2265 = vmatpush1.msra.mxu0 %v2201
      %2266 = vmatprep.subr.mxu0 %v2200
      %2267 = vmatpush1.msra.mxu0 %v2199
      %2268 = vmatprep.subr.mxu0 %v2198
      %2269 = vmatpush1.msra.mxu0 %v2197
      %2270 = vmatprep.subr.mxu0 %v2196
      %2271 = vmatpush1.msra.mxu0 %v2195
      %2272 = vmatprep.subr.mxu0 %v2194
      %2273 = vmatpush1.msra.mxu0 %v2193
      %2274 = vmatprep.subr.mxu0 %v2192
      %2275 = vmatpush1.msra.mxu0 %v2191
      %2276 = vmatprep.subr.mxu0 %v2190
      %2277 = vmatpush1.msra.mxu0 %v2189
      %2278 = vmatprep.subr.mxu0 %v2188
      %2279 = vmatpush1.msra.mxu0 %v2187
      %2280 = vmatprep.subr.mxu0 %v2186
      %2281 = vmatpush1.msra.mxu0 %v2185
      %2282 = vmatprep.subr.mxu0 %v2184
      %2283 = vmatpush1.msra.mxu0 %v2183
      %2284 = vmatprep.subr.mxu0 0.0
      %2285 = vmatpush2.msra.mxu0 0.0
      %2286 = vmatprep.subr.mxu0 0.0
      %2287 = vmatpush2.msra.mxu0 0.0
      %2288 = vmatprep.subr.mxu0 0.0
      %2289 = vmatpush2.msra.mxu0 0.0
      %2290 = vmatprep.subr.mxu0 0.0
      %2291 = vmatpush2.msra.mxu0 0.0
      %2292 = vmatprep.subr.mxu0 0.0
      %2293 = vmatpush2.msra.mxu0 0.0
      %2294 = vmatprep.subr.mxu0 0.0
      %2295 = vmatpush2.msra.mxu0 0.0
      %2296 = vmatprep.subr.mxu0 0.0
      %2297 = vmatpush2.msra.mxu0 0.0
      %2298 = vmatprep.subr.mxu0 %v2232
      %2299 = vmatpush2.msra.mxu0 %v2231
      %2300 = vmatprep.subr.mxu0 %v2230
      %2301 = vmatpush2.msra.mxu0 %v2229
      %2302 = vmatprep.subr.mxu0 %v2228
      %2303 = vmatpush2.msra.mxu0 %v2227
      %2304 = vmatprep.subr.mxu0 %v2226
      %2305 = vmatpush2.msra.mxu0 %v2225
      %2306 = vmatprep.subr.mxu0 %v2224
      %2307 = vmatpush2.msra.mxu0 %v2223
      %2308 = vmatprep.subr.mxu0 %v2222
      %2309 = vmatpush2.msra.mxu0 %v2221
      %2310 = vmatprep.subr.mxu0 %v2220
      %2311 = vmatpush2.msra.mxu0 %v2219
      %2312 = vmatprep.subr.mxu0 %v2218
      %2313 = vmatpush2.msra.mxu0 %v2217
      %2314 = vmatprep.subr.mxu0 %v2216
      %2315 = vmatpush2.msra.mxu0 %v2215
      %2316 = vmatprep.mubr.f32.mxu0 %v2247
      %2317 = vmatmul.mubr.f32.gmra.mxu0 %v2179
      %v2318 = vpop.f32.mrf.mxu0
      %v2319 = vadd.f32 %v2238, %v2318
      %v2320 = vpop.f32.mrf.mxu0
      %v2321 = vadd.f32 %v2238, %v2320
      %2322 = vmatprep.mubr.f32.mxu0 %v2250
      %2323 = vmatmul.mubr.f32.gmra.mxu0 %v2181
      %v2324 = vpop.f32.mrf.mxu0
      %v2325 = vadd.f32 %v2243, %v2324
      %v2326 = vpop.f32.mrf.mxu0
      %v2327 = vadd.f32 %v2243, %v2326
      %2328 = vdwg.mxu0
      %2329 = vmatprep.subr.mxu0 0.0
      %2330 = vmatpush1.xpose.msra.mxu0 0.0
      %2331 = vmatprep.subr.mxu0 0.0
      %2332 = vmatpush1.xpose.msra.mxu0 0.0
      %2333 = vmatprep.subr.mxu0 0.0
      %2334 = vmatpush1.xpose.msra.mxu0 0.0
      %2335 = vmatprep.subr.mxu0 0.0
      %2336 = vmatpush1.xpose.msra.mxu0 0.0
      %2337 = vmatprep.subr.mxu0 0.0
      %2338 = vmatpush1.xpose.msra.mxu0 0.0
      %2339 = vmatprep.subr.mxu0 0.0
      %2340 = vmatpush1.xpose.msra.mxu0 0.0
      %2341 = vmatprep.subr.mxu0 0.0
      %2342 = vmatpush1.xpose.msra.mxu0 0.0
      %2343 = vmatprep.subr.mxu0 0.0
      %2344 = vmatpush1.xpose.msra.mxu0 0.0
      %2345 = vmatprep.subr.mxu0 0.0
      %2346 = vmatpush1.xpose.msra.mxu0 0.0
      %2347 = vmatprep.subr.mxu0 0.0
      %2348 = vmatpush1.xpose.msra.mxu0 0.0
      %2349 = vmatprep.subr.mxu0 0.0
      %2350 = vmatpush1.xpose.msra.mxu0 0.0
      %2351 = vmatprep.subr.mxu0 0.0
      %2352 = vmatpush1.xpose.msra.mxu0 0.0
      %2353 = vmatprep.subr.mxu0 0.0
      %2354 = vmatpush1.xpose.msra.mxu0 0.0
      %2355 = vmatprep.subr.mxu0 0.0
      %2356 = vmatpush1.xpose.msra.mxu0 0.0
      %2357 = vmatprep.subr.mxu0 %v2327
      %2358 = vmatpush1.xpose.msra.mxu0 %v2325
      %2359 = vmatprep.subr.mxu0 %v2321
      %2360 = vmatpush1.xpose.msra.mxu0 %v2319
      %2361 = vmatprep.subr.mxu0 0.0
      %2362 = vmatpush2.xpose.msra.mxu0 0.0
      %2363 = vmatprep.subr.mxu0 0.0
      %2364 = vmatpush2.xpose.msra.mxu0 0.0
      %2365 = vmatprep.subr.mxu0 0.0
      %2366 = vmatpush2.xpose.msra.mxu0 0.0
      %2367 = vmatprep.subr.mxu0 0.0
      %2368 = vmatpush2.xpose.msra.mxu0 0.0
      %2369 = vmatprep.subr.mxu0 0.0
      %2370 = vmatpush2.xpose.msra.mxu0 0.0
      %2371 = vmatprep.subr.mxu0 0.0
      %2372 = vmatpush2.xpose.msra.mxu0 0.0
      %2373 = vmatprep.subr.mxu0 0.0
      %2374 = vmatpush2.xpose.msra.mxu0 0.0
      %2375 = vmatprep.subr.mxu0 0.0
      %2376 = vmatpush2.xpose.msra.mxu0 0.0
      %2377 = vmatprep.subr.mxu0 0.0
      %2378 = vmatpush2.xpose.msra.mxu0 0.0
      %2379 = vmatprep.subr.mxu0 0.0
      %2380 = vmatpush2.xpose.msra.mxu0 0.0
      %2381 = vmatprep.subr.mxu0 0.0
      %2382 = vmatpush2.xpose.msra.mxu0 0.0
      %2383 = vmatprep.subr.mxu0 0.0
      %2384 = vmatpush2.xpose.msra.mxu0 0.0
      %2385 = vmatprep.subr.mxu0 0.0
      %2386 = vmatpush2.xpose.msra.mxu0 0.0
      %2387 = vmatprep.subr.mxu0 0.0
      %2388 = vmatpush2.xpose.msra.mxu0 0.0
      %2389 = vmatprep.subr.mxu0 0.0
      %2390 = vmatpush2.xpose.msra.mxu0 0.0
      %2391 = vmatprep.subr.mxu0 0.0
      %2392 = vmatpush2.xpose.msra.mxu0 0.0
      %2393 = vmatprep.mubr.f32.mxu0 %v520
      %2394 = vmatmul.mubr.f32.gmra.mxu0 %v518
      %v2395 = vpop.f32.mrf.mxu0
      %v2396 = vadd.f32 0.0, %v2395
      %v2397 = vpop.f32.mrf.mxu0
      %2398 = vmatprep.mubr.f32.mxu0 %v526
      %2399 = vmatmul.mubr.f32.gmra.mxu0 %v524
      %v2400 = vpop.f32.mrf.mxu0
      %v2401 = vadd.f32 0.0, %v2400
      %v2402 = vpop.f32.mrf.mxu0
      %2403 = vmatprep.mubr.f32.mxu0 %v532
      %2404 = vmatmul.mubr.f32.gmra.mxu0 %v530
      %v2405 = vpop.f32.mrf.mxu0
      %v2406 = vadd.f32 0.0, %v2405
      %v2407 = vpop.f32.mrf.mxu0
      %2408 = vmatprep.mubr.f32.mxu0 %v538
      %2409 = vmatmul.mubr.f32.gmra.mxu0 %v536
      %v2410 = vpop.f32.mrf.mxu0
      %v2411 = vadd.f32 0.0, %v2410
      %v2412 = vpop.f32.mrf.mxu0
      %2413 = vmatprep.mubr.f32.mxu0 %v544
      %2414 = vmatmul.mubr.f32.gmra.mxu0 %v542
      %v2415 = vpop.f32.mrf.mxu0
      %v2416 = vadd.f32 0.0, %v2415
      %v2417 = vpop.f32.mrf.mxu0
      %2418 = vmatprep.mubr.f32.mxu0 %v550
      %2419 = vmatmul.mubr.f32.gmra.mxu0 %v548
      %v2420 = vpop.f32.mrf.mxu0
      %v2421 = vadd.f32 0.0, %v2420
      %v2422 = vpop.f32.mrf.mxu0
      %2423 = vmatprep.mubr.f32.mxu0 %v556
      %2424 = vmatmul.mubr.f32.gmra.mxu0 %v554
      %v2425 = vpop.f32.mrf.mxu0
      %v2426 = vadd.f32 0.0, %v2425
      %v2427 = vpop.f32.mrf.mxu0
      %2428 = vmatprep.mubr.f32.mxu0 %v562
      %2429 = vmatmul.mubr.f32.gmra.mxu0 %v560
      %v2430 = vpop.f32.mrf.mxu0
      %v2431 = vadd.f32 0.0, %v2430
      %v2432 = vpop.f32.mrf.mxu0
      %2433 = vdwg.mxu0
      %2435 = vset.pattern.permute.xlu0 0
      %2436 = vperm.xlu0 %2435, %v682
      %v2437 = vpop.permute.xlu0 %2436
      %2440 = vset.pattern.permute.xlu0 0
      %2441 = vperm.xlu0 %2440, %v687
      %v2442 = vpop.permute.xlu0 %2441
      %2445 = vset.pattern.permute.xlu0 0
      %2446 = vperm.xlu0 %2445, %v692
      %v2447 = vpop.permute.xlu0 %2446
      %2450 = vset.pattern.permute.xlu0 0
      %2451 = vperm.xlu0 %2450, %v697
      %v2452 = vpop.permute.xlu0 %2451
      %2455 = vset.pattern.permute.xlu0 0
      %2456 = vperm.xlu0 %2455, %v702
      %v2457 = vpop.permute.xlu0 %2456
      %2460 = vset.pattern.permute.xlu0 0
      %2461 = vperm.xlu0 %2460, %v707
      %v2462 = vpop.permute.xlu0 %2461
      %2465 = vset.pattern.permute.xlu0 0
      %2466 = vperm.xlu0 %2465, %v712
      %v2467 = vpop.permute.xlu0 %2466
      %2470 = vset.pattern.permute.xlu0 0
      %2471 = vperm.xlu0 %2470, %v717
      %v2472 = vpop.permute.xlu0 %2471
      %v2474 = vmul.f32 %v2437, %v2396
      %v2475 = vmul.f32 %v2442, %v2401
      %v2476 = vmul.f32 %v2447, %v2406
      %v2477 = vmul.f32 %v2452, %v2411
      %v2478 = vmul.f32 %v2457, %v2416
      %v2479 = vmul.f32 %v2462, %v2421
      %v2480 = vmul.f32 %v2467, %v2426
      %v2481 = vmul.f32 %v2472, %v2431
      %2482 = vxpose.xlu0.b32.start [1/16] %v2474, 128
      %2483 = vxpose.xlu0.b32.cont [2/16] %v2475, 128
      %2484 = vxpose.xlu0.b32.cont [3/16] %v2476, 128
      %2485 = vxpose.xlu0.b32.cont [4/16] %v2477, 128
      %2486 = vxpose.xlu0.b32.cont [5/16] %v2478, 128
      %2487 = vxpose.xlu0.b32.cont [6/16] %v2479, 128
      %2488 = vxpose.xlu0.b32.cont [7/16] %v2480, 128
      %2489 = vxpose.xlu0.b32.cont [8/16] %v2481, 128
      %2490 = vxpose.xlu0.b32.cont [9/16] 0.0, 128
      %2491 = vxpose.xlu0.b32.cont [10/16] 0.0, 128
      %2492 = vxpose.xlu0.b32.cont [11/16] 0.0, 128
      %2493 = vxpose.xlu0.b32.cont [12/16] 0.0, 128
      %2494 = vxpose.xlu0.b32.cont [13/16] 0.0, 128
      %2495 = vxpose.xlu0.b32.cont [14/16] 0.0, 128
      %2496 = vxpose.xlu0.b32.cont [15/16] 0.0, 128
      %2497 = vxpose.xlu0.b32.end [16/16] 0.0, 128
      %v2498 = vpop.trf.xlu0
      %v2499 = vpop.trf.xlu0
      %v2500 = vpop.trf.xlu0
      %v2501 = vpop.trf.xlu0
      %v2502 = vpop.trf.xlu0
      %v2503 = vpop.trf.xlu0
      %v2504 = vpop.trf.xlu0
      %v2505 = vpop.trf.xlu0
      %v2506 = vpop.trf.xlu0
      %v2507 = vpop.trf.xlu0
      %v2508 = vpop.trf.xlu0
      %v2509 = vpop.trf.xlu0
      %v2510 = vpop.trf.xlu0
      %v2511 = vpop.trf.xlu0
      %v2512 = vpop.trf.xlu0
      %v2513 = vpop.trf.xlu0
      %vm2514 = vcmask 523264
      %v2516 = vsel %vm2514, %v2498, 0
      %v2519 = vsel %vm2514, %v2499, 0
      %2521 = vmatprep.subr.mxu0 0.0
      %2522 = vmatpush1.msra.mxu0 0.0
      %2523 = vmatprep.subr.mxu0 0.0
      %2524 = vmatpush1.msra.mxu0 0.0
      %2525 = vmatprep.subr.mxu0 0.0
      %2526 = vmatpush1.msra.mxu0 0.0
      %2527 = vmatprep.subr.mxu0 0.0
      %2528 = vmatpush1.msra.mxu0 0.0
      %2529 = vmatprep.subr.mxu0 0.0
      %2530 = vmatpush1.msra.mxu0 0.0
      %2531 = vmatprep.subr.mxu0 0.0
      %2532 = vmatpush1.msra.mxu0 0.0
      %2533 = vmatprep.subr.mxu0 0.0
      %2534 = vmatpush1.msra.mxu0 0.0
      %2535 = vmatprep.subr.mxu0 0.0
      %2536 = vmatpush1.msra.mxu0 0.0
      %2537 = vmatprep.subr.mxu0 %v562
      %2538 = vmatpush1.msra.mxu0 %v560
      %2539 = vmatprep.subr.mxu0 %v556
      %2540 = vmatpush1.msra.mxu0 %v554
      %2541 = vmatprep.subr.mxu0 %v550
      %2542 = vmatpush1.msra.mxu0 %v548
      %2543 = vmatprep.subr.mxu0 %v544
      %2544 = vmatpush1.msra.mxu0 %v542
      %2545 = vmatprep.subr.mxu0 %v538
      %2546 = vmatpush1.msra.mxu0 %v536
      %2547 = vmatprep.subr.mxu0 %v532
      %2548 = vmatpush1.msra.mxu0 %v530
      %2549 = vmatprep.subr.mxu0 %v526
      %2550 = vmatpush1.msra.mxu0 %v524
      %2551 = vmatprep.subr.mxu0 %v520
      %2552 = vmatpush1.msra.mxu0 %v518
      %2553 = vmatprep.subr.mxu0 0.0
      %2554 = vmatpush2.msra.mxu0 0.0
      %2555 = vmatprep.subr.mxu0 0.0
      %2556 = vmatpush2.msra.mxu0 0.0
      %2557 = vmatprep.subr.mxu0 0.0
      %2558 = vmatpush2.msra.mxu0 0.0
      %2559 = vmatprep.subr.mxu0 0.0
      %2560 = vmatpush2.msra.mxu0 0.0
      %2561 = vmatprep.subr.mxu0 0.0
      %2562 = vmatpush2.msra.mxu0 0.0
      %2563 = vmatprep.subr.mxu0 0.0
      %2564 = vmatpush2.msra.mxu0 0.0
      %2565 = vmatprep.subr.mxu0 0.0
      %2566 = vmatpush2.msra.mxu0 0.0
      %2567 = vmatprep.subr.mxu0 0.0
      %2568 = vmatpush2.msra.mxu0 0.0
      %2569 = vmatprep.subr.mxu0 0.0
      %2570 = vmatpush2.msra.mxu0 0.0
      %2571 = vmatprep.subr.mxu0 0.0
      %2572 = vmatpush2.msra.mxu0 0.0
      %2573 = vmatprep.subr.mxu0 0.0
      %2574 = vmatpush2.msra.mxu0 0.0
      %2575 = vmatprep.subr.mxu0 0.0
      %2576 = vmatpush2.msra.mxu0 0.0
      %2577 = vmatprep.subr.mxu0 0.0
      %2578 = vmatpush2.msra.mxu0 0.0
      %2579 = vmatprep.subr.mxu0 0.0
      %2580 = vmatpush2.msra.mxu0 0.0
      %2581 = vmatprep.subr.mxu0 0.0
      %2582 = vmatpush2.msra.mxu0 0.0
      %2583 = vmatprep.subr.mxu0 0.0
      %2584 = vmatpush2.msra.mxu0 0.0
      %2585 = vmatprep.mubr.f32.mxu0 0.0
      %2586 = vmatmul.mubr.f32.gmra.mxu0 %v2516
      %v2587 = vpop.f32.mrf.mxu0
      %v2588 = vadd.f32 0.0, %v2587
      %v2589 = vpop.f32.mrf.mxu0
      %v2590 = vadd.f32 0.0, %v2589
      %2591 = vmatprep.mubr.f32.mxu0 0.0
      %2592 = vmatmul.mubr.f32.gmra.mxu0 %v2519
      %v2593 = vpop.f32.mrf.mxu0
      %v2594 = vadd.f32 0.0, %v2593
      %v2595 = vpop.f32.mrf.mxu0
      %v2596 = vadd.f32 0.0, %v2595
      %2597 = vdwg.mxu0
      %v2598 = vand.u32 2147483647, %v2588
      %v2599 = vand.u32 2147483647, %v2590
      %v2600 = vand.u32 2147483647, %v2594
      %v2601 = vand.u32 2147483647, %v2596
      %v2602 = vadd.f32 %v2598, %v2600
      %v2603 = vrot.slane %v2602, 4
      %v2604 = vadd.f32 %v2602, %v2603
      %v2605 = vrot.slane %v2604, 2
      %v2606 = vadd.f32 %v2604, %v2605
      %v2607 = vrot.slane %v2606, 1
      %v2608 = vadd.f32 %v2606, %v2607
      %v2609 = vadd.f32 %v2599, %v2601
      %v2610 = vrot.slane %v2609, 4
      %v2611 = vadd.f32 %v2609, %v2610
      %v2612 = vrot.slane %v2611, 2
      %v2613 = vadd.f32 %v2611, %v2612
      %v2614 = vrot.slane %v2613, 1
      %v2615 = vadd.f32 %v2613, %v2614
      %v2616 = vadd.f32 %v2608, 1e-10
      %v2617 = vadd.f32 %v2615, 1e-10
      %v2618 = vrsqrt.pop %v2616
      %v2619 = vrsqrt.pop %v2617
      %v2620 = vmul.f32 %v2618, %v2598
      %v2621 = vmul.f32 %v2619, %v2599
      %v2622 = vmul.f32 %v2618, %v2600
      %v2623 = vmul.f32 %v2619, %v2601
      %v2624 = vadd.f32 %v2598, %v2599
      %2625 = vadd.xlane.f32.xlu0 %v2624
      %v2626 = vpop.xlane.xlu0 %2625
      %v2627 = vadd.f32 %v2600, %v2601
      %2628 = vadd.xlane.f32.xlu0 %v2627
      %v2629 = vpop.xlane.xlu0 %2628
      %v2630 = vrcp.pop %v2626
      %v2631 = vrcp.pop %v2629
      %2632 = vmatprep.subr.mxu0 0.0
      %2633 = vmatpush1.xpose.msra.mxu0 0.0
      %2634 = vmatprep.subr.mxu0 0.0
      %2635 = vmatpush1.xpose.msra.mxu0 0.0
      %2636 = vmatprep.subr.mxu0 0.0
      %2637 = vmatpush1.xpose.msra.mxu0 0.0
      %2638 = vmatprep.subr.mxu0 0.0
      %2639 = vmatpush1.xpose.msra.mxu0 0.0
      %2640 = vmatprep.subr.mxu0 0.0
      %2641 = vmatpush1.xpose.msra.mxu0 0.0
      %2642 = vmatprep.subr.mxu0 0.0
      %2643 = vmatpush1.xpose.msra.mxu0 0.0
      %2644 = vmatprep.subr.mxu0 0.0
      %2645 = vmatpush1.xpose.msra.mxu0 0.0
      %2646 = vmatprep.subr.mxu0 0.0
      %2647 = vmatpush1.xpose.msra.mxu0 0.0
      %2648 = vmatprep.subr.mxu0 0.0
      %2649 = vmatpush1.xpose.msra.mxu0 0.0
      %2650 = vmatprep.subr.mxu0 0.0
      %2651 = vmatpush1.xpose.msra.mxu0 0.0
      %2652 = vmatprep.subr.mxu0 0.0
      %2653 = vmatpush1.xpose.msra.mxu0 0.0
      %2654 = vmatprep.subr.mxu0 0.0
      %2655 = vmatpush1.xpose.msra.mxu0 0.0
      %2656 = vmatprep.subr.mxu0 0.0
      %2657 = vmatpush1.xpose.msra.mxu0 0.0
      %2658 = vmatprep.subr.mxu0 0.0
      %2659 = vmatpush1.xpose.msra.mxu0 0.0
      %2660 = vmatprep.subr.mxu0 0.0
      %2661 = vmatpush1.xpose.msra.mxu0 0.0
      %2662 = vmatprep.subr.mxu0 %v361
      %2663 = vmatpush1.xpose.msra.mxu0 %v420
      %2664 = vmatprep.subr.mxu0 0.0
      %2665 = vmatpush2.xpose.msra.mxu0 0.0
      %2666 = vmatprep.subr.mxu0 0.0
      %2667 = vmatpush2.xpose.msra.mxu0 0.0
      %2668 = vmatprep.subr.mxu0 0.0
      %2669 = vmatpush2.xpose.msra.mxu0 0.0
      %2670 = vmatprep.subr.mxu0 0.0
      %2671 = vmatpush2.xpose.msra.mxu0 0.0
      %2672 = vmatprep.subr.mxu0 0.0
      %2673 = vmatpush2.xpose.msra.mxu0 0.0
      %2674 = vmatprep.subr.mxu0 0.0
      %2675 = vmatpush2.xpose.msra.mxu0 0.0
      %2676 = vmatprep.subr.mxu0 0.0
      %2677 = vmatpush2.xpose.msra.mxu0 0.0
      %2678 = vmatprep.subr.mxu0 0.0
      %2679 = vmatpush2.xpose.msra.mxu0 0.0
      %2680 = vmatprep.subr.mxu0 0.0
      %2681 = vmatpush2.xpose.msra.mxu0 0.0
      %2682 = vmatprep.subr.mxu0 0.0
      %2683 = vmatpush2.xpose.msra.mxu0 0.0
      %2684 = vmatprep.subr.mxu0 0.0
      %2685 = vmatpush2.xpose.msra.mxu0 0.0
      %2686 = vmatprep.subr.mxu0 0.0
      %2687 = vmatpush2.xpose.msra.mxu0 0.0
      %2688 = vmatprep.subr.mxu0 0.0
      %2689 = vmatpush2.xpose.msra.mxu0 0.0
      %2690 = vmatprep.subr.mxu0 0.0
      %2691 = vmatpush2.xpose.msra.mxu0 0.0
      %2692 = vmatprep.subr.mxu0 0.0
      %2693 = vmatpush2.xpose.msra.mxu0 0.0
      %2694 = vmatprep.subr.mxu0 0.0
      %2695 = vmatpush2.xpose.msra.mxu0 0.0
      %2696 = vmatprep.mubr.f32.mxu0 %v2621
      %2697 = vmatmul.mubr.f32.gmra.mxu0 %v2620
      %v2698 = vpop.f32.mrf.mxu0
      %v2699 = vadd.f32 0.0, %v2698
      %v2700 = vpop.f32.mrf.mxu0
      %2701 = vmatprep.mubr.f32.mxu0 %v2623
      %2702 = vmatmul.mubr.f32.gmra.mxu0 %v2622
      %v2703 = vpop.f32.mrf.mxu0
      %v2704 = vadd.f32 0.0, %v2703
      %v2705 = vpop.f32.mrf.mxu0
      %2706 = vdwg.mxu0
      %v2707 = vmul.f32 %v2630, %v2699
      %v2708 = vmul.f32 %v2631, %v2704
      %2709 = vxpose.xlu0.b32.start [1/16] %v2707, 128
      %2710 = vxpose.xlu0.b32.cont [2/16] %v2708, 128
      %2711 = vxpose.xlu0.b32.cont [3/16] 0.0, 128
      %2712 = vxpose.xlu0.b32.cont [4/16] 0.0, 128
      %2713 = vxpose.xlu0.b32.cont [5/16] 0.0, 128
      %2714 = vxpose.xlu0.b32.cont [6/16] 0.0, 128
      %2715 = vxpose.xlu0.b32.cont [7/16] 0.0, 128
      %2716 = vxpose.xlu0.b32.cont [8/16] 0.0, 128
      %2717 = vxpose.xlu0.b32.cont [9/16] 0.0, 128
      %2718 = vxpose.xlu0.b32.cont [10/16] 0.0, 128
      %2719 = vxpose.xlu0.b32.cont [11/16] 0.0, 128
      %2720 = vxpose.xlu0.b32.cont [12/16] 0.0, 128
      %2721 = vxpose.xlu0.b32.cont [13/16] 0.0, 128
      %2722 = vxpose.xlu0.b32.cont [14/16] 0.0, 128
      %2723 = vxpose.xlu0.b32.cont [15/16] 0.0, 128
      %2724 = vxpose.xlu0.b32.end [16/16] 0.0, 128
      %v2725 = vpop.trf.xlu0
      %v2726 = vpop.trf.xlu0
      %v2727 = vpop.trf.xlu0
      %v2728 = vpop.trf.xlu0
      %v2729 = vpop.trf.xlu0
      %v2730 = vpop.trf.xlu0
      %v2731 = vpop.trf.xlu0
      %v2732 = vpop.trf.xlu0
      %v2733 = vpop.trf.xlu0
      %v2734 = vpop.trf.xlu0
      %v2735 = vpop.trf.xlu0
      %v2736 = vpop.trf.xlu0
      %v2737 = vpop.trf.xlu0
      %v2738 = vpop.trf.xlu0
      %v2739 = vpop.trf.xlu0
      %v2740 = vpop.trf.xlu0
      %v2742 = vsel %vm1317, %v2725, 0
      %2744 = vmatprep.subr.mxu0 0.0
      %2745 = vmatpush1.msra.mxu0 0.0
      %2746 = vmatprep.subr.mxu0 0.0
      %2747 = vmatpush1.msra.mxu0 0.0
      %2748 = vmatprep.subr.mxu0 0.0
      %2749 = vmatpush1.msra.mxu0 0.0
      %2750 = vmatprep.subr.mxu0 0.0
      %2751 = vmatpush1.msra.mxu0 0.0
      %2752 = vmatprep.subr.mxu0 0.0
      %2753 = vmatpush1.msra.mxu0 0.0
      %2754 = vmatprep.subr.mxu0 0.0
      %2755 = vmatpush1.msra.mxu0 0.0
      %2756 = vmatprep.subr.mxu0 0.0
      %2757 = vmatpush1.msra.mxu0 0.0
      %2758 = vmatprep.subr.mxu0 0.0
      %2759 = vmatpush1.msra.mxu0 0.0
      %2760 = vmatprep.subr.mxu0 0.0
      %2761 = vmatpush1.msra.mxu0 0.0
      %2762 = vmatprep.subr.mxu0 0.0
      %2763 = vmatpush1.msra.mxu0 0.0
      %2764 = vmatprep.subr.mxu0 0.0
      %2765 = vmatpush1.msra.mxu0 0.0
      %2766 = vmatprep.subr.mxu0 0.0
      %2767 = vmatpush1.msra.mxu0 0.0
      %2768 = vmatprep.subr.mxu0 0.0
      %2769 = vmatpush1.msra.mxu0 0.0
      %2770 = vmatprep.subr.mxu0 0.0
      %2771 = vmatpush1.msra.mxu0 0.0
      %2772 = vmatprep.subr.mxu0 %v2623
      %2773 = vmatpush1.msra.mxu0 %v2622
      %2774 = vmatprep.subr.mxu0 %v2621
      %2775 = vmatpush1.msra.mxu0 %v2620
      %2776 = vmatprep.subr.mxu0 0.0
      %2777 = vmatpush2.msra.mxu0 0.0
      %2778 = vmatprep.subr.mxu0 0.0
      %2779 = vmatpush2.msra.mxu0 0.0
      %2780 = vmatprep.subr.mxu0 0.0
      %2781 = vmatpush2.msra.mxu0 0.0
      %2782 = vmatprep.subr.mxu0 0.0
      %2783 = vmatpush2.msra.mxu0 0.0
      %2784 = vmatprep.subr.mxu0 0.0
      %2785 = vmatpush2.msra.mxu0 0.0
      %2786 = vmatprep.subr.mxu0 0.0
      %2787 = vmatpush2.msra.mxu0 0.0
      %2788 = vmatprep.subr.mxu0 0.0
      %2789 = vmatpush2.msra.mxu0 0.0
      %2790 = vmatprep.subr.mxu0 0.0
      %2791 = vmatpush2.msra.mxu0 0.0
      %2792 = vmatprep.subr.mxu0 0.0
      %2793 = vmatpush2.msra.mxu0 0.0
      %2794 = vmatprep.subr.mxu0 0.0
      %2795 = vmatpush2.msra.mxu0 0.0
      %2796 = vmatprep.subr.mxu0 0.0
      %2797 = vmatpush2.msra.mxu0 0.0
      %2798 = vmatprep.subr.mxu0 0.0
      %2799 = vmatpush2.msra.mxu0 0.0
      %2800 = vmatprep.subr.mxu0 0.0
      %2801 = vmatpush2.msra.mxu0 0.0
      %2802 = vmatprep.subr.mxu0 0.0
      %2803 = vmatpush2.msra.mxu0 0.0
      %2804 = vmatprep.subr.mxu0 0.0
      %2805 = vmatpush2.msra.mxu0 0.0
      %2806 = vmatprep.subr.mxu0 0.0
      %2807 = vmatpush2.msra.mxu0 0.0
      %2808 = vmatprep.mubr.f32.mxu0 0.0
      %2809 = vmatmul.mubr.f32.gmra.mxu0 %v2742
      %v2810 = vpop.f32.mrf.mxu0
      %v2811 = vadd.f32 0.0, %v2810
      %v2812 = vpop.f32.mrf.mxu0
      %v2813 = vadd.f32 0.0, %v2812
      %2814 = vdwg.mxu0
      %v2815 = vrot.slane %v360, 4
      %v2816 = vrot.slane %v361, 4
      %v2817 = vsel %vm446, %v2815, %v2816
      %v2821 = vcombine.low %v2811, %v2813
      %v2823 = vsub.f32 %v2817, %v2821
      %v2824 = vld [vmem:[%s8] sm:$0xff]
      %v2825 = vld [vmem:[%s9] sm:$0xff]
      %2827 = vset.pattern.permute.xlu0 0
      %2828 = vperm.xlu0 %2827, %v2825
      %v2829 = vpop.permute.xlu0 %2828
      %v2832 = vcombine.high %v2823, %v2823
      %v2834 = vsel %vm421, %v2824, 0
      %v2836 = vsel %vm446, %v2823, 0
      %v2838 = vsel %vm446, %v2832, 0
      %2840 = vmatprep.subr.mxu0 0.0
      %2841 = vmatpush1.msra.mxu0 0.0
      %2842 = vmatprep.subr.mxu0 0.0
      %2843 = vmatpush1.msra.mxu0 0.0
      %2844 = vmatprep.subr.mxu0 0.0
      %2845 = vmatpush1.msra.mxu0 0.0
      %2846 = vmatprep.subr.mxu0 0.0
      %2847 = vmatpush1.msra.mxu0 0.0
      %2848 = vmatprep.subr.mxu0 0.0
      %2849 = vmatpush1.msra.mxu0 0.0
      %2850 = vmatprep.subr.mxu0 0.0
      %2851 = vmatpush1.msra.mxu0 0.0
      %2852 = vmatprep.subr.mxu0 0.0
      %2853 = vmatpush1.msra.mxu0 0.0
      %2854 = vmatprep.subr.mxu0 0.0
      %2855 = vmatpush1.msra.mxu0 0.0
      %2856 = vmatprep.subr.mxu0 0.0
      %2857 = vmatpush1.msra.mxu0 0.0
      %2858 = vmatprep.subr.mxu0 0.0
      %2859 = vmatpush1.msra.mxu0 0.0
      %2860 = vmatprep.subr.mxu0 0.0
      %2861 = vmatpush1.msra.mxu0 0.0
      %2862 = vmatprep.subr.mxu0 0.0
      %2863 = vmatpush1.msra.mxu0 0.0
      %2864 = vmatprep.subr.mxu0 0.0
      %2865 = vmatpush1.msra.mxu0 0.0
      %2866 = vmatprep.subr.mxu0 0.0
      %2867 = vmatpush1.msra.mxu0 0.0
      %2868 = vmatprep.subr.mxu0 0.0
      %2869 = vmatpush1.msra.mxu0 0.0
      %2870 = vmatprep.subr.mxu0 %v2838
      %2871 = vmatpush1.msra.mxu0 %v2836
      %2872 = vmatprep.subr.mxu0 0.0
      %2873 = vmatpush2.msra.mxu0 0.0
      %2874 = vmatprep.subr.mxu0 0.0
      %2875 = vmatpush2.msra.mxu0 0.0
      %2876 = vmatprep.subr.mxu0 0.0
      %2877 = vmatpush2.msra.mxu0 0.0
      %2878 = vmatprep.subr.mxu0 0.0
      %2879 = vmatpush2.msra.mxu0 0.0
      %2880 = vmatprep.subr.mxu0 0.0
      %2881 = vmatpush2.msra.mxu0 0.0
      %2882 = vmatprep.subr.mxu0 0.0
      %2883 = vmatpush2.msra.mxu0 0.0
      %2884 = vmatprep.subr.mxu0 0.0
      %2885 = vmatpush2.msra.mxu0 0.0
      %2886 = vmatprep.subr.mxu0 0.0
      %2887 = vmatpush2.msra.mxu0 0.0
      %2888 = vmatprep.subr.mxu0 0.0
      %2889 = vmatpush2.msra.mxu0 0.0
      %2890 = vmatprep.subr.mxu0 0.0
      %2891 = vmatpush2.msra.mxu0 0.0
      %2892 = vmatprep.subr.mxu0 0.0
      %2893 = vmatpush2.msra.mxu0 0.0
      %2894 = vmatprep.subr.mxu0 0.0
      %2895 = vmatpush2.msra.mxu0 0.0
      %2896 = vmatprep.subr.mxu0 0.0
      %2897 = vmatpush2.msra.mxu0 0.0
      %2898 = vmatprep.subr.mxu0 0.0
      %2899 = vmatpush2.msra.mxu0 0.0
      %2900 = vmatprep.subr.mxu0 0.0
      %2901 = vmatpush2.msra.mxu0 0.0
      %2902 = vmatprep.subr.mxu0 0.0
      %2903 = vmatpush2.msra.mxu0 0.0
      %2904 = vmatprep.mubr.f32.mxu0 0.0
      %2905 = vmatmul.mubr.f32.gmra.mxu0 %v2834
      %v2906 = vpop.f32.mrf.mxu0
      %v2907 = vadd.f32 %v2829, %v2906
      %v2908 = vpop.f32.mrf.mxu0
      %v2909 = vadd.f32 %v2829, %v2908
      %2910 = vdwg.mxu0
      %v2911 = vmax.f32 %v2907, 0.0
      %v2912 = vmax.f32 %v2909, 0.0
      %2913 = vst [vmem:[%s359] sm:$0xff] %v2911
      %2914 = vst [vmem:[%s359 + $0x8] sm:$0xff] %v2912
      %p2915 = scmp.lt.s32.totalorder %s21, 1
      %s2916 = scalar_select %p2915, %s21, 1
      %s2917 = smul.addr %s2916, 2
      %s2918 = smul.addr %s2917, 8
      %s2919 = scalar_lea.vmem %s10, %s2918
      // Predicated region
      $region61: #{hypergraph_conv.1} parent=59 // pred_check
        %p2920 = pneg %p254
      $region62: #{hypergraph_conv.1} parent=59 // pred_check_branch
        %2922 = sbr.rel (%p2920) target = $region64
      $region63: #{hypergraph_conv.1} parent=59 // pred_region
        _
      $region64: #{hypergraph_conv.1} parent=59 // pred_fallthru
        _
    $region60: #{hypergraph_conv.1} parent=5 // pred_fallthru
      _
    %p2923 = scmp.le.s32.totalorder 2, %s16
    // Predicated region
    $region65: #{hypergraph_conv.1} parent=5 // pred_check
      %p2924 = pneg %p2923
    $region66: #{hypergraph_conv.1} parent=5 // pred_check_branch
      %2926 = sbr.rel (%p2924) target = $region68
    $region67: #{hypergraph_conv.1} parent=5 // pred_region
      %s2927 = ssub.s32 %s16, 2
      // Predicated region
      $region69: #{hypergraph_conv.1} parent=67 // pred_check
        %p2928 = pneg %p260
      $region70: #{hypergraph_conv.1} parent=67 // pred_check_branch
        %2930 = sbr.rel (%p2928) target = $region72
      $region71: #{hypergraph_conv.1} parent=67 // pred_region
        %p2931 = scmp.lt.s32.totalorder %s22, 1
        %s2932 = scalar_select %p2931, %s22, 1
        %s2933 = smul.addr %s2932, 2
        %s2934 = smul.addr %s2933, 8
        %s2935 = scalar_lea.vmem %s10, %s2934
      $region72: #{hypergraph_conv.1} parent=67 // pred_fallthru
        _
    $region68: #{hypergraph_conv.1} parent=5 // pred_fallthru
      _
  $region6: #{hypergraph_conv.1} parent=0 // loop_footer
    %s20 = sadd.s32 1, %s16
  $region7: #{hypergraph_conv.1} parent=0 // loop_footer_branch
    %15 = sbr.rel target = $region3
  $region8: #{hypergraph_conv.1} parent=0 // loop_exit
    _

</llo_original>
